<compile_context>
chip_gen: v7x
topology: tpu7x:2x2x1
jax: 0.10.0
libtpu: 0.0.40
codegen_flags: <defaults>
</compile_context>

<pallas_src>
import functools
import math

import jax
import jax.numpy as jnp
import numpy as np
from jax import lax
from jax.experimental import pallas as pl
from jax.experimental.pallas import tpu as pltpu


def _round_up(x, m):
    return ((x + m - 1) // m) * m


# ---------------------------------------------------------------------------
# Pallas kernel: M-tiled matmul (bf16 inputs, f32 accumulation) + fused
# LeakyReLU(0.2).  The weight block's index never changes across the grid, so
# it stays resident in VMEM while the M tiles stream through.
# ---------------------------------------------------------------------------
def _matmul_act_kernel(x_ref, w_ref, o_ref, *, slope, apply_act):
    acc = jnp.dot(x_ref[...], w_ref[...], preferred_element_type=jnp.float32)
    if apply_act:
        acc = jnp.where(acc >= 0.0, acc, slope * acc)  # activation math in f32
    o_ref[...] = acc.astype(o_ref.dtype)


def _pallas_matmul_act(x_mat, w_mat, *, slope=0.2, apply_act=True,
                       out_dtype=jnp.bfloat16, tm_max=1024):
    """(M, K) @ (K, Cout) with optional fused LeakyReLU.  bf16 in, f32 acc."""
    M, K = x_mat.shape
    K2, N = w_mat.shape
    assert K == K2

    # Large M tiles (HBM-roofline friendly) but >=2 grid steps when possible
    # (feeds both v7x TensorCores).  Multiple of 32 keeps bf16/f32 sublane
    # tiling happy for the last (partial) tile.
    tm = min(tm_max, _round_up(max(1, (M + 1) // 2), 32))
    Mp = _round_up(M, tm)

    xb = x_mat.astype(jnp.bfloat16)
    wb = w_mat.astype(jnp.bfloat16)
    if Mp != M:
        xb = jnp.pad(xb, ((0, Mp - M), (0, 0)))  # pad M only, single pad

    flops = 2 * Mp * K * N
    bytes_accessed = (Mp * K * 2 + K * N * 2
                      + Mp * N * jnp.dtype(out_dtype).itemsize)

    kernel = functools.partial(_matmul_act_kernel, slope=slope,
                               apply_act=apply_act)
    out = pl.pallas_call(
        kernel,
        out_shape=jax.ShapeDtypeStruct((Mp, N), out_dtype),
        grid_spec=pltpu.PrefetchScalarGridSpec(
            num_scalar_prefetch=0,
            grid=(Mp // tm,),
            in_specs=[
                pl.BlockSpec((tm, K), lambda i: (i, 0)),  # full-K block
                pl.BlockSpec((K, N), lambda i: (0, 0)),   # resident weights
            ],
            out_specs=pl.BlockSpec((tm, N), lambda i: (i, 0)),  # full-Cout
        ),
        compiler_params=pltpu.CompilerParams(
            dimension_semantics=("parallel",)),
        cost_estimate=pl.CostEstimate(flops=int(flops), transcendentals=0,
                                      bytes_accessed=int(bytes_accessed)),
    )(xb, wb)
    if Mp != M:
        out = out[:M]
    return out


# ---------------------------------------------------------------------------
# Conv3d (no bias, norm='none') on channel-last activations:
# cheap im2col glue (per-tap strided slices, no stack / 6-D transpose) +
# Pallas matmul with fused LeakyReLU.
# ---------------------------------------------------------------------------
def conv3d_lrelu_pallas(x_cl, w, *, stride, padding, apply_act,
                        out_dtype=jnp.bfloat16):
    """x_cl: (N, D, H, W, Cin) bf16 channel-last activations.
       w   : (Cout, Cin, kd, kh, kw) f32 (PyTorch Conv3d layout, bias-free)."""
    N, D, H, W, C = x_cl.shape
    Cout, Cin, kd, kh, kw = w.shape
    assert C == Cin
    Dout = (D + 2 * padding - kd) // stride + 1
    Hout = (H + 2 * padding - kh) // stride + 1
    Wout = (W + 2 * padding - kw) // stride + 1

    xp = x_cl.astype(jnp.bfloat16)
    if padding:
        xp = jnp.pad(xp, ((0, 0), (padding, padding), (padding, padding),
                          (padding, padding), (0, 0)))

    # TODO(synk): fold patch extraction into the Pallas kernel (manual DMA of
    # overlapping input slabs) to remove the remaining kd*kh*kw-fold HBM
    # blow-up at large resolutions; at these demo shapes the bf16 patch
    # matrices are <=1 MB so the XLA-side build is cheap.
    taps = []
    for dz in range(kd):
        for dy in range(kh):
            for dx in range(kw):
                taps.append(xp[:, dz:dz + stride * Dout:stride,
                                  dy:dy + stride * Hout:stride,
                                  dx:dx + stride * Wout:stride, :])
    # (N, Do, Ho, Wo, kd*kh*kw*Cin): tap-major / channel-minor; leading-dim
    # reshape to (M, K) is layout-free.
    p = jnp.concatenate(taps, axis=-1)
    p = p.reshape(N * Dout * Hout * Wout, kd * kh * kw * Cin)

    # Weight -> (K, Cout) with matching (dz, dy, dx, ci) ordering.
    w_mat = w.transpose(2, 3, 4, 1, 0).reshape(kd * kh * kw * Cin, Cout)

    out = _pallas_matmul_act(p, w_mat, apply_act=apply_act,
                             out_dtype=out_dtype)
    return out.reshape(N, Dout, Hout, Wout, Cout)


# ---------------------------------------------------------------------------
# _netD0 parameter construction + forward (bias=False, norm='none')
# ---------------------------------------------------------------------------
def build_netd0_params(key, *, res, final_res, nc=1, ndf=4, max_nf=2):
    n_layers = int(math.log(res, 2)) - 3
    n_final_layers = int(math.log(final_res, 2)) - 3
    offset = n_final_layers - n_layers

    def init_conv(k, cout, cin):
        fan_in = cin * 4 * 4 * 4
        scale = 1.0 / math.sqrt(fan_in)
        return scale * jax.random.normal(k, (cout, cin, 4, 4, 4), jnp.float32)

    n_convs = (n_final_layers - offset) + 2
    keys = jax.random.split(key, n_convs)
    params = {}
    ki = 0
    params[f'fromRGB_{res}'] = init_conv(
        keys[ki], ndf * min(2 ** max(0, offset - 1), max_nf), nc)
    ki += 1
    for n in range(offset, n_final_layers):
        input_nc = ndf * min(2 ** max(0, n - 1), max_nf)
        output_nc = ndf * min(2 ** n, max_nf)
        params[f'block_{n}'] = init_conv(keys[ki], output_nc, input_nc)
        ki += 1
    params[f'block_{n_final_layers}'] = init_conv(keys[ki], 1, ndf * max_nf)
    meta = dict(res=res, offset=offset, n_final_layers=n_final_layers,
                n_blocks=(n_final_layers - offset) + 1)
    return params, meta


def netd0_forward(params, meta, x):
    # x: (N, C, D, H, W) f32 (PyTorch layout).  One transpose to channel-last
    # at the boundary; activations then stay NDHWC / bf16 between layers.
    out = jnp.transpose(x, (0, 2, 3, 4, 1)).astype(jnp.bfloat16)
    out = conv3d_lrelu_pallas(out, params[f"fromRGB_{meta['res']}"],
                              stride=2, padding=1, apply_act=True)
    for i in range(meta['n_blocks']):
        n = i + meta['offset']
        if n == meta['n_final_layers']:
            out = conv3d_lrelu_pallas(out, params[f'block_{n}'],
                                      stride=1, padding=0, apply_act=False,
                                      out_dtype=jnp.float32)
        else:
            out = conv3d_lrelu_pallas(out, params[f'block_{n}'],
                                      stride=2, padding=1, apply_act=True)
    return out.reshape(-1, 1).squeeze(1)


# ---------------------------------------------------------------------------
# Pure-JAX f32 reference (lax.conv) for correctness check
# ---------------------------------------------------------------------------
def _ref_conv3d(x, w, *, stride, padding, apply_act):
    dn = ('NCDHW', 'OIDHW', 'NCDHW')
    out = lax.conv_general_dilated(
        x, w, window_strides=(stride,) * 3,
        padding=[(padding, padding)] * 3, dimension_numbers=dn)
    if apply_act:
        out = jnp.where(out >= 0.0, out, 0.2 * out)
    return out


def netd0_forward_ref(params, meta, x):
    out = _ref_conv3d(x, params[f"fromRGB_{meta['res']}"],
                      stride=2, padding=1, apply_act=True)
    for i in range(meta['n_blocks']):
        n = i + meta['offset']
        if n == meta['n_final_layers']:
            out = _ref_conv3d(out, params[f'block_{n}'],
                              stride=1, padding=0, apply_act=False)
        else:
            out = _ref_conv3d(out, params[f'block_{n}'],
                              stride=2, padding=1, apply_act=True)
    return out.reshape(-1, 1).squeeze(1)


if __name__ == "__main__":
    key = jax.random.PRNGKey(0)
    k_param, k_in = jax.random.split(key)

    RES = 32          # small-shape stand-in for the default res=128
    BATCH = 2
    params, meta = build_netd0_params(k_param, res=RES, final_res=RES,
                                      nc=1, ndf=4, max_nf=2)

    x = jax.random.normal(k_in, (BATCH, 1, RES, RES, RES), jnp.float32)

    fwd = jax.jit(lambda p, xx: netd0_forward(p, meta, xx))
    out = jax.block_until_ready(fwd(params, x))
    ref = jax.block_until_ready(netd0_forward_ref(params, meta, x))

    assert out.shape == (BATCH,), out.shape
    # Loose tolerance: Pallas path uses bf16 activations/weights with f32
    # accumulation; reference is full f32.
    np.testing.assert_allclose(np.asarray(out, dtype=np.float32),
                               np.asarray(ref, dtype=np.float32),
                               rtol=1e-1, atol=5e-2)
    print("KERNEL_OK")
</pallas_src>

<mosaic_0001>
module attributes {stable_mosaic.version = 11 : i64} {
  func.func @_matmul_act_kernel(%arg0: i32, %arg1: memref<1024x64xbf16, #tpu.memory_space<vmem>>, %arg2: memref<64x4xbf16, #tpu.memory_space<vmem>>, %arg3: memref<1024x4xbf16, #tpu.memory_space<vmem>>) attributes {dimension_semantics = [#tpu.dimension_semantics<parallel>], iteration_bounds = array<i64: 8>, scalar_prefetch = 0 : i64, scratch_operands = 0 : i64, tpu.core_type = #tpu.core_type<tc>, window_params = [{transform_indices = @transform_0, window_bounds = array<i64: 1024, 64>}, {pipeline_mode = #tpu.pipeline_mode<synchronous>, transform_indices = @transform_1, window_bounds = array<i64: 64, 4>}, {transform_indices = @transform_2, window_bounds = array<i64: 1024, 4>}]} {
    %c0 = arith.constant 0 : index
    %c0_0 = arith.constant 0 : index
    %0 = vector.load %arg1[%c0, %c0_0] : memref<1024x64xbf16, #tpu.memory_space<vmem>>, vector<1024x64xbf16>
    %c0_1 = arith.constant 0 : index
    %c0_2 = arith.constant 0 : index
    %1 = vector.load %arg2[%c0_1, %c0_2] : memref<64x4xbf16, #tpu.memory_space<vmem>>, vector<64x4xbf16>
    %cst = arith.constant dense<0.000000e+00> : vector<1024x4xf32>
    %2 = tpu.matmul %0, %1, %cst {dimension_numbers = #tpu.dot_dimension_numbers<[1], [0], [0], [1], [0, 0, 1, 1], [], []>} : vector<1024x64xbf16>, vector<64x4xbf16>, vector<1024x4xf32> -> vector<1024x4xf32>
    %cst_3 = arith.constant 0.000000e+00 : f32
    %3 = vector.broadcast %cst_3 : f32 to vector<1024x4xf32>
    %4 = arith.cmpf oge, %2, %3 : vector<1024x4xf32>
    %cst_4 = arith.constant 2.000000e-01 : f32
    %5 = vector.broadcast %cst_4 : f32 to vector<1024x4xf32>
    %6 = arith.mulf %5, %2 : vector<1024x4xf32>
    %7 = arith.select %4, %2, %6 : vector<1024x4xi1>, vector<1024x4xf32>
    %8 = arith.truncf %7 : vector<1024x4xf32> to vector<1024x4xbf16>
    %c0_5 = arith.constant 0 : index
    %c0_6 = arith.constant 0 : index
    %9 = vector.load %arg3[%c0_5, %c0_6] : memref<1024x4xbf16, #tpu.memory_space<vmem>>, vector<1024x4xbf16>
    tpu.vector_store %arg3[%c0_5, %c0_6], %8 {strides = array<i32>} : memref<1024x4xbf16, #tpu.memory_space<vmem>>, vector<1024x4xbf16>,
    return
  }
  func.func @transform_0(%arg0: i32) -> (i32, i32) {
    %c0_i32 = arith.constant 0 : i32
    %c0_i32_0 = arith.constant 0 : i32
    return %arg0, %c0_i32 : i32, i32
  }
  func.func @transform_1(%arg0: i32) -> (i32, i32) {
    %c0_i32 = arith.constant 0 : i32
    %c0_i32_0 = arith.constant 0 : i32
    %c0_i32_1 = arith.constant 0 : i32
    return %c0_i32, %c0_i32_0 : i32, i32
  }
  func.func @transform_2(%arg0: i32) -> (i32, i32) {
    %c0_i32 = arith.constant 0 : i32
    %c0_i32_0 = arith.constant 0 : i32
    return %arg0, %c0_i32 : i32, i32
  }
}

module attributes {stable_mosaic.version = 11 : i64} {
  func.func @_matmul_act_kernel(%arg0: i32, %arg1: memref<512x256xbf16, #tpu.memory_space<vmem>>, %arg2: memref<256x4xbf16, #tpu.memory_space<vmem>>, %arg3: memref<512x4xbf16, #tpu.memory_space<vmem>>) attributes {dimension_semantics = [#tpu.dimension_semantics<parallel>], iteration_bounds = array<i64: 2>, scalar_prefetch = 0 : i64, scratch_operands = 0 : i64, tpu.core_type = #tpu.core_type<tc>, window_params = [{transform_indices = @transform_0, window_bounds = array<i64: 512, 256>}, {pipeline_mode = #tpu.pipeline_mode<synchronous>, transform_indices = @transform_1, window_bounds = array<i64: 256, 4>}, {transform_indices = @transform_2, window_bounds = array<i64: 512, 4>}]} {
    %c0 = arith.constant 0 : index
    %c0_0 = arith.constant 0 : index
    %0 = vector.load %arg1[%c0, %c0_0] : memref<512x256xbf16, #tpu.memory_space<vmem>>, vector<512x256xbf16>
    %c0_1 = arith.constant 0 : index
    %c0_2 = arith.constant 0 : index
    %1 = vector.load %arg2[%c0_1, %c0_2] : memref<256x4xbf16, #tpu.memory_space<vmem>>, vector<256x4xbf16>
    %cst = arith.constant dense<0.000000e+00> : vector<512x4xf32>
    %2 = tpu.matmul %0, %1, %cst {dimension_numbers = #tpu.dot_dimension_numbers<[1], [0], [0], [1], [0, 0, 1, 1], [], []>} : vector<512x256xbf16>, vector<256x4xbf16>, vector<512x4xf32> -> vector<512x4xf32>
    %cst_3 = arith.constant 0.000000e+00 : f32
    %3 = vector.broadcast %cst_3 : f32 to vector<512x4xf32>
    %4 = arith.cmpf oge, %2, %3 : vector<512x4xf32>
    %cst_4 = arith.constant 2.000000e-01 : f32
    %5 = vector.broadcast %cst_4 : f32 to vector<512x4xf32>
    %6 = arith.mulf %5, %2 : vector<512x4xf32>
    %7 = arith.select %4, %2, %6 : vector<512x4xi1>, vector<512x4xf32>
    %8 = arith.truncf %7 : vector<512x4xf32> to vector<512x4xbf16>
    %c0_5 = arith.constant 0 : index
    %c0_6 = arith.constant 0 : index
    %9 = vector.load %arg3[%c0_5, %c0_6] : memref<512x4xbf16, #tpu.memory_space<vmem>>, vector<512x4xbf16>
    tpu.vector_store %arg3[%c0_5, %c0_6], %8 {strides = array<i32>} : memref<512x4xbf16, #tpu.memory_space<vmem>>, vector<512x4xbf16>,
    return
  }
  func.func @transform_0(%arg0: i32) -> (i32, i32) {
    %c0_i32 = arith.constant 0 : i32
    %c0_i32_0 = arith.constant 0 : i32
    return %arg0, %c0_i32 : i32, i32
  }
  func.func @transform_1(%arg0: i32) -> (i32, i32) {
    %c0_i32 = arith.constant 0 : i32
    %c0_i32_0 = arith.constant 0 : i32
    %c0_i32_1 = arith.constant 0 : i32
    return %c0_i32, %c0_i32_0 : i32, i32
  }
  func.func @transform_2(%arg0: i32) -> (i32, i32) {
    %c0_i32 = arith.constant 0 : i32
    %c0_i32_0 = arith.constant 0 : i32
    return %arg0, %c0_i32 : i32, i32
  }
}

module attributes {stable_mosaic.version = 11 : i64} {
  func.func @_matmul_act_kernel(%arg0: i32, %arg1: memref<64x256xbf16, #tpu.memory_space<vmem>>, %arg2: memref<256x8xbf16, #tpu.memory_space<vmem>>, %arg3: memref<64x8xbf16, #tpu.memory_space<vmem>>) attributes {dimension_semantics = [#tpu.dimension_semantics<parallel>], iteration_bounds = array<i64: 2>, scalar_prefetch = 0 : i64, scratch_operands = 0 : i64, tpu.core_type = #tpu.core_type<tc>, window_params = [{transform_indices = @transform_0, window_bounds = array<i64: 64, 256>}, {pipeline_mode = #tpu.pipeline_mode<synchronous>, transform_indices = @transform_1, window_bounds = array<i64: 256, 8>}, {transform_indices = @transform_2, window_bounds = array<i64: 64, 8>}]} {
    %c0 = arith.constant 0 : index
    %c0_0 = arith.constant 0 : index
    %0 = vector.load %arg1[%c0, %c0_0] : memref<64x256xbf16, #tpu.memory_space<vmem>>, vector<64x256xbf16>
    %c0_1 = arith.constant 0 : index
    %c0_2 = arith.constant 0 : index
    %1 = vector.load %arg2[%c0_1, %c0_2] : memref<256x8xbf16, #tpu.memory_space<vmem>>, vector<256x8xbf16>
    %cst = arith.constant dense<0.000000e+00> : vector<64x8xf32>
    %2 = tpu.matmul %0, %1, %cst {dimension_numbers = #tpu.dot_dimension_numbers<[1], [0], [0], [1], [0, 0, 1, 1], [], []>} : vector<64x256xbf16>, vector<256x8xbf16>, vector<64x8xf32> -> vector<64x8xf32>
    %cst_3 = arith.constant 0.000000e+00 : f32
    %3 = vector.broadcast %cst_3 : f32 to vector<64x8xf32>
    %4 = arith.cmpf oge, %2, %3 : vector<64x8xf32>
    %cst_4 = arith.constant 2.000000e-01 : f32
    %5 = vector.broadcast %cst_4 : f32 to vector<64x8xf32>
    %6 = arith.mulf %5, %2 : vector<64x8xf32>
    %7 = arith.select %4, %2, %6 : vector<64x8xi1>, vector<64x8xf32>
    %8 = arith.truncf %7 : vector<64x8xf32> to vector<64x8xbf16>
    %c0_5 = arith.constant 0 : index
    %c0_6 = arith.constant 0 : index
    %9 = vector.load %arg3[%c0_5, %c0_6] : memref<64x8xbf16, #tpu.memory_space<vmem>>, vector<64x8xbf16>
    tpu.vector_store %arg3[%c0_5, %c0_6], %8 {strides = array<i32>} : memref<64x8xbf16, #tpu.memory_space<vmem>>, vector<64x8xbf16>,
    return
  }
  func.func @transform_0(%arg0: i32) -> (i32, i32) {
    %c0_i32 = arith.constant 0 : i32
    %c0_i32_0 = arith.constant 0 : i32
    return %arg0, %c0_i32 : i32, i32
  }
  func.func @transform_1(%arg0: i32) -> (i32, i32) {
    %c0_i32 = arith.constant 0 : i32
    %c0_i32_0 = arith.constant 0 : i32
    %c0_i32_1 = arith.constant 0 : i32
    return %c0_i32, %c0_i32_0 : i32, i32
  }
  func.func @transform_2(%arg0: i32) -> (i32, i32) {
    %c0_i32 = arith.constant 0 : i32
    %c0_i32_0 = arith.constant 0 : i32
    return %arg0, %c0_i32 : i32, i32
  }
}

module attributes {stable_mosaic.version = 11 : i64} {
  func.func @_matmul_act_kernel(%arg0: i32, %arg1: memref<32x512xbf16, #tpu.memory_space<vmem>>, %arg2: memref<512x1xbf16, #tpu.memory_space<vmem>>, %arg3: memref<32x1xf32, #tpu.memory_space<vmem>>) attributes {dimension_semantics = [#tpu.dimension_semantics<parallel>], iteration_bounds = array<i64: 1>, scalar_prefetch = 0 : i64, scratch_operands = 0 : i64, tpu.core_type = #tpu.core_type<tc>, window_params = [{transform_indices = @transform_0, window_bounds = array<i64: 32, 512>}, {pipeline_mode = #tpu.pipeline_mode<synchronous>, transform_indices = @transform_1, window_bounds = array<i64: 512, 1>}, {transform_indices = @transform_2, window_bounds = array<i64: 32, 1>}]} {
    %c0 = arith.constant 0 : index
    %c0_0 = arith.constant 0 : index
    %0 = vector.load %arg1[%c0, %c0_0] : memref<32x512xbf16, #tpu.memory_space<vmem>>, vector<32x512xbf16>
    %c0_1 = arith.constant 0 : index
    %c0_2 = arith.constant 0 : index
    %1 = vector.load %arg2[%c0_1, %c0_2] : memref<512x1xbf16, #tpu.memory_space<vmem>>, vector<512x1xbf16>
    %cst = arith.constant dense<0.000000e+00> : vector<32x1xf32>
    %2 = tpu.matmul %0, %1, %cst {dimension_numbers = #tpu.dot_dimension_numbers<[1], [0], [0], [1], [0, 0, 1, 1], [], []>} : vector<32x512xbf16>, vector<512x1xbf16>, vector<32x1xf32> -> vector<32x1xf32>
    %c0_3 = arith.constant 0 : index
    %c0_4 = arith.constant 0 : index
    %3 = vector.load %arg3[%c0_3, %c0_4] : memref<32x1xf32, #tpu.memory_space<vmem>>, vector<32x1xf32>
    tpu.vector_store %arg3[%c0_3, %c0_4], %2 {strides = array<i32>} : memref<32x1xf32, #tpu.memory_space<vmem>>, vector<32x1xf32>,
    return
  }
  func.func @transform_0(%arg0: i32) -> (i32, i32) {
    %c0_i32 = arith.constant 0 : i32
    %c0_i32_0 = arith.constant 0 : i32
    return %arg0, %c0_i32 : i32, i32
  }
  func.func @transform_1(%arg0: i32) -> (i32, i32) {
    %c0_i32 = arith.constant 0 : i32
    %c0_i32_0 = arith.constant 0 : i32
    %c0_i32_1 = arith.constant 0 : i32
    return %c0_i32, %c0_i32_0 : i32, i32
  }
  func.func @transform_2(%arg0: i32) -> (i32, i32) {
    %c0_i32 = arith.constant 0 : i32
    %c0_i32_0 = arith.constant 0 : i32
    return %arg0, %c0_i32 : i32, i32
  }
}

</mosaic_0001>

<llo_original>
// kernel: _lambda_.4
$region0: #{_lambda_.4}
  #allocation0 [shape = 'u32[]', space=smem, size = 0x4, offset = 0x4, fixed_abs, tag = 'smem constant byte address 0x4 - core index']
  #allocation1 [shape = 'u32[144,128]{1,0:T(1,128)}', space=vmem, size = 0x12000, scoped, tag = 'internal scratch']
  %s0 = inlined_call_operand.hbm [shape: bf16[8192,64], index: 0, kind: input, shape index: {}]
  %s1 = inlined_call_operand.vmem [shape: bf16[64,4], index: 1, kind: input, shape index: {}]
  %s2 = inlined_call_operand.vmem [shape: bf16[8192,4], index: 2, kind: output, shape index: {}]
  %s3 = sld [smem:[#allocation0]]
  $region45: #{_lambda_.4} parent=0
    _
  %s5 = ssub.s32 1, %s3
  %s6 = scalar_select 0, %s5, %s3
  $region1: #{_lambda_.4} parent=0
    #allocation2 [shape = 'u8[524288]{0}', space=vmem, size = 0x80000, scoped, tag = 'input window, operand 0']
    #allocation3 [shape = 's32[2]{0}', space=sflag, size = 0x8, scoped, tag = 'scoped memory for _lambda_.4']
    %7 = vsyncpa [#allocation3], 0
    %s8 = scalar_lea.sflag [#allocation3], 1
    %9 = vsyncpa %s8, 0
    loop: start=0, step=1, limit=10
    $region2: #{_lambda_.4} parent=1 // loop_pre_header
      _
    $region3: #{_lambda_.4} parent=1 // loop_header
      %s11 = sphi 0, %s15
      %p12 = scmp.ge.s32.totalorder %s11, 10
      %s21 = sphi 0, %s23
      %s24 = sphi 0, %s21
      %s25 = sphi 0, %s24
      %s41 = sphi 0, %s25
      %s45 = sphi 0, %s45
      %s47 = sphi 0, %s45
      %s48 = sphi 0, %s47
      %s62 = sphi 0, %s48
      %s68 = sphi 0, %s70
      %s71 = sphi 0, %s68
      %s72 = sphi 0, %s71
      %s88 = sphi 0, %s72
    $region4: #{_lambda_.4} parent=1 // loop_header_branch
      %14 = sbr.rel (%p12) target = $region8
    $region5: #{_lambda_.4} parent=1 // loop_body
      %s16 = ssub.s32 %s11, 1
      %s17 = ssub.s32 %s11, 2
      %s18 = sadd.s32 %s11, 1
      %s19 = ssub.s32 %s11, %s18
      %p20 = scmp.eq.s32.totalorder %s19, 0
      %s22 = sadd.s32 %s21, 1
      %s23 = scalar_select %p20, %s21, %s22
      %p26 = pneg %p20
      %p27 = scmp.eq.s32.totalorder %s11, 7
      %p28 = por %p26, %p27
      %p29 = scmp.ne.s32.totalorder %s21, %s24
      %p30 = scmp.eq.s32.totalorder %s11, 0
      %p31 = por %p29, %p30
      %p32 = scmp.ne.s32.totalorder %s21, %s24
      %p33 = scmp.eq.s32.totalorder %s16, 7
      %p34 = por %p32, %p33
      %p35 = scmp.ne.s32.totalorder %s24, %s25
      %p36 = scmp.eq.s32.totalorder %s16, 0
      %p37 = por %p35, %p36
      %p38 = scmp.ne.s32.totalorder %s24, %s25
      %p39 = scmp.eq.s32.totalorder %s17, 7
      %p40 = por %p38, %p39
      %p42 = scmp.ne.s32.totalorder %s25, %s41
      %p43 = scmp.eq.s32.totalorder %s17, 0
      %p44 = por %p42, %p43
      %s46 = sadd.s32 %s45, 1
      %p49 = scmp.eq.s32.totalorder %s11, 7
      %p50 = scmp.ne.s32.totalorder %s45, %s47
      %p51 = scmp.eq.s32.totalorder %s11, 0
      %p52 = por %p50, %p51
      %p53 = scmp.ne.s32.totalorder %s45, %s47
      %p54 = scmp.eq.s32.totalorder %s16, 7
      %p55 = por %p53, %p54
      %p56 = scmp.ne.s32.totalorder %s47, %s48
      %p57 = scmp.eq.s32.totalorder %s16, 0
      %p58 = por %p56, %p57
      %p59 = scmp.ne.s32.totalorder %s47, %s48
      %p60 = scmp.eq.s32.totalorder %s17, 7
      %p61 = por %p59, %p60
      %p63 = scmp.ne.s32.totalorder %s48, %s62
      %p64 = scmp.eq.s32.totalorder %s17, 0
      %p65 = por %p63, %p64
      %s66 = ssub.s32 %s11, %s18
      %p67 = scmp.eq.s32.totalorder %s66, 0
      %s69 = sadd.s32 %s68, 1
      %s70 = scalar_select %p67, %s68, %s69
      %p73 = pneg %p67
      %p74 = scmp.eq.s32.totalorder %s11, 7
      %p75 = por %p73, %p74
      %p76 = scmp.ne.s32.totalorder %s68, %s71
      %p77 = scmp.eq.s32.totalorder %s11, 0
      %p78 = por %p76, %p77
      %p79 = scmp.ne.s32.totalorder %s68, %s71
      %p80 = scmp.eq.s32.totalorder %s16, 7
      %p81 = por %p79, %p80
      %p82 = scmp.ne.s32.totalorder %s71, %s72
      %p83 = scmp.eq.s32.totalorder %s16, 0
      %p84 = por %p82, %p83
      %p85 = scmp.ne.s32.totalorder %s71, %s72
      %p86 = scmp.eq.s32.totalorder %s17, 7
      %p87 = por %p85, %p86
      %p89 = scmp.ne.s32.totalorder %s72, %s88
      %p90 = scmp.eq.s32.totalorder %s17, 0
      %p91 = por %p89, %p90
      %p92 = scmp.le.s32.totalorder 1, %s11
      %p93 = scmp.lt.s32.totalorder %s11, 9
      %p94 = pnand %p92, %p93
      %p95 = pneg %p94
      // Predicated region
      $region9: #{_lambda_.4} parent=5 // pred_check
        _
      $region10: #{_lambda_.4} parent=5 // pred_check_branch
        %97 = sbr.rel (%p94) target = $region12
      $region11: #{_lambda_.4} parent=5 // pred_region
        %s98 = ssub.s32 %s11, 1
        // Predicated region
        $region13: #{_lambda_.4} parent=11 // pred_check
          %p99 = pneg %p58
        $region14: #{_lambda_.4} parent=11 // pred_check_branch
          %101 = sbr.rel (%p99) target = $region16
        $region15: #{_lambda_.4} parent=11 // pred_region
          _
        $region16: #{_lambda_.4} parent=11 // pred_fallthru
          _
      $region12: #{_lambda_.4} parent=5 // pred_fallthru
        _
      %p102 = scmp.lt.s32.totalorder %s11, 8
      // Predicated region
      $region17: #{_lambda_.4} parent=5 // pred_check
        %p103 = pneg %p102
      $region18: #{_lambda_.4} parent=5 // pred_check_branch
        %105 = sbr.rel (%p103) target = $region20
      $region19: #{_lambda_.4} parent=5 // pred_region
        // Predicated region
        $region21: #{_lambda_.4} parent=19 // pred_check
          %p106 = pneg %p31
        $region22: #{_lambda_.4} parent=19 // pred_check_branch
          %108 = sbr.rel (%p106) target = $region24
        $region23: #{_lambda_.4} parent=19 // pred_region
          %s109 = sand.u32 %s21, 1
          %s110 = scalar_lea.sflag [#allocation3], %s109
          %s111 = sand.u32 %s21, 1
          %s112 = smul.addr %s111, 512
          %s113 = scalar_lea.vmem [#allocation2], %s112
          %s114 = smul.u32 128, %s11
          %s116 = ssub.s32 8192, 8192
          %117 = vsyncadd %s110, %s116
          %s118 = smul.addr %s114, 64
          %s119 = scalar_lea.hbm %s0, %s118
          %s120 = sshll.u32 %s113, 4
          %s121 = int_to_ptr.vmem [resolvable:$true] %s120
          %126 = dma.hbm_to_vmem [thread:$0]  %s119, 8192, %s121, %s110, 64, 64, 4
        $region24: #{_lambda_.4} parent=19 // pred_fallthru
          _
      $region20: #{_lambda_.4} parent=5 // pred_fallthru
        _
      %p127 = scmp.le.s32.totalorder 1, %s11
      %p128 = scmp.lt.s32.totalorder %s11, 9
      %p129 = pnand %p127, %p128
      %p130 = pneg %p129
      // Predicated region
      $region25: #{_lambda_.4} parent=5 // pred_check
        _
      $region26: #{_lambda_.4} parent=5 // pred_check_branch
        %132 = sbr.rel (%p129) target = $region28
      $region27: #{_lambda_.4} parent=5 // pred_region
        %s133 = ssub.s32 %s11, 1
        %s134 = sand.u32 %s24, 1
        %s135 = scalar_lea.sflag [#allocation3], %s134
        %s136 = sand.u32 %s24, 1
        %s137 = smul.addr %s136, 512
        %s138 = scalar_lea.vmem [#allocation2], %s137
        // Predicated region
        $region29: #{_lambda_.4} parent=27 // pred_check
          %p139 = pneg %p37
        $region30: #{_lambda_.4} parent=27 // pred_check_branch
          %141 = sbr.rel (%p139) target = $region32
        $region31: #{_lambda_.4} parent=27 // pred_region
          %142 = dma.done %s135, 8192
        $region32: #{_lambda_.4} parent=27 // pred_fallthru
          _
        %s143 = sand.u32 %s24, 1
        %s144 = scalar_lea.sflag [#allocation3], %s143
        %s145 = sand.u32 %s24, 1
        %s146 = smul.addr %s145, 512
        %s147 = scalar_lea.vmem [#allocation2], %s146
        %p148 = pneg %p37
        %p149 = pneg %p34
        %p150 = pneg %p58
        %p151 = pneg %p55
        %p152 = pneg %p84
        %p153 = pneg %p81
        %s154 = smul.u32 128, %s16
        %p155 = scmp.lt.s32.totalorder %s154, 1023
        %s156 = scalar_select %p155, %s154, 1023
        %s157 = smul.addr %s156, 4
        %s158 = scalar_lea.vmem %s2, %s157
        %s159 = smul.u32 128, %s16
        %s160 = smul.u32 128, %s16
        %p161 = scmp.lt.s32.totalorder %s160, 1023
        %s162 = scalar_select %p161, %s160, 1023
        %s163 = smul.addr %s162, 4
        %s164 = scalar_lea.vmem %s2, %s163
        %s165 = smul.u32 128, %s16
        %v167 = vld [vmem:[%s138] sm:$0xf]
        %v168 = vld [vmem:[%s138 + $0x4] sm:$0xf]
        %v169 = vld [vmem:[%s138 + $0x8] sm:$0xf]
        %v170 = vld [vmem:[%s138 + $0xc] sm:$0xf]
        %v171 = vld [vmem:[%s138 + $0x10] sm:$0xf]
        %v172 = vld [vmem:[%s138 + $0x14] sm:$0xf]
        %v173 = vld [vmem:[%s138 + $0x18] sm:$0xf]
        %v174 = vld [vmem:[%s138 + $0x1c] sm:$0xf]
        %v175 = vld [vmem:[%s138 + $0x20] sm:$0xf]
        %v176 = vld [vmem:[%s138 + $0x24] sm:$0xf]
        %v177 = vld [vmem:[%s138 + $0x28] sm:$0xf]
        %v178 = vld [vmem:[%s138 + $0x2c] sm:$0xf]
        %v179 = vld [vmem:[%s138 + $0x30] sm:$0xf]
        %v180 = vld [vmem:[%s138 + $0x34] sm:$0xf]
        %v181 = vld [vmem:[%s138 + $0x38] sm:$0xf]
        %v182 = vld [vmem:[%s138 + $0x3c] sm:$0xf]
        %v183 = vld [vmem:[%s138 + $0x40] sm:$0xf]
        %v184 = vld [vmem:[%s138 + $0x44] sm:$0xf]
        %v185 = vld [vmem:[%s138 + $0x48] sm:$0xf]
        %v186 = vld [vmem:[%s138 + $0x4c] sm:$0xf]
        %v187 = vld [vmem:[%s138 + $0x50] sm:$0xf]
        %v188 = vld [vmem:[%s138 + $0x54] sm:$0xf]
        %v189 = vld [vmem:[%s138 + $0x58] sm:$0xf]
        %v190 = vld [vmem:[%s138 + $0x5c] sm:$0xf]
        %v191 = vld [vmem:[%s138 + $0x60] sm:$0xf]
        %v192 = vld [vmem:[%s138 + $0x64] sm:$0xf]
        %v193 = vld [vmem:[%s138 + $0x68] sm:$0xf]
        %v194 = vld [vmem:[%s138 + $0x6c] sm:$0xf]
        %v195 = vld [vmem:[%s138 + $0x70] sm:$0xf]
        %v196 = vld [vmem:[%s138 + $0x74] sm:$0xf]
        %v197 = vld [vmem:[%s138 + $0x78] sm:$0xf]
        %v198 = vld [vmem:[%s138 + $0x7c] sm:$0xf]
        %v199 = vld [vmem:[%s138 + $0x80] sm:$0xf]
        %v200 = vld [vmem:[%s138 + $0x84] sm:$0xf]
        %v201 = vld [vmem:[%s138 + $0x88] sm:$0xf]
        %v202 = vld [vmem:[%s138 + $0x8c] sm:$0xf]
        %v203 = vld [vmem:[%s138 + $0x90] sm:$0xf]
        %v204 = vld [vmem:[%s138 + $0x94] sm:$0xf]
        %v205 = vld [vmem:[%s138 + $0x98] sm:$0xf]
        %v206 = vld [vmem:[%s138 + $0x9c] sm:$0xf]
        %v207 = vld [vmem:[%s138 + $0xa0] sm:$0xf]
        %v208 = vld [vmem:[%s138 + $0xa4] sm:$0xf]
        %v209 = vld [vmem:[%s138 + $0xa8] sm:$0xf]
        %v210 = vld [vmem:[%s138 + $0xac] sm:$0xf]
        %v211 = vld [vmem:[%s138 + $0xb0] sm:$0xf]
        %v212 = vld [vmem:[%s138 + $0xb4] sm:$0xf]
        %v213 = vld [vmem:[%s138 + $0xb8] sm:$0xf]
        %v214 = vld [vmem:[%s138 + $0xbc] sm:$0xf]
        %v215 = vld [vmem:[%s138 + $0xc0] sm:$0xf]
        %v216 = vld [vmem:[%s138 + $0xc4] sm:$0xf]
        %v217 = vld [vmem:[%s138 + $0xc8] sm:$0xf]
        %v218 = vld [vmem:[%s138 + $0xcc] sm:$0xf]
        %v219 = vld [vmem:[%s138 + $0xd0] sm:$0xf]
        %v220 = vld [vmem:[%s138 + $0xd4] sm:$0xf]
        %v221 = vld [vmem:[%s138 + $0xd8] sm:$0xf]
        %v222 = vld [vmem:[%s138 + $0xdc] sm:$0xf]
        %v223 = vld [vmem:[%s138 + $0xe0] sm:$0xf]
        %v224 = vld [vmem:[%s138 + $0xe4] sm:$0xf]
        %v225 = vld [vmem:[%s138 + $0xe8] sm:$0xf]
        %v226 = vld [vmem:[%s138 + $0xec] sm:$0xf]
        %v227 = vld [vmem:[%s138 + $0xf0] sm:$0xf]
        %v228 = vld [vmem:[%s138 + $0xf4] sm:$0xf]
        %v229 = vld [vmem:[%s138 + $0xf8] sm:$0xf]
        %v230 = vld [vmem:[%s138 + $0xfc] sm:$0xf]
        %v231 = vld [vmem:[%s138 + $0x100] sm:$0xf]
        %v232 = vld [vmem:[%s138 + $0x104] sm:$0xf]
        %v233 = vld [vmem:[%s138 + $0x108] sm:$0xf]
        %v234 = vld [vmem:[%s138 + $0x10c] sm:$0xf]
        %v235 = vld [vmem:[%s138 + $0x110] sm:$0xf]
        %v236 = vld [vmem:[%s138 + $0x114] sm:$0xf]
        %v237 = vld [vmem:[%s138 + $0x118] sm:$0xf]
        %v238 = vld [vmem:[%s138 + $0x11c] sm:$0xf]
        %v239 = vld [vmem:[%s138 + $0x120] sm:$0xf]
        %v240 = vld [vmem:[%s138 + $0x124] sm:$0xf]
        %v241 = vld [vmem:[%s138 + $0x128] sm:$0xf]
        %v242 = vld [vmem:[%s138 + $0x12c] sm:$0xf]
        %v243 = vld [vmem:[%s138 + $0x130] sm:$0xf]
        %v244 = vld [vmem:[%s138 + $0x134] sm:$0xf]
        %v245 = vld [vmem:[%s138 + $0x138] sm:$0xf]
        %v246 = vld [vmem:[%s138 + $0x13c] sm:$0xf]
        %v247 = vld [vmem:[%s138 + $0x140] sm:$0xf]
        %v248 = vld [vmem:[%s138 + $0x144] sm:$0xf]
        %v249 = vld [vmem:[%s138 + $0x148] sm:$0xf]
        %v250 = vld [vmem:[%s138 + $0x14c] sm:$0xf]
        %v251 = vld [vmem:[%s138 + $0x150] sm:$0xf]
        %v252 = vld [vmem:[%s138 + $0x154] sm:$0xf]
        %v253 = vld [vmem:[%s138 + $0x158] sm:$0xf]
        %v254 = vld [vmem:[%s138 + $0x15c] sm:$0xf]
        %v255 = vld [vmem:[%s138 + $0x160] sm:$0xf]
        %v256 = vld [vmem:[%s138 + $0x164] sm:$0xf]
        %v257 = vld [vmem:[%s138 + $0x168] sm:$0xf]
        %v258 = vld [vmem:[%s138 + $0x16c] sm:$0xf]
        %v259 = vld [vmem:[%s138 + $0x170] sm:$0xf]
        %v260 = vld [vmem:[%s138 + $0x174] sm:$0xf]
        %v261 = vld [vmem:[%s138 + $0x178] sm:$0xf]
        %v262 = vld [vmem:[%s138 + $0x17c] sm:$0xf]
        %v263 = vld [vmem:[%s138 + $0x180] sm:$0xf]
        %v264 = vld [vmem:[%s138 + $0x184] sm:$0xf]
        %v265 = vld [vmem:[%s138 + $0x188] sm:$0xf]
        %v266 = vld [vmem:[%s138 + $0x18c] sm:$0xf]
        %v267 = vld [vmem:[%s138 + $0x190] sm:$0xf]
        %v268 = vld [vmem:[%s138 + $0x194] sm:$0xf]
        %v269 = vld [vmem:[%s138 + $0x198] sm:$0xf]
        %v270 = vld [vmem:[%s138 + $0x19c] sm:$0xf]
        %v271 = vld [vmem:[%s138 + $0x1a0] sm:$0xf]
        %v272 = vld [vmem:[%s138 + $0x1a4] sm:$0xf]
        %v273 = vld [vmem:[%s138 + $0x1a8] sm:$0xf]
        %v274 = vld [vmem:[%s138 + $0x1ac] sm:$0xf]
        %v275 = vld [vmem:[%s138 + $0x1b0] sm:$0xf]
        %v276 = vld [vmem:[%s138 + $0x1b4] sm:$0xf]
        %v277 = vld [vmem:[%s138 + $0x1b8] sm:$0xf]
        %v278 = vld [vmem:[%s138 + $0x1bc] sm:$0xf]
        %v279 = vld [vmem:[%s138 + $0x1c0] sm:$0xf]
        %v280 = vld [vmem:[%s138 + $0x1c4] sm:$0xf]
        %v281 = vld [vmem:[%s138 + $0x1c8] sm:$0xf]
        %v282 = vld [vmem:[%s138 + $0x1cc] sm:$0xf]
        %v283 = vld [vmem:[%s138 + $0x1d0] sm:$0xf]
        %v284 = vld [vmem:[%s138 + $0x1d4] sm:$0xf]
        %v285 = vld [vmem:[%s138 + $0x1d8] sm:$0xf]
        %v286 = vld [vmem:[%s138 + $0x1dc] sm:$0xf]
        %v287 = vld [vmem:[%s138 + $0x1e0] sm:$0xf]
        %v288 = vld [vmem:[%s138 + $0x1e4] sm:$0xf]
        %v289 = vld [vmem:[%s138 + $0x1e8] sm:$0xf]
        %v290 = vld [vmem:[%s138 + $0x1ec] sm:$0xf]
        %v291 = vld [vmem:[%s138 + $0x1f0] sm:$0xf]
        %v292 = vld [vmem:[%s138 + $0x1f4] sm:$0xf]
        %v293 = vld [vmem:[%s138 + $0x1f8] sm:$0xf]
        %v294 = vld [vmem:[%s138 + $0x1fc] sm:$0xf]
        %v295 = vld [vmem:[%s1] sm:$0xf]
        %v296 = vld [vmem:[%s1 + $0x4] sm:$0xf]
        %v297 = vld [vmem:[%s1 + $0x8] sm:$0xf]
        %v298 = vld [vmem:[%s1 + $0xc] sm:$0xf]
        %v299 = vld [vmem:[%s1 + $0x10] sm:$0xf]
        %v300 = vld [vmem:[%s1 + $0x14] sm:$0xf]
        %v301 = vld [vmem:[%s1 + $0x18] sm:$0xf]
        %v302 = vld [vmem:[%s1 + $0x1c] sm:$0xf]
        %v431 = vunpack.c.l.b16 %v167
        %v432 = vunpack.c.l.b16 %v168
        %v433 = vunpack.c.l.b16 %v169
        %v434 = vunpack.c.l.b16 %v170
        %v435 = vunpack.c.l.b16 %v171
        %v436 = vunpack.c.l.b16 %v172
        %v437 = vunpack.c.l.b16 %v173
        %v438 = vunpack.c.l.b16 %v174
        %v439 = vunpack.c.l.b16 %v175
        %v440 = vunpack.c.l.b16 %v176
        %v441 = vunpack.c.l.b16 %v177
        %v442 = vunpack.c.l.b16 %v178
        %v443 = vunpack.c.l.b16 %v179
        %v444 = vunpack.c.l.b16 %v180
        %v445 = vunpack.c.l.b16 %v181
        %v446 = vunpack.c.l.b16 %v182
        %v447 = vunpack.c.l.b16 %v183
        %v448 = vunpack.c.l.b16 %v184
        %v449 = vunpack.c.l.b16 %v185
        %v450 = vunpack.c.l.b16 %v186
        %v451 = vunpack.c.l.b16 %v187
        %v452 = vunpack.c.l.b16 %v188
        %v453 = vunpack.c.l.b16 %v189
        %v454 = vunpack.c.l.b16 %v190
        %v455 = vunpack.c.l.b16 %v191
        %v456 = vunpack.c.l.b16 %v192
        %v457 = vunpack.c.l.b16 %v193
        %v458 = vunpack.c.l.b16 %v194
        %v459 = vunpack.c.l.b16 %v195
        %v460 = vunpack.c.l.b16 %v196
        %v461 = vunpack.c.l.b16 %v197
        %v462 = vunpack.c.l.b16 %v198
        %v463 = vunpack.c.l.b16 %v199
        %v464 = vunpack.c.l.b16 %v200
        %v465 = vunpack.c.l.b16 %v201
        %v466 = vunpack.c.l.b16 %v202
        %v467 = vunpack.c.l.b16 %v203
        %v468 = vunpack.c.l.b16 %v204
        %v469 = vunpack.c.l.b16 %v205
        %v470 = vunpack.c.l.b16 %v206
        %v471 = vunpack.c.l.b16 %v207
        %v472 = vunpack.c.l.b16 %v208
        %v473 = vunpack.c.l.b16 %v209
        %v474 = vunpack.c.l.b16 %v210
        %v475 = vunpack.c.l.b16 %v211
        %v476 = vunpack.c.l.b16 %v212
        %v477 = vunpack.c.l.b16 %v213
        %v478 = vunpack.c.l.b16 %v214
        %v479 = vunpack.c.l.b16 %v215
        %v480 = vunpack.c.l.b16 %v216
        %v481 = vunpack.c.l.b16 %v217
        %v482 = vunpack.c.l.b16 %v218
        %v483 = vunpack.c.l.b16 %v219
        %v484 = vunpack.c.l.b16 %v220
        %v485 = vunpack.c.l.b16 %v221
        %v486 = vunpack.c.l.b16 %v222
        %v487 = vunpack.c.l.b16 %v223
        %v488 = vunpack.c.l.b16 %v224
        %v489 = vunpack.c.l.b16 %v225
        %v490 = vunpack.c.l.b16 %v226
        %v491 = vunpack.c.l.b16 %v227
        %v492 = vunpack.c.l.b16 %v228
        %v493 = vunpack.c.l.b16 %v229
        %v494 = vunpack.c.l.b16 %v230
        %v495 = vunpack.c.l.b16 %v231
        %v496 = vunpack.c.l.b16 %v232
        %v497 = vunpack.c.l.b16 %v233
        %v498 = vunpack.c.l.b16 %v234
        %v499 = vunpack.c.l.b16 %v235
        %v500 = vunpack.c.l.b16 %v236
        %v501 = vunpack.c.l.b16 %v237
        %v502 = vunpack.c.l.b16 %v238
        %v503 = vunpack.c.l.b16 %v239
        %v504 = vunpack.c.l.b16 %v240
        %v505 = vunpack.c.l.b16 %v241
        %v506 = vunpack.c.l.b16 %v242
        %v507 = vunpack.c.l.b16 %v243
        %v508 = vunpack.c.l.b16 %v244
        %v509 = vunpack.c.l.b16 %v245
        %v510 = vunpack.c.l.b16 %v246
        %v511 = vunpack.c.l.b16 %v247
        %v512 = vunpack.c.l.b16 %v248
        %v513 = vunpack.c.l.b16 %v249
        %v514 = vunpack.c.l.b16 %v250
        %v515 = vunpack.c.l.b16 %v251
        %v516 = vunpack.c.l.b16 %v252
        %v517 = vunpack.c.l.b16 %v253
        %v518 = vunpack.c.l.b16 %v254
        %v519 = vunpack.c.l.b16 %v255
        %v520 = vunpack.c.l.b16 %v256
        %v521 = vunpack.c.l.b16 %v257
        %v522 = vunpack.c.l.b16 %v258
        %v523 = vunpack.c.l.b16 %v259
        %v524 = vunpack.c.l.b16 %v260
        %v525 = vunpack.c.l.b16 %v261
        %v526 = vunpack.c.l.b16 %v262
        %v527 = vunpack.c.l.b16 %v263
        %v528 = vunpack.c.l.b16 %v264
        %v529 = vunpack.c.l.b16 %v265
        %v530 = vunpack.c.l.b16 %v266
        %v531 = vunpack.c.l.b16 %v267
        %v532 = vunpack.c.l.b16 %v268
        %v533 = vunpack.c.l.b16 %v269
        %v534 = vunpack.c.l.b16 %v270
        %v535 = vunpack.c.l.b16 %v271
        %v536 = vunpack.c.l.b16 %v272
        %v537 = vunpack.c.l.b16 %v273
        %v538 = vunpack.c.l.b16 %v274
        %v539 = vunpack.c.l.b16 %v275
        %v540 = vunpack.c.l.b16 %v276
        %v541 = vunpack.c.l.b16 %v277
        %v542 = vunpack.c.l.b16 %v278
        %v543 = vunpack.c.l.b16 %v279
        %v544 = vunpack.c.l.b16 %v280
        %v545 = vunpack.c.l.b16 %v281
        %v546 = vunpack.c.l.b16 %v282
        %v547 = vunpack.c.l.b16 %v283
        %v548 = vunpack.c.l.b16 %v284
        %v549 = vunpack.c.l.b16 %v285
        %v550 = vunpack.c.l.b16 %v286
        %v551 = vunpack.c.l.b16 %v287
        %v552 = vunpack.c.l.b16 %v288
        %v553 = vunpack.c.l.b16 %v289
        %v554 = vunpack.c.l.b16 %v290
        %v555 = vunpack.c.l.b16 %v291
        %v556 = vunpack.c.l.b16 %v292
        %v557 = vunpack.c.l.b16 %v293
        %v558 = vunpack.c.l.b16 %v294
        %v559 = vpack.c.b16 %v432, %v431
        %v560 = vpack.c.b16 %v434, %v433
        %v561 = vpack.c.b16 %v436, %v435
        %v562 = vpack.c.b16 %v438, %v437
        %v563 = vpack.c.b16 %v440, %v439
        %v564 = vpack.c.b16 %v442, %v441
        %v565 = vpack.c.b16 %v444, %v443
        %v566 = vpack.c.b16 %v446, %v445
        %v567 = vpack.c.b16 %v448, %v447
        %v568 = vpack.c.b16 %v450, %v449
        %v569 = vpack.c.b16 %v452, %v451
        %v570 = vpack.c.b16 %v454, %v453
        %v571 = vpack.c.b16 %v456, %v455
        %v572 = vpack.c.b16 %v458, %v457
        %v573 = vpack.c.b16 %v460, %v459
        %v574 = vpack.c.b16 %v462, %v461
        %v575 = vpack.c.b16 %v464, %v463
        %v576 = vpack.c.b16 %v466, %v465
        %v577 = vpack.c.b16 %v468, %v467
        %v578 = vpack.c.b16 %v470, %v469
        %v579 = vpack.c.b16 %v472, %v471
        %v580 = vpack.c.b16 %v474, %v473
        %v581 = vpack.c.b16 %v476, %v475
        %v582 = vpack.c.b16 %v478, %v477
        %v583 = vpack.c.b16 %v480, %v479
        %v584 = vpack.c.b16 %v482, %v481
        %v585 = vpack.c.b16 %v484, %v483
        %v586 = vpack.c.b16 %v486, %v485
        %v587 = vpack.c.b16 %v488, %v487
        %v588 = vpack.c.b16 %v490, %v489
        %v589 = vpack.c.b16 %v492, %v491
        %v590 = vpack.c.b16 %v494, %v493
        %v591 = vpack.c.b16 %v496, %v495
        %v592 = vpack.c.b16 %v498, %v497
        %v593 = vpack.c.b16 %v500, %v499
        %v594 = vpack.c.b16 %v502, %v501
        %v595 = vpack.c.b16 %v504, %v503
        %v596 = vpack.c.b16 %v506, %v505
        %v597 = vpack.c.b16 %v508, %v507
        %v598 = vpack.c.b16 %v510, %v509
        %v599 = vpack.c.b16 %v512, %v511
        %v600 = vpack.c.b16 %v514, %v513
        %v601 = vpack.c.b16 %v516, %v515
        %v602 = vpack.c.b16 %v518, %v517
        %v603 = vpack.c.b16 %v520, %v519
        %v604 = vpack.c.b16 %v522, %v521
        %v605 = vpack.c.b16 %v524, %v523
        %v606 = vpack.c.b16 %v526, %v525
        %v607 = vpack.c.b16 %v528, %v527
        %v608 = vpack.c.b16 %v530, %v529
        %v609 = vpack.c.b16 %v532, %v531
        %v610 = vpack.c.b16 %v534, %v533
        %v611 = vpack.c.b16 %v536, %v535
        %v612 = vpack.c.b16 %v538, %v537
        %v613 = vpack.c.b16 %v540, %v539
        %v614 = vpack.c.b16 %v542, %v541
        %v615 = vpack.c.b16 %v544, %v543
        %v616 = vpack.c.b16 %v546, %v545
        %v617 = vpack.c.b16 %v548, %v547
        %v618 = vpack.c.b16 %v550, %v549
        %v619 = vpack.c.b16 %v552, %v551
        %v620 = vpack.c.b16 %v554, %v553
        %v621 = vpack.c.b16 %v556, %v555
        %v622 = vpack.c.b16 %v558, %v557
        %v631 = vunpack.c.l.b16 %v295
        %v632 = vunpack.c.l.b16 %v296
        %v633 = vunpack.c.l.b16 %v297
        %v634 = vunpack.c.l.b16 %v298
        %v635 = vunpack.c.l.b16 %v299
        %v636 = vunpack.c.l.b16 %v300
        %v637 = vunpack.c.l.b16 %v301
        %v638 = vunpack.c.l.b16 %v302
        %v639 = vpack.c.b16 %v632, %v631
        %v640 = vpack.c.b16 %v634, %v633
        %v641 = vpack.c.b16 %v636, %v635
        %v642 = vpack.c.b16 %v638, %v637
        %vm647 = vcmask 523264
        %v649 = vsel %vm647, %v559, 0
        %v652 = vsel %vm647, %v560, 0
        %v655 = vsel %vm647, %v561, 0
        %v658 = vsel %vm647, %v562, 0
        %v661 = vsel %vm647, %v563, 0
        %v664 = vsel %vm647, %v564, 0
        %v667 = vsel %vm647, %v565, 0
        %v670 = vsel %vm647, %v566, 0
        %v673 = vsel %vm647, %v567, 0
        %v676 = vsel %vm647, %v568, 0
        %v679 = vsel %vm647, %v569, 0
        %v682 = vsel %vm647, %v570, 0
        %v685 = vsel %vm647, %v571, 0
        %v688 = vsel %vm647, %v572, 0
        %v691 = vsel %vm647, %v573, 0
        %v694 = vsel %vm647, %v574, 0
        %v697 = vsel %vm647, %v575, 0
        %v700 = vsel %vm647, %v576, 0
        %v703 = vsel %vm647, %v577, 0
        %v706 = vsel %vm647, %v578, 0
        %v709 = vsel %vm647, %v579, 0
        %v712 = vsel %vm647, %v580, 0
        %v715 = vsel %vm647, %v581, 0
        %v718 = vsel %vm647, %v582, 0
        %v721 = vsel %vm647, %v583, 0
        %v724 = vsel %vm647, %v584, 0
        %v727 = vsel %vm647, %v585, 0
        %v730 = vsel %vm647, %v586, 0
        %v733 = vsel %vm647, %v587, 0
        %v736 = vsel %vm647, %v588, 0
        %v739 = vsel %vm647, %v589, 0
        %v742 = vsel %vm647, %v590, 0
        %v745 = vsel %vm647, %v591, 0
        %v748 = vsel %vm647, %v592, 0
        %v751 = vsel %vm647, %v593, 0
        %v754 = vsel %vm647, %v594, 0
        %v757 = vsel %vm647, %v595, 0
        %v760 = vsel %vm647, %v596, 0
        %v763 = vsel %vm647, %v597, 0
        %v766 = vsel %vm647, %v598, 0
        %v769 = vsel %vm647, %v599, 0
        %v772 = vsel %vm647, %v600, 0
        %v775 = vsel %vm647, %v601, 0
        %v778 = vsel %vm647, %v602, 0
        %v781 = vsel %vm647, %v603, 0
        %v784 = vsel %vm647, %v604, 0
        %v787 = vsel %vm647, %v605, 0
        %v790 = vsel %vm647, %v606, 0
        %v793 = vsel %vm647, %v607, 0
        %v796 = vsel %vm647, %v608, 0
        %v799 = vsel %vm647, %v609, 0
        %v802 = vsel %vm647, %v610, 0
        %v805 = vsel %vm647, %v611, 0
        %v808 = vsel %vm647, %v612, 0
        %v811 = vsel %vm647, %v613, 0
        %v814 = vsel %vm647, %v614, 0
        %v817 = vsel %vm647, %v615, 0
        %v820 = vsel %vm647, %v616, 0
        %v823 = vsel %vm647, %v617, 0
        %v826 = vsel %vm647, %v618, 0
        %v829 = vsel %vm647, %v619, 0
        %v832 = vsel %vm647, %v620, 0
        %v835 = vsel %vm647, %v621, 0
        %v838 = vsel %vm647, %v622, 0
        %840 = vmatprep.subr.bf16.mxu0 0
        %841 = vmatpush1.bf16.msra.mxu0 %v639
        %842 = vmatprep.subr.bf16.mxu0 0
        %843 = vmatpush1.bf16.msra.mxu0 %v640
        %844 = vmatprep.subr.bf16.mxu0 0
        %845 = vmatpush1.bf16.msra.mxu0 %v641
        %846 = vmatprep.subr.bf16.mxu0 0
        %847 = vmatpush1.bf16.msra.mxu0 %v642
        %848 = vmatprep.subr.bf16.mxu0 0
        %849 = vmatpush1.bf16.msra.mxu0 0
        %850 = vmatprep.subr.bf16.mxu0 0
        %851 = vmatpush1.bf16.msra.mxu0 0
        %852 = vmatprep.subr.bf16.mxu0 0
        %853 = vmatpush1.bf16.msra.mxu0 0
        %854 = vmatprep.subr.bf16.mxu0 0
        %855 = vmatpush1.bf16.msra.mxu0 0
        %856 = vmatprep.subr.bf16.mxu0 0
        %857 = vmatpush1.bf16.msra.mxu0 0
        %858 = vmatprep.subr.bf16.mxu0 0
        %859 = vmatpush1.bf16.msra.mxu0 0
        %860 = vmatprep.subr.bf16.mxu0 0
        %861 = vmatpush1.bf16.msra.mxu0 0
        %862 = vmatprep.subr.bf16.mxu0 0
        %863 = vmatpush1.bf16.msra.mxu0 0
        %864 = vmatprep.subr.bf16.mxu0 0
        %865 = vmatpush1.bf16.msra.mxu0 0
        %866 = vmatprep.subr.bf16.mxu0 0
        %867 = vmatpush1.bf16.msra.mxu0 0
        %868 = vmatprep.subr.bf16.mxu0 0
        %869 = vmatpush1.bf16.msra.mxu0 0
        %870 = vmatprep.subr.bf16.mxu0 0
        %871 = vmatpush1.bf16.msra.mxu0 0
        %872 = vmatprep.mubr.bf16.mxu0 0
        %873 = vmatmul.mubr.bf16.gmra.mrb[0].mxu0 %v649
        %v874 = vpop.f32.mrb[0].mxu0
        %v875 = vadd.f32 0.0, %v874
        %v876 = vpop.f32.mrb[0].mxu0
        %v877 = vpop.f32.mrb[0].mxu0
        %v878 = vadd.f32 0.0, %v877
        %v879 = vpop.f32.mrb[0].mxu0
        %880 = vmatprep.mubr.bf16.mxu0 0
        %881 = vmatmul.mubr.bf16.gmra.mrb[0].mxu0 %v652
        %v882 = vpop.f32.mrb[0].mxu0
        %v883 = vadd.f32 0.0, %v882
        %v884 = vpop.f32.mrb[0].mxu0
        %v885 = vpop.f32.mrb[0].mxu0
        %v886 = vadd.f32 0.0, %v885
        %v887 = vpop.f32.mrb[0].mxu0
        %888 = vmatprep.mubr.bf16.mxu0 0
        %889 = vmatmul.mubr.bf16.gmra.mrb[0].mxu0 %v655
        %v890 = vpop.f32.mrb[0].mxu0
        %v891 = vadd.f32 0.0, %v890
        %v892 = vpop.f32.mrb[0].mxu0
        %v893 = vpop.f32.mrb[0].mxu0
        %v894 = vadd.f32 0.0, %v893
        %v895 = vpop.f32.mrb[0].mxu0
        %896 = vmatprep.mubr.bf16.mxu0 0
        %897 = vmatmul.mubr.bf16.gmra.mrb[0].mxu0 %v658
        %v898 = vpop.f32.mrb[0].mxu0
        %v899 = vadd.f32 0.0, %v898
        %v900 = vpop.f32.mrb[0].mxu0
        %v901 = vpop.f32.mrb[0].mxu0
        %v902 = vadd.f32 0.0, %v901
        %v903 = vpop.f32.mrb[0].mxu0
        %904 = vmatprep.mubr.bf16.mxu0 0
        %905 = vmatmul.mubr.bf16.gmra.mrb[0].mxu0 %v661
        %v906 = vpop.f32.mrb[0].mxu0
        %v907 = vadd.f32 0.0, %v906
        %v908 = vpop.f32.mrb[0].mxu0
        %v909 = vpop.f32.mrb[0].mxu0
        %v910 = vadd.f32 0.0, %v909
        %v911 = vpop.f32.mrb[0].mxu0
        %912 = vmatprep.mubr.bf16.mxu0 0
        %913 = vmatmul.mubr.bf16.gmra.mrb[0].mxu0 %v664
        %v914 = vpop.f32.mrb[0].mxu0
        %v915 = vadd.f32 0.0, %v914
        %v916 = vpop.f32.mrb[0].mxu0
        %v917 = vpop.f32.mrb[0].mxu0
        %v918 = vadd.f32 0.0, %v917
        %v919 = vpop.f32.mrb[0].mxu0
        %920 = vmatprep.mubr.bf16.mxu0 0
        %921 = vmatmul.mubr.bf16.gmra.mrb[0].mxu0 %v667
        %v922 = vpop.f32.mrb[0].mxu0
        %v923 = vadd.f32 0.0, %v922
        %v924 = vpop.f32.mrb[0].mxu0
        %v925 = vpop.f32.mrb[0].mxu0
        %v926 = vadd.f32 0.0, %v925
        %v927 = vpop.f32.mrb[0].mxu0
        %928 = vmatprep.mubr.bf16.mxu0 0
        %929 = vmatmul.mubr.bf16.gmra.mrb[0].mxu0 %v670
        %v930 = vpop.f32.mrb[0].mxu0
        %v931 = vadd.f32 0.0, %v930
        %v932 = vpop.f32.mrb[0].mxu0
        %v933 = vpop.f32.mrb[0].mxu0
        %v934 = vadd.f32 0.0, %v933
        %v935 = vpop.f32.mrb[0].mxu0
        %936 = vmatprep.mubr.bf16.mxu0 0
        %937 = vmatmul.mubr.bf16.gmra.mrb[0].mxu0 %v673
        %v938 = vpop.f32.mrb[0].mxu0
        %v939 = vadd.f32 0.0, %v938
        %v940 = vpop.f32.mrb[0].mxu0
        %v941 = vpop.f32.mrb[0].mxu0
        %v942 = vadd.f32 0.0, %v941
        %v943 = vpop.f32.mrb[0].mxu0
        %944 = vmatprep.mubr.bf16.mxu0 0
        %945 = vmatmul.mubr.bf16.gmra.mrb[0].mxu0 %v676
        %v946 = vpop.f32.mrb[0].mxu0
        %v947 = vadd.f32 0.0, %v946
        %v948 = vpop.f32.mrb[0].mxu0
        %v949 = vpop.f32.mrb[0].mxu0
        %v950 = vadd.f32 0.0, %v949
        %v951 = vpop.f32.mrb[0].mxu0
        %952 = vmatprep.mubr.bf16.mxu0 0
        %953 = vmatmul.mubr.bf16.gmra.mrb[0].mxu0 %v679
        %v954 = vpop.f32.mrb[0].mxu0
        %v955 = vadd.f32 0.0, %v954
        %v956 = vpop.f32.mrb[0].mxu0
        %v957 = vpop.f32.mrb[0].mxu0
        %v958 = vadd.f32 0.0, %v957
        %v959 = vpop.f32.mrb[0].mxu0
        %960 = vmatprep.mubr.bf16.mxu0 0
        %961 = vmatmul.mubr.bf16.gmra.mrb[0].mxu0 %v682
        %v962 = vpop.f32.mrb[0].mxu0
        %v963 = vadd.f32 0.0, %v962
        %v964 = vpop.f32.mrb[0].mxu0
        %v965 = vpop.f32.mrb[0].mxu0
        %v966 = vadd.f32 0.0, %v965
        %v967 = vpop.f32.mrb[0].mxu0
        %968 = vmatprep.mubr.bf16.mxu0 0
        %969 = vmatmul.mubr.bf16.gmra.mrb[0].mxu0 %v685
        %v970 = vpop.f32.mrb[0].mxu0
        %v971 = vadd.f32 0.0, %v970
        %v972 = vpop.f32.mrb[0].mxu0
        %v973 = vpop.f32.mrb[0].mxu0
        %v974 = vadd.f32 0.0, %v973
        %v975 = vpop.f32.mrb[0].mxu0
        %976 = vmatprep.mubr.bf16.mxu0 0
        %977 = vmatmul.mubr.bf16.gmra.mrb[0].mxu0 %v688
        %v978 = vpop.f32.mrb[0].mxu0
        %v979 = vadd.f32 0.0, %v978
        %v980 = vpop.f32.mrb[0].mxu0
        %v981 = vpop.f32.mrb[0].mxu0
        %v982 = vadd.f32 0.0, %v981
        %v983 = vpop.f32.mrb[0].mxu0
        %984 = vmatprep.mubr.bf16.mxu0 0
        %985 = vmatmul.mubr.bf16.gmra.mrb[0].mxu0 %v691
        %v986 = vpop.f32.mrb[0].mxu0
        %v987 = vadd.f32 0.0, %v986
        %v988 = vpop.f32.mrb[0].mxu0
        %v989 = vpop.f32.mrb[0].mxu0
        %v990 = vadd.f32 0.0, %v989
        %v991 = vpop.f32.mrb[0].mxu0
        %992 = vmatprep.mubr.bf16.mxu0 0
        %993 = vmatmul.mubr.bf16.gmra.mrb[0].mxu0 %v694
        %v994 = vpop.f32.mrb[0].mxu0
        %v995 = vadd.f32 0.0, %v994
        %v996 = vpop.f32.mrb[0].mxu0
        %v997 = vpop.f32.mrb[0].mxu0
        %v998 = vadd.f32 0.0, %v997
        %v999 = vpop.f32.mrb[0].mxu0
        %1000 = vmatprep.mubr.bf16.mxu0 0
        %1001 = vmatmul.mubr.bf16.gmra.mrb[0].mxu0 %v697
        %v1002 = vpop.f32.mrb[0].mxu0
        %v1003 = vadd.f32 0.0, %v1002
        %v1004 = vpop.f32.mrb[0].mxu0
        %v1005 = vpop.f32.mrb[0].mxu0
        %v1006 = vadd.f32 0.0, %v1005
        %v1007 = vpop.f32.mrb[0].mxu0
        %1008 = vmatprep.mubr.bf16.mxu0 0
        %1009 = vmatmul.mubr.bf16.gmra.mrb[0].mxu0 %v700
        %v1010 = vpop.f32.mrb[0].mxu0
        %v1011 = vadd.f32 0.0, %v1010
        %v1012 = vpop.f32.mrb[0].mxu0
        %v1013 = vpop.f32.mrb[0].mxu0
        %v1014 = vadd.f32 0.0, %v1013
        %v1015 = vpop.f32.mrb[0].mxu0
        %1016 = vmatprep.mubr.bf16.mxu0 0
        %1017 = vmatmul.mubr.bf16.gmra.mrb[0].mxu0 %v703
        %v1018 = vpop.f32.mrb[0].mxu0
        %v1019 = vadd.f32 0.0, %v1018
        %v1020 = vpop.f32.mrb[0].mxu0
        %v1021 = vpop.f32.mrb[0].mxu0
        %v1022 = vadd.f32 0.0, %v1021
        %v1023 = vpop.f32.mrb[0].mxu0
        %1024 = vmatprep.mubr.bf16.mxu0 0
        %1025 = vmatmul.mubr.bf16.gmra.mrb[0].mxu0 %v706
        %v1026 = vpop.f32.mrb[0].mxu0
        %v1027 = vadd.f32 0.0, %v1026
        %v1028 = vpop.f32.mrb[0].mxu0
        %v1029 = vpop.f32.mrb[0].mxu0
        %v1030 = vadd.f32 0.0, %v1029
        %v1031 = vpop.f32.mrb[0].mxu0
        %1032 = vmatprep.mubr.bf16.mxu0 0
        %1033 = vmatmul.mubr.bf16.gmra.mrb[0].mxu0 %v709
        %v1034 = vpop.f32.mrb[0].mxu0
        %v1035 = vadd.f32 0.0, %v1034
        %v1036 = vpop.f32.mrb[0].mxu0
        %v1037 = vpop.f32.mrb[0].mxu0
        %v1038 = vadd.f32 0.0, %v1037
        %v1039 = vpop.f32.mrb[0].mxu0
        %1040 = vmatprep.mubr.bf16.mxu0 0
        %1041 = vmatmul.mubr.bf16.gmra.mrb[0].mxu0 %v712
        %v1042 = vpop.f32.mrb[0].mxu0
        %v1043 = vadd.f32 0.0, %v1042
        %v1044 = vpop.f32.mrb[0].mxu0
        %v1045 = vpop.f32.mrb[0].mxu0
        %v1046 = vadd.f32 0.0, %v1045
        %v1047 = vpop.f32.mrb[0].mxu0
        %1048 = vmatprep.mubr.bf16.mxu0 0
        %1049 = vmatmul.mubr.bf16.gmra.mrb[0].mxu0 %v715
        %v1050 = vpop.f32.mrb[0].mxu0
        %v1051 = vadd.f32 0.0, %v1050
        %v1052 = vpop.f32.mrb[0].mxu0
        %v1053 = vpop.f32.mrb[0].mxu0
        %v1054 = vadd.f32 0.0, %v1053
        %v1055 = vpop.f32.mrb[0].mxu0
        %1056 = vmatprep.mubr.bf16.mxu0 0
        %1057 = vmatmul.mubr.bf16.gmra.mrb[0].mxu0 %v718
        %v1058 = vpop.f32.mrb[0].mxu0
        %v1059 = vadd.f32 0.0, %v1058
        %v1060 = vpop.f32.mrb[0].mxu0
        %v1061 = vpop.f32.mrb[0].mxu0
        %v1062 = vadd.f32 0.0, %v1061
        %v1063 = vpop.f32.mrb[0].mxu0
        %1064 = vmatprep.mubr.bf16.mxu0 0
        %1065 = vmatmul.mubr.bf16.gmra.mrb[0].mxu0 %v721
        %v1066 = vpop.f32.mrb[0].mxu0
        %v1067 = vadd.f32 0.0, %v1066
        %v1068 = vpop.f32.mrb[0].mxu0
        %v1069 = vpop.f32.mrb[0].mxu0
        %v1070 = vadd.f32 0.0, %v1069
        %v1071 = vpop.f32.mrb[0].mxu0
        %1072 = vmatprep.mubr.bf16.mxu0 0
        %1073 = vmatmul.mubr.bf16.gmra.mrb[0].mxu0 %v724
        %v1074 = vpop.f32.mrb[0].mxu0
        %v1075 = vadd.f32 0.0, %v1074
        %v1076 = vpop.f32.mrb[0].mxu0
        %v1077 = vpop.f32.mrb[0].mxu0
        %v1078 = vadd.f32 0.0, %v1077
        %v1079 = vpop.f32.mrb[0].mxu0
        %1080 = vmatprep.mubr.bf16.mxu0 0
        %1081 = vmatmul.mubr.bf16.gmra.mrb[0].mxu0 %v727
        %v1082 = vpop.f32.mrb[0].mxu0
        %v1083 = vadd.f32 0.0, %v1082
        %v1084 = vpop.f32.mrb[0].mxu0
        %v1085 = vpop.f32.mrb[0].mxu0
        %v1086 = vadd.f32 0.0, %v1085
        %v1087 = vpop.f32.mrb[0].mxu0
        %1088 = vmatprep.mubr.bf16.mxu0 0
        %1089 = vmatmul.mubr.bf16.gmra.mrb[0].mxu0 %v730
        %v1090 = vpop.f32.mrb[0].mxu0
        %v1091 = vadd.f32 0.0, %v1090
        %v1092 = vpop.f32.mrb[0].mxu0
        %v1093 = vpop.f32.mrb[0].mxu0
        %v1094 = vadd.f32 0.0, %v1093
        %v1095 = vpop.f32.mrb[0].mxu0
        %1096 = vmatprep.mubr.bf16.mxu0 0
        %1097 = vmatmul.mubr.bf16.gmra.mrb[0].mxu0 %v733
        %v1098 = vpop.f32.mrb[0].mxu0
        %v1099 = vadd.f32 0.0, %v1098
        %v1100 = vpop.f32.mrb[0].mxu0
        %v1101 = vpop.f32.mrb[0].mxu0
        %v1102 = vadd.f32 0.0, %v1101
        %v1103 = vpop.f32.mrb[0].mxu0
        %1104 = vmatprep.mubr.bf16.mxu0 0
        %1105 = vmatmul.mubr.bf16.gmra.mrb[0].mxu0 %v736
        %v1106 = vpop.f32.mrb[0].mxu0
        %v1107 = vadd.f32 0.0, %v1106
        %v1108 = vpop.f32.mrb[0].mxu0
        %v1109 = vpop.f32.mrb[0].mxu0
        %v1110 = vadd.f32 0.0, %v1109
        %v1111 = vpop.f32.mrb[0].mxu0
        %1112 = vmatprep.mubr.bf16.mxu0 0
        %1113 = vmatmul.mubr.bf16.gmra.mrb[0].mxu0 %v739
        %v1114 = vpop.f32.mrb[0].mxu0
        %v1115 = vadd.f32 0.0, %v1114
        %v1116 = vpop.f32.mrb[0].mxu0
        %v1117 = vpop.f32.mrb[0].mxu0
        %v1118 = vadd.f32 0.0, %v1117
        %v1119 = vpop.f32.mrb[0].mxu0
        %1120 = vmatprep.mubr.bf16.mxu0 0
        %1121 = vmatmul.mubr.bf16.gmra.mrb[0].mxu0 %v742
        %v1122 = vpop.f32.mrb[0].mxu0
        %v1123 = vadd.f32 0.0, %v1122
        %v1124 = vpop.f32.mrb[0].mxu0
        %v1125 = vpop.f32.mrb[0].mxu0
        %v1126 = vadd.f32 0.0, %v1125
        %v1127 = vpop.f32.mrb[0].mxu0
        %1128 = vmatprep.mubr.bf16.mxu0 0
        %1129 = vmatmul.mubr.bf16.gmra.mrb[0].mxu0 %v745
        %v1130 = vpop.f32.mrb[0].mxu0
        %v1131 = vadd.f32 0.0, %v1130
        %v1132 = vpop.f32.mrb[0].mxu0
        %v1133 = vpop.f32.mrb[0].mxu0
        %v1134 = vadd.f32 0.0, %v1133
        %v1135 = vpop.f32.mrb[0].mxu0
        %1136 = vmatprep.mubr.bf16.mxu0 0
        %1137 = vmatmul.mubr.bf16.gmra.mrb[0].mxu0 %v748
        %v1138 = vpop.f32.mrb[0].mxu0
        %v1139 = vadd.f32 0.0, %v1138
        %v1140 = vpop.f32.mrb[0].mxu0
        %v1141 = vpop.f32.mrb[0].mxu0
        %v1142 = vadd.f32 0.0, %v1141
        %v1143 = vpop.f32.mrb[0].mxu0
        %1144 = vmatprep.mubr.bf16.mxu0 0
        %1145 = vmatmul.mubr.bf16.gmra.mrb[0].mxu0 %v751
        %v1146 = vpop.f32.mrb[0].mxu0
        %v1147 = vadd.f32 0.0, %v1146
        %v1148 = vpop.f32.mrb[0].mxu0
        %v1149 = vpop.f32.mrb[0].mxu0
        %v1150 = vadd.f32 0.0, %v1149
        %v1151 = vpop.f32.mrb[0].mxu0
        %1152 = vmatprep.mubr.bf16.mxu0 0
        %1153 = vmatmul.mubr.bf16.gmra.mrb[0].mxu0 %v754
        %v1154 = vpop.f32.mrb[0].mxu0
        %v1155 = vadd.f32 0.0, %v1154
        %v1156 = vpop.f32.mrb[0].mxu0
        %v1157 = vpop.f32.mrb[0].mxu0
        %v1158 = vadd.f32 0.0, %v1157
        %v1159 = vpop.f32.mrb[0].mxu0
        %1160 = vmatprep.mubr.bf16.mxu0 0
        %1161 = vmatmul.mubr.bf16.gmra.mrb[0].mxu0 %v757
        %v1162 = vpop.f32.mrb[0].mxu0
        %v1163 = vadd.f32 0.0, %v1162
        %v1164 = vpop.f32.mrb[0].mxu0
        %v1165 = vpop.f32.mrb[0].mxu0
        %v1166 = vadd.f32 0.0, %v1165
        %v1167 = vpop.f32.mrb[0].mxu0
        %1168 = vmatprep.mubr.bf16.mxu0 0
        %1169 = vmatmul.mubr.bf16.gmra.mrb[0].mxu0 %v760
        %v1170 = vpop.f32.mrb[0].mxu0
        %v1171 = vadd.f32 0.0, %v1170
        %v1172 = vpop.f32.mrb[0].mxu0
        %v1173 = vpop.f32.mrb[0].mxu0
        %v1174 = vadd.f32 0.0, %v1173
        %v1175 = vpop.f32.mrb[0].mxu0
        %1176 = vmatprep.mubr.bf16.mxu0 0
        %1177 = vmatmul.mubr.bf16.gmra.mrb[0].mxu0 %v763
        %v1178 = vpop.f32.mrb[0].mxu0
        %v1179 = vadd.f32 0.0, %v1178
        %v1180 = vpop.f32.mrb[0].mxu0
        %v1181 = vpop.f32.mrb[0].mxu0
        %v1182 = vadd.f32 0.0, %v1181
        %v1183 = vpop.f32.mrb[0].mxu0
        %1184 = vmatprep.mubr.bf16.mxu0 0
        %1185 = vmatmul.mubr.bf16.gmra.mrb[0].mxu0 %v766
        %v1186 = vpop.f32.mrb[0].mxu0
        %v1187 = vadd.f32 0.0, %v1186
        %v1188 = vpop.f32.mrb[0].mxu0
        %v1189 = vpop.f32.mrb[0].mxu0
        %v1190 = vadd.f32 0.0, %v1189
        %v1191 = vpop.f32.mrb[0].mxu0
        %1192 = vmatprep.mubr.bf16.mxu0 0
        %1193 = vmatmul.mubr.bf16.gmra.mrb[0].mxu0 %v769
        %v1194 = vpop.f32.mrb[0].mxu0
        %v1195 = vadd.f32 0.0, %v1194
        %v1196 = vpop.f32.mrb[0].mxu0
        %v1197 = vpop.f32.mrb[0].mxu0
        %v1198 = vadd.f32 0.0, %v1197
        %v1199 = vpop.f32.mrb[0].mxu0
        %1200 = vmatprep.mubr.bf16.mxu0 0
        %1201 = vmatmul.mubr.bf16.gmra.mrb[0].mxu0 %v772
        %v1202 = vpop.f32.mrb[0].mxu0
        %v1203 = vadd.f32 0.0, %v1202
        %v1204 = vpop.f32.mrb[0].mxu0
        %v1205 = vpop.f32.mrb[0].mxu0
        %v1206 = vadd.f32 0.0, %v1205
        %v1207 = vpop.f32.mrb[0].mxu0
        %1208 = vmatprep.mubr.bf16.mxu0 0
        %1209 = vmatmul.mubr.bf16.gmra.mrb[0].mxu0 %v775
        %v1210 = vpop.f32.mrb[0].mxu0
        %v1211 = vadd.f32 0.0, %v1210
        %v1212 = vpop.f32.mrb[0].mxu0
        %v1213 = vpop.f32.mrb[0].mxu0
        %v1214 = vadd.f32 0.0, %v1213
        %v1215 = vpop.f32.mrb[0].mxu0
        %1216 = vmatprep.mubr.bf16.mxu0 0
        %1217 = vmatmul.mubr.bf16.gmra.mrb[0].mxu0 %v778
        %v1218 = vpop.f32.mrb[0].mxu0
        %v1219 = vadd.f32 0.0, %v1218
        %v1220 = vpop.f32.mrb[0].mxu0
        %v1221 = vpop.f32.mrb[0].mxu0
        %v1222 = vadd.f32 0.0, %v1221
        %v1223 = vpop.f32.mrb[0].mxu0
        %1224 = vmatprep.mubr.bf16.mxu0 0
        %1225 = vmatmul.mubr.bf16.gmra.mrb[0].mxu0 %v781
        %v1226 = vpop.f32.mrb[0].mxu0
        %v1227 = vadd.f32 0.0, %v1226
        %v1228 = vpop.f32.mrb[0].mxu0
        %v1229 = vpop.f32.mrb[0].mxu0
        %v1230 = vadd.f32 0.0, %v1229
        %v1231 = vpop.f32.mrb[0].mxu0
        %1232 = vmatprep.mubr.bf16.mxu0 0
        %1233 = vmatmul.mubr.bf16.gmra.mrb[0].mxu0 %v784
        %v1234 = vpop.f32.mrb[0].mxu0
        %v1235 = vadd.f32 0.0, %v1234
        %v1236 = vpop.f32.mrb[0].mxu0
        %v1237 = vpop.f32.mrb[0].mxu0
        %v1238 = vadd.f32 0.0, %v1237
        %v1239 = vpop.f32.mrb[0].mxu0
        %1240 = vmatprep.mubr.bf16.mxu0 0
        %1241 = vmatmul.mubr.bf16.gmra.mrb[0].mxu0 %v787
        %v1242 = vpop.f32.mrb[0].mxu0
        %v1243 = vadd.f32 0.0, %v1242
        %v1244 = vpop.f32.mrb[0].mxu0
        %v1245 = vpop.f32.mrb[0].mxu0
        %v1246 = vadd.f32 0.0, %v1245
        %v1247 = vpop.f32.mrb[0].mxu0
        %1248 = vmatprep.mubr.bf16.mxu0 0
        %1249 = vmatmul.mubr.bf16.gmra.mrb[0].mxu0 %v790
        %v1250 = vpop.f32.mrb[0].mxu0
        %v1251 = vadd.f32 0.0, %v1250
        %v1252 = vpop.f32.mrb[0].mxu0
        %v1253 = vpop.f32.mrb[0].mxu0
        %v1254 = vadd.f32 0.0, %v1253
        %v1255 = vpop.f32.mrb[0].mxu0
        %1256 = vmatprep.mubr.bf16.mxu0 0
        %1257 = vmatmul.mubr.bf16.gmra.mrb[0].mxu0 %v793
        %v1258 = vpop.f32.mrb[0].mxu0
        %v1259 = vadd.f32 0.0, %v1258
        %v1260 = vpop.f32.mrb[0].mxu0
        %v1261 = vpop.f32.mrb[0].mxu0
        %v1262 = vadd.f32 0.0, %v1261
        %v1263 = vpop.f32.mrb[0].mxu0
        %1264 = vmatprep.mubr.bf16.mxu0 0
        %1265 = vmatmul.mubr.bf16.gmra.mrb[0].mxu0 %v796
        %v1266 = vpop.f32.mrb[0].mxu0
        %v1267 = vadd.f32 0.0, %v1266
        %v1268 = vpop.f32.mrb[0].mxu0
        %v1269 = vpop.f32.mrb[0].mxu0
        %v1270 = vadd.f32 0.0, %v1269
        %v1271 = vpop.f32.mrb[0].mxu0
        %1272 = vmatprep.mubr.bf16.mxu0 0
        %1273 = vmatmul.mubr.bf16.gmra.mrb[0].mxu0 %v799
        %v1274 = vpop.f32.mrb[0].mxu0
        %v1275 = vadd.f32 0.0, %v1274
        %v1276 = vpop.f32.mrb[0].mxu0
        %v1277 = vpop.f32.mrb[0].mxu0
        %v1278 = vadd.f32 0.0, %v1277
        %v1279 = vpop.f32.mrb[0].mxu0
        %1280 = vmatprep.mubr.bf16.mxu0 0
        %1281 = vmatmul.mubr.bf16.gmra.mrb[0].mxu0 %v802
        %v1282 = vpop.f32.mrb[0].mxu0
        %v1283 = vadd.f32 0.0, %v1282
        %v1284 = vpop.f32.mrb[0].mxu0
        %v1285 = vpop.f32.mrb[0].mxu0
        %v1286 = vadd.f32 0.0, %v1285
        %v1287 = vpop.f32.mrb[0].mxu0
        %1288 = vmatprep.mubr.bf16.mxu0 0
        %1289 = vmatmul.mubr.bf16.gmra.mrb[0].mxu0 %v805
        %v1290 = vpop.f32.mrb[0].mxu0
        %v1291 = vadd.f32 0.0, %v1290
        %v1292 = vpop.f32.mrb[0].mxu0
        %v1293 = vpop.f32.mrb[0].mxu0
        %v1294 = vadd.f32 0.0, %v1293
        %v1295 = vpop.f32.mrb[0].mxu0
        %1296 = vmatprep.mubr.bf16.mxu0 0
        %1297 = vmatmul.mubr.bf16.gmra.mrb[0].mxu0 %v808
        %v1298 = vpop.f32.mrb[0].mxu0
        %v1299 = vadd.f32 0.0, %v1298
        %v1300 = vpop.f32.mrb[0].mxu0
        %v1301 = vpop.f32.mrb[0].mxu0
        %v1302 = vadd.f32 0.0, %v1301
        %v1303 = vpop.f32.mrb[0].mxu0
        %1304 = vmatprep.mubr.bf16.mxu0 0
        %1305 = vmatmul.mubr.bf16.gmra.mrb[0].mxu0 %v811
        %v1306 = vpop.f32.mrb[0].mxu0
        %v1307 = vadd.f32 0.0, %v1306
        %v1308 = vpop.f32.mrb[0].mxu0
        %v1309 = vpop.f32.mrb[0].mxu0
        %v1310 = vadd.f32 0.0, %v1309
        %v1311 = vpop.f32.mrb[0].mxu0
        %1312 = vmatprep.mubr.bf16.mxu0 0
        %1313 = vmatmul.mubr.bf16.gmra.mrb[0].mxu0 %v814
        %v1314 = vpop.f32.mrb[0].mxu0
        %v1315 = vadd.f32 0.0, %v1314
        %v1316 = vpop.f32.mrb[0].mxu0
        %v1317 = vpop.f32.mrb[0].mxu0
        %v1318 = vadd.f32 0.0, %v1317
        %v1319 = vpop.f32.mrb[0].mxu0
        %1320 = vmatprep.mubr.bf16.mxu0 0
        %1321 = vmatmul.mubr.bf16.gmra.mrb[0].mxu0 %v817
        %v1322 = vpop.f32.mrb[0].mxu0
        %v1323 = vadd.f32 0.0, %v1322
        %v1324 = vpop.f32.mrb[0].mxu0
        %v1325 = vpop.f32.mrb[0].mxu0
        %v1326 = vadd.f32 0.0, %v1325
        %v1327 = vpop.f32.mrb[0].mxu0
        %1328 = vmatprep.mubr.bf16.mxu0 0
        %1329 = vmatmul.mubr.bf16.gmra.mrb[0].mxu0 %v820
        %v1330 = vpop.f32.mrb[0].mxu0
        %v1331 = vadd.f32 0.0, %v1330
        %v1332 = vpop.f32.mrb[0].mxu0
        %v1333 = vpop.f32.mrb[0].mxu0
        %v1334 = vadd.f32 0.0, %v1333
        %v1335 = vpop.f32.mrb[0].mxu0
        %1336 = vmatprep.mubr.bf16.mxu0 0
        %1337 = vmatmul.mubr.bf16.gmra.mrb[0].mxu0 %v823
        %v1338 = vpop.f32.mrb[0].mxu0
        %v1339 = vadd.f32 0.0, %v1338
        %v1340 = vpop.f32.mrb[0].mxu0
        %v1341 = vpop.f32.mrb[0].mxu0
        %v1342 = vadd.f32 0.0, %v1341
        %v1343 = vpop.f32.mrb[0].mxu0
        %1344 = vmatprep.mubr.bf16.mxu0 0
        %1345 = vmatmul.mubr.bf16.gmra.mrb[0].mxu0 %v826
        %v1346 = vpop.f32.mrb[0].mxu0
        %v1347 = vadd.f32 0.0, %v1346
        %v1348 = vpop.f32.mrb[0].mxu0
        %v1349 = vpop.f32.mrb[0].mxu0
        %v1350 = vadd.f32 0.0, %v1349
        %v1351 = vpop.f32.mrb[0].mxu0
        %1352 = vmatprep.mubr.bf16.mxu0 0
        %1353 = vmatmul.mubr.bf16.gmra.mrb[0].mxu0 %v829
        %v1354 = vpop.f32.mrb[0].mxu0
        %v1355 = vadd.f32 0.0, %v1354
        %v1356 = vpop.f32.mrb[0].mxu0
        %v1357 = vpop.f32.mrb[0].mxu0
        %v1358 = vadd.f32 0.0, %v1357
        %v1359 = vpop.f32.mrb[0].mxu0
        %1360 = vmatprep.mubr.bf16.mxu0 0
        %1361 = vmatmul.mubr.bf16.gmra.mrb[0].mxu0 %v832
        %v1362 = vpop.f32.mrb[0].mxu0
        %v1363 = vadd.f32 0.0, %v1362
        %v1364 = vpop.f32.mrb[0].mxu0
        %v1365 = vpop.f32.mrb[0].mxu0
        %v1366 = vadd.f32 0.0, %v1365
        %v1367 = vpop.f32.mrb[0].mxu0
        %1368 = vmatprep.mubr.bf16.mxu0 0
        %1369 = vmatmul.mubr.bf16.gmra.mrb[0].mxu0 %v835
        %v1370 = vpop.f32.mrb[0].mxu0
        %v1371 = vadd.f32 0.0, %v1370
        %v1372 = vpop.f32.mrb[0].mxu0
        %v1373 = vpop.f32.mrb[0].mxu0
        %v1374 = vadd.f32 0.0, %v1373
        %v1375 = vpop.f32.mrb[0].mxu0
        %1376 = vmatprep.mubr.bf16.mxu0 0
        %1377 = vmatmul.mubr.bf16.gmra.mrb[0].mxu0 %v838
        %v1378 = vpop.f32.mrb[0].mxu0
        %v1379 = vadd.f32 0.0, %v1378
        %v1380 = vpop.f32.mrb[0].mxu0
        %v1381 = vpop.f32.mrb[0].mxu0
        %v1382 = vadd.f32 0.0, %v1381
        %v1383 = vpop.f32.mrb[0].mxu0
        %1384 = vdwg.mxu0
        %vm1385 = vcmp.ge.f32.partialorder %v875, 0.0
        %vm1386 = vcmp.ge.f32.partialorder %v878, 0.0
        %vm1387 = vcmp.ge.f32.partialorder %v883, 0.0
        %vm1388 = vcmp.ge.f32.partialorder %v886, 0.0
        %vm1389 = vcmp.ge.f32.partialorder %v891, 0.0
        %vm1390 = vcmp.ge.f32.partialorder %v894, 0.0
        %vm1391 = vcmp.ge.f32.partialorder %v899, 0.0
        %vm1392 = vcmp.ge.f32.partialorder %v902, 0.0
        %vm1393 = vcmp.ge.f32.partialorder %v907, 0.0
        %vm1394 = vcmp.ge.f32.partialorder %v910, 0.0
        %vm1395 = vcmp.ge.f32.partialorder %v915, 0.0
        %vm1396 = vcmp.ge.f32.partialorder %v918, 0.0
        %vm1397 = vcmp.ge.f32.partialorder %v923, 0.0
        %vm1398 = vcmp.ge.f32.partialorder %v926, 0.0
        %vm1399 = vcmp.ge.f32.partialorder %v931, 0.0
        %vm1400 = vcmp.ge.f32.partialorder %v934, 0.0
        %vm1401 = vcmp.ge.f32.partialorder %v939, 0.0
        %vm1402 = vcmp.ge.f32.partialorder %v942, 0.0
        %vm1403 = vcmp.ge.f32.partialorder %v947, 0.0
        %vm1404 = vcmp.ge.f32.partialorder %v950, 0.0
        %vm1405 = vcmp.ge.f32.partialorder %v955, 0.0
        %vm1406 = vcmp.ge.f32.partialorder %v958, 0.0
        %vm1407 = vcmp.ge.f32.partialorder %v963, 0.0
        %vm1408 = vcmp.ge.f32.partialorder %v966, 0.0
        %vm1409 = vcmp.ge.f32.partialorder %v971, 0.0
        %vm1410 = vcmp.ge.f32.partialorder %v974, 0.0
        %vm1411 = vcmp.ge.f32.partialorder %v979, 0.0
        %vm1412 = vcmp.ge.f32.partialorder %v982, 0.0
        %vm1413 = vcmp.ge.f32.partialorder %v987, 0.0
        %vm1414 = vcmp.ge.f32.partialorder %v990, 0.0
        %vm1415 = vcmp.ge.f32.partialorder %v995, 0.0
        %vm1416 = vcmp.ge.f32.partialorder %v998, 0.0
        %vm1417 = vcmp.ge.f32.partialorder %v1003, 0.0
        %vm1418 = vcmp.ge.f32.partialorder %v1006, 0.0
        %vm1419 = vcmp.ge.f32.partialorder %v1011, 0.0
        %vm1420 = vcmp.ge.f32.partialorder %v1014, 0.0
        %vm1421 = vcmp.ge.f32.partialorder %v1019, 0.0
        %vm1422 = vcmp.ge.f32.partialorder %v1022, 0.0
        %vm1423 = vcmp.ge.f32.partialorder %v1027, 0.0
        %vm1424 = vcmp.ge.f32.partialorder %v1030, 0.0
        %vm1425 = vcmp.ge.f32.partialorder %v1035, 0.0
        %vm1426 = vcmp.ge.f32.partialorder %v1038, 0.0
        %vm1427 = vcmp.ge.f32.partialorder %v1043, 0.0
        %vm1428 = vcmp.ge.f32.partialorder %v1046, 0.0
        %vm1429 = vcmp.ge.f32.partialorder %v1051, 0.0
        %vm1430 = vcmp.ge.f32.partialorder %v1054, 0.0
        %vm1431 = vcmp.ge.f32.partialorder %v1059, 0.0
        %vm1432 = vcmp.ge.f32.partialorder %v1062, 0.0
        %vm1433 = vcmp.ge.f32.partialorder %v1067, 0.0
        %vm1434 = vcmp.ge.f32.partialorder %v1070, 0.0
        %vm1435 = vcmp.ge.f32.partialorder %v1075, 0.0
        %vm1436 = vcmp.ge.f32.partialorder %v1078, 0.0
        %vm1437 = vcmp.ge.f32.partialorder %v1083, 0.0
        %vm1438 = vcmp.ge.f32.partialorder %v1086, 0.0
        %vm1439 = vcmp.ge.f32.partialorder %v1091, 0.0
        %vm1440 = vcmp.ge.f32.partialorder %v1094, 0.0
        %vm1441 = vcmp.ge.f32.partialorder %v1099, 0.0
        %vm1442 = vcmp.ge.f32.partialorder %v1102, 0.0
        %vm1443 = vcmp.ge.f32.partialorder %v1107, 0.0
        %vm1444 = vcmp.ge.f32.partialorder %v1110, 0.0
        %vm1445 = vcmp.ge.f32.partialorder %v1115, 0.0
        %vm1446 = vcmp.ge.f32.partialorder %v1118, 0.0
        %vm1447 = vcmp.ge.f32.partialorder %v1123, 0.0
        %vm1448 = vcmp.ge.f32.partialorder %v1126, 0.0
        %vm1449 = vcmp.ge.f32.partialorder %v1131, 0.0
        %vm1450 = vcmp.ge.f32.partialorder %v1134, 0.0
        %vm1451 = vcmp.ge.f32.partialorder %v1139, 0.0
        %vm1452 = vcmp.ge.f32.partialorder %v1142, 0.0
        %vm1453 = vcmp.ge.f32.partialorder %v1147, 0.0
        %vm1454 = vcmp.ge.f32.partialorder %v1150, 0.0
        %vm1455 = vcmp.ge.f32.partialorder %v1155, 0.0
        %vm1456 = vcmp.ge.f32.partialorder %v1158, 0.0
        %vm1457 = vcmp.ge.f32.partialorder %v1163, 0.0
        %vm1458 = vcmp.ge.f32.partialorder %v1166, 0.0
        %vm1459 = vcmp.ge.f32.partialorder %v1171, 0.0
        %vm1460 = vcmp.ge.f32.partialorder %v1174, 0.0
        %vm1461 = vcmp.ge.f32.partialorder %v1179, 0.0
        %vm1462 = vcmp.ge.f32.partialorder %v1182, 0.0
        %vm1463 = vcmp.ge.f32.partialorder %v1187, 0.0
        %vm1464 = vcmp.ge.f32.partialorder %v1190, 0.0
        %vm1465 = vcmp.ge.f32.partialorder %v1195, 0.0
        %vm1466 = vcmp.ge.f32.partialorder %v1198, 0.0
        %vm1467 = vcmp.ge.f32.partialorder %v1203, 0.0
        %vm1468 = vcmp.ge.f32.partialorder %v1206, 0.0
        %vm1469 = vcmp.ge.f32.partialorder %v1211, 0.0
        %vm1470 = vcmp.ge.f32.partialorder %v1214, 0.0
        %vm1471 = vcmp.ge.f32.partialorder %v1219, 0.0
        %vm1472 = vcmp.ge.f32.partialorder %v1222, 0.0
        %vm1473 = vcmp.ge.f32.partialorder %v1227, 0.0
        %vm1474 = vcmp.ge.f32.partialorder %v1230, 0.0
        %vm1475 = vcmp.ge.f32.partialorder %v1235, 0.0
        %vm1476 = vcmp.ge.f32.partialorder %v1238, 0.0
        %vm1477 = vcmp.ge.f32.partialorder %v1243, 0.0
        %vm1478 = vcmp.ge.f32.partialorder %v1246, 0.0
        %vm1479 = vcmp.ge.f32.partialorder %v1251, 0.0
        %vm1480 = vcmp.ge.f32.partialorder %v1254, 0.0
        %vm1481 = vcmp.ge.f32.partialorder %v1259, 0.0
        %vm1482 = vcmp.ge.f32.partialorder %v1262, 0.0
        %vm1483 = vcmp.ge.f32.partialorder %v1267, 0.0
        %vm1484 = vcmp.ge.f32.partialorder %v1270, 0.0
        %vm1485 = vcmp.ge.f32.partialorder %v1275, 0.0
        %vm1486 = vcmp.ge.f32.partialorder %v1278, 0.0
        %vm1487 = vcmp.ge.f32.partialorder %v1283, 0.0
        %vm1488 = vcmp.ge.f32.partialorder %v1286, 0.0
        %vm1489 = vcmp.ge.f32.partialorder %v1291, 0.0
        %vm1490 = vcmp.ge.f32.partialorder %v1294, 0.0
        %vm1491 = vcmp.ge.f32.partialorder %v1299, 0.0
        %vm1492 = vcmp.ge.f32.partialorder %v1302, 0.0
        %vm1493 = vcmp.ge.f32.partialorder %v1307, 0.0
        %vm1494 = vcmp.ge.f32.partialorder %v1310, 0.0
        %vm1495 = vcmp.ge.f32.partialorder %v1315, 0.0
        %vm1496 = vcmp.ge.f32.partialorder %v1318, 0.0
        %vm1497 = vcmp.ge.f32.partialorder %v1323, 0.0
        %vm1498 = vcmp.ge.f32.partialorder %v1326, 0.0
        %vm1499 = vcmp.ge.f32.partialorder %v1331, 0.0
        %vm1500 = vcmp.ge.f32.partialorder %v1334, 0.0
        %vm1501 = vcmp.ge.f32.partialorder %v1339, 0.0
        %vm1502 = vcmp.ge.f32.partialorder %v1342, 0.0
        %vm1503 = vcmp.ge.f32.partialorder %v1347, 0.0
        %vm1504 = vcmp.ge.f32.partialorder %v1350, 0.0
        %vm1505 = vcmp.ge.f32.partialorder %v1355, 0.0
        %vm1506 = vcmp.ge.f32.partialorder %v1358, 0.0
        %vm1507 = vcmp.ge.f32.partialorder %v1363, 0.0
        %vm1508 = vcmp.ge.f32.partialorder %v1366, 0.0
        %vm1509 = vcmp.ge.f32.partialorder %v1371, 0.0
        %vm1510 = vcmp.ge.f32.partialorder %v1374, 0.0
        %vm1511 = vcmp.ge.f32.partialorder %v1379, 0.0
        %vm1512 = vcmp.ge.f32.partialorder %v1382, 0.0
        %v1513 = vmul.f32 %v875, 0.2
        %v1514 = vmul.f32 %v878, 0.2
        %v1515 = vmul.f32 %v883, 0.2
        %v1516 = vmul.f32 %v886, 0.2
        %v1517 = vmul.f32 %v891, 0.2
        %v1518 = vmul.f32 %v894, 0.2
        %v1519 = vmul.f32 %v899, 0.2
        %v1520 = vmul.f32 %v902, 0.2
        %v1521 = vmul.f32 %v907, 0.2
        %v1522 = vmul.f32 %v910, 0.2
        %v1523 = vmul.f32 %v915, 0.2
        %v1524 = vmul.f32 %v918, 0.2
        %v1525 = vmul.f32 %v923, 0.2
        %v1526 = vmul.f32 %v926, 0.2
        %v1527 = vmul.f32 %v931, 0.2
        %v1528 = vmul.f32 %v934, 0.2
        %v1529 = vmul.f32 %v939, 0.2
        %v1530 = vmul.f32 %v942, 0.2
        %v1531 = vmul.f32 %v947, 0.2
        %v1532 = vmul.f32 %v950, 0.2
        %v1533 = vmul.f32 %v955, 0.2
        %v1534 = vmul.f32 %v958, 0.2
        %v1535 = vmul.f32 %v963, 0.2
        %v1536 = vmul.f32 %v966, 0.2
        %v1537 = vmul.f32 %v971, 0.2
        %v1538 = vmul.f32 %v974, 0.2
        %v1539 = vmul.f32 %v979, 0.2
        %v1540 = vmul.f32 %v982, 0.2
        %v1541 = vmul.f32 %v987, 0.2
        %v1542 = vmul.f32 %v990, 0.2
        %v1543 = vmul.f32 %v995, 0.2
        %v1544 = vmul.f32 %v998, 0.2
        %v1545 = vmul.f32 %v1003, 0.2
        %v1546 = vmul.f32 %v1006, 0.2
        %v1547 = vmul.f32 %v1011, 0.2
        %v1548 = vmul.f32 %v1014, 0.2
        %v1549 = vmul.f32 %v1019, 0.2
        %v1550 = vmul.f32 %v1022, 0.2
        %v1551 = vmul.f32 %v1027, 0.2
        %v1552 = vmul.f32 %v1030, 0.2
        %v1553 = vmul.f32 %v1035, 0.2
        %v1554 = vmul.f32 %v1038, 0.2
        %v1555 = vmul.f32 %v1043, 0.2
        %v1556 = vmul.f32 %v1046, 0.2
        %v1557 = vmul.f32 %v1051, 0.2
        %v1558 = vmul.f32 %v1054, 0.2
        %v1559 = vmul.f32 %v1059, 0.2
        %v1560 = vmul.f32 %v1062, 0.2
        %v1561 = vmul.f32 %v1067, 0.2
        %v1562 = vmul.f32 %v1070, 0.2
        %v1563 = vmul.f32 %v1075, 0.2
        %v1564 = vmul.f32 %v1078, 0.2
        %v1565 = vmul.f32 %v1083, 0.2
        %v1566 = vmul.f32 %v1086, 0.2
        %v1567 = vmul.f32 %v1091, 0.2
        %v1568 = vmul.f32 %v1094, 0.2
        %v1569 = vmul.f32 %v1099, 0.2
        %v1570 = vmul.f32 %v1102, 0.2
        %v1571 = vmul.f32 %v1107, 0.2
        %v1572 = vmul.f32 %v1110, 0.2
        %v1573 = vmul.f32 %v1115, 0.2
        %v1574 = vmul.f32 %v1118, 0.2
        %v1575 = vmul.f32 %v1123, 0.2
        %v1576 = vmul.f32 %v1126, 0.2
        %v1577 = vmul.f32 %v1131, 0.2
        %v1578 = vmul.f32 %v1134, 0.2
        %v1579 = vmul.f32 %v1139, 0.2
        %v1580 = vmul.f32 %v1142, 0.2
        %v1581 = vmul.f32 %v1147, 0.2
        %v1582 = vmul.f32 %v1150, 0.2
        %v1583 = vmul.f32 %v1155, 0.2
        %v1584 = vmul.f32 %v1158, 0.2
        %v1585 = vmul.f32 %v1163, 0.2
        %v1586 = vmul.f32 %v1166, 0.2
        %v1587 = vmul.f32 %v1171, 0.2
        %v1588 = vmul.f32 %v1174, 0.2
        %v1589 = vmul.f32 %v1179, 0.2
        %v1590 = vmul.f32 %v1182, 0.2
        %v1591 = vmul.f32 %v1187, 0.2
        %v1592 = vmul.f32 %v1190, 0.2
        %v1593 = vmul.f32 %v1195, 0.2
        %v1594 = vmul.f32 %v1198, 0.2
        %v1595 = vmul.f32 %v1203, 0.2
        %v1596 = vmul.f32 %v1206, 0.2
        %v1597 = vmul.f32 %v1211, 0.2
        %v1598 = vmul.f32 %v1214, 0.2
        %v1599 = vmul.f32 %v1219, 0.2
        %v1600 = vmul.f32 %v1222, 0.2
        %v1601 = vmul.f32 %v1227, 0.2
        %v1602 = vmul.f32 %v1230, 0.2
        %v1603 = vmul.f32 %v1235, 0.2
        %v1604 = vmul.f32 %v1238, 0.2
        %v1605 = vmul.f32 %v1243, 0.2
        %v1606 = vmul.f32 %v1246, 0.2
        %v1607 = vmul.f32 %v1251, 0.2
        %v1608 = vmul.f32 %v1254, 0.2
        %v1609 = vmul.f32 %v1259, 0.2
        %v1610 = vmul.f32 %v1262, 0.2
        %v1611 = vmul.f32 %v1267, 0.2
        %v1612 = vmul.f32 %v1270, 0.2
        %v1613 = vmul.f32 %v1275, 0.2
        %v1614 = vmul.f32 %v1278, 0.2
        %v1615 = vmul.f32 %v1283, 0.2
        %v1616 = vmul.f32 %v1286, 0.2
        %v1617 = vmul.f32 %v1291, 0.2
        %v1618 = vmul.f32 %v1294, 0.2
        %v1619 = vmul.f32 %v1299, 0.2
        %v1620 = vmul.f32 %v1302, 0.2
        %v1621 = vmul.f32 %v1307, 0.2
        %v1622 = vmul.f32 %v1310, 0.2
        %v1623 = vmul.f32 %v1315, 0.2
        %v1624 = vmul.f32 %v1318, 0.2
        %v1625 = vmul.f32 %v1323, 0.2
        %v1626 = vmul.f32 %v1326, 0.2
        %v1627 = vmul.f32 %v1331, 0.2
        %v1628 = vmul.f32 %v1334, 0.2
        %v1629 = vmul.f32 %v1339, 0.2
        %v1630 = vmul.f32 %v1342, 0.2
        %v1631 = vmul.f32 %v1347, 0.2
        %v1632 = vmul.f32 %v1350, 0.2
        %v1633 = vmul.f32 %v1355, 0.2
        %v1634 = vmul.f32 %v1358, 0.2
        %v1635 = vmul.f32 %v1363, 0.2
        %v1636 = vmul.f32 %v1366, 0.2
        %v1637 = vmul.f32 %v1371, 0.2
        %v1638 = vmul.f32 %v1374, 0.2
        %v1639 = vmul.f32 %v1379, 0.2
        %v1640 = vmul.f32 %v1382, 0.2
        %v1641 = vsel %vm1385, %v875, %v1513
        %v1642 = vsel %vm1386, %v878, %v1514
        %v1643 = vsel %vm1387, %v883, %v1515
        %v1644 = vsel %vm1388, %v886, %v1516
        %v1645 = vsel %vm1389, %v891, %v1517
        %v1646 = vsel %vm1390, %v894, %v1518
        %v1647 = vsel %vm1391, %v899, %v1519
        %v1648 = vsel %vm1392, %v902, %v1520
        %v1649 = vsel %vm1393, %v907, %v1521
        %v1650 = vsel %vm1394, %v910, %v1522
        %v1651 = vsel %vm1395, %v915, %v1523
        %v1652 = vsel %vm1396, %v918, %v1524
        %v1653 = vsel %vm1397, %v923, %v1525
        %v1654 = vsel %vm1398, %v926, %v1526
        %v1655 = vsel %vm1399, %v931, %v1527
        %v1656 = vsel %vm1400, %v934, %v1528
        %v1657 = vsel %vm1401, %v939, %v1529
        %v1658 = vsel %vm1402, %v942, %v1530
        %v1659 = vsel %vm1403, %v947, %v1531
        %v1660 = vsel %vm1404, %v950, %v1532
        %v1661 = vsel %vm1405, %v955, %v1533
        %v1662 = vsel %vm1406, %v958, %v1534
        %v1663 = vsel %vm1407, %v963, %v1535
        %v1664 = vsel %vm1408, %v966, %v1536
        %v1665 = vsel %vm1409, %v971, %v1537
        %v1666 = vsel %vm1410, %v974, %v1538
        %v1667 = vsel %vm1411, %v979, %v1539
        %v1668 = vsel %vm1412, %v982, %v1540
        %v1669 = vsel %vm1413, %v987, %v1541
        %v1670 = vsel %vm1414, %v990, %v1542
        %v1671 = vsel %vm1415, %v995, %v1543
        %v1672 = vsel %vm1416, %v998, %v1544
        %v1673 = vsel %vm1417, %v1003, %v1545
        %v1674 = vsel %vm1418, %v1006, %v1546
        %v1675 = vsel %vm1419, %v1011, %v1547
        %v1676 = vsel %vm1420, %v1014, %v1548
        %v1677 = vsel %vm1421, %v1019, %v1549
        %v1678 = vsel %vm1422, %v1022, %v1550
        %v1679 = vsel %vm1423, %v1027, %v1551
        %v1680 = vsel %vm1424, %v1030, %v1552
        %v1681 = vsel %vm1425, %v1035, %v1553
        %v1682 = vsel %vm1426, %v1038, %v1554
        %v1683 = vsel %vm1427, %v1043, %v1555
        %v1684 = vsel %vm1428, %v1046, %v1556
        %v1685 = vsel %vm1429, %v1051, %v1557
        %v1686 = vsel %vm1430, %v1054, %v1558
        %v1687 = vsel %vm1431, %v1059, %v1559
        %v1688 = vsel %vm1432, %v1062, %v1560
        %v1689 = vsel %vm1433, %v1067, %v1561
        %v1690 = vsel %vm1434, %v1070, %v1562
        %v1691 = vsel %vm1435, %v1075, %v1563
        %v1692 = vsel %vm1436, %v1078, %v1564
        %v1693 = vsel %vm1437, %v1083, %v1565
        %v1694 = vsel %vm1438, %v1086, %v1566
        %v1695 = vsel %vm1439, %v1091, %v1567
        %v1696 = vsel %vm1440, %v1094, %v1568
        %v1697 = vsel %vm1441, %v1099, %v1569
        %v1698 = vsel %vm1442, %v1102, %v1570
        %v1699 = vsel %vm1443, %v1107, %v1571
        %v1700 = vsel %vm1444, %v1110, %v1572
        %v1701 = vsel %vm1445, %v1115, %v1573
        %v1702 = vsel %vm1446, %v1118, %v1574
        %v1703 = vsel %vm1447, %v1123, %v1575
        %v1704 = vsel %vm1448, %v1126, %v1576
        %v1705 = vsel %vm1449, %v1131, %v1577
        %v1706 = vsel %vm1450, %v1134, %v1578
        %v1707 = vsel %vm1451, %v1139, %v1579
        %v1708 = vsel %vm1452, %v1142, %v1580
        %v1709 = vsel %vm1453, %v1147, %v1581
        %v1710 = vsel %vm1454, %v1150, %v1582
        %v1711 = vsel %vm1455, %v1155, %v1583
        %v1712 = vsel %vm1456, %v1158, %v1584
        %v1713 = vsel %vm1457, %v1163, %v1585
        %v1714 = vsel %vm1458, %v1166, %v1586
        %v1715 = vsel %vm1459, %v1171, %v1587
        %v1716 = vsel %vm1460, %v1174, %v1588
        %v1717 = vsel %vm1461, %v1179, %v1589
        %v1718 = vsel %vm1462, %v1182, %v1590
        %v1719 = vsel %vm1463, %v1187, %v1591
        %v1720 = vsel %vm1464, %v1190, %v1592
        %v1721 = vsel %vm1465, %v1195, %v1593
        %v1722 = vsel %vm1466, %v1198, %v1594
        %v1723 = vsel %vm1467, %v1203, %v1595
        %v1724 = vsel %vm1468, %v1206, %v1596
        %v1725 = vsel %vm1469, %v1211, %v1597
        %v1726 = vsel %vm1470, %v1214, %v1598
        %v1727 = vsel %vm1471, %v1219, %v1599
        %v1728 = vsel %vm1472, %v1222, %v1600
        %v1729 = vsel %vm1473, %v1227, %v1601
        %v1730 = vsel %vm1474, %v1230, %v1602
        %v1731 = vsel %vm1475, %v1235, %v1603
        %v1732 = vsel %vm1476, %v1238, %v1604
        %v1733 = vsel %vm1477, %v1243, %v1605
        %v1734 = vsel %vm1478, %v1246, %v1606
        %v1735 = vsel %vm1479, %v1251, %v1607
        %v1736 = vsel %vm1480, %v1254, %v1608
        %v1737 = vsel %vm1481, %v1259, %v1609
        %v1738 = vsel %vm1482, %v1262, %v1610
        %v1739 = vsel %vm1483, %v1267, %v1611
        %v1740 = vsel %vm1484, %v1270, %v1612
        %v1741 = vsel %vm1485, %v1275, %v1613
        %v1742 = vsel %vm1486, %v1278, %v1614
        %v1743 = vsel %vm1487, %v1283, %v1615
        %v1744 = vsel %vm1488, %v1286, %v1616
        %v1745 = vsel %vm1489, %v1291, %v1617
        %v1746 = vsel %vm1490, %v1294, %v1618
        %v1747 = vsel %vm1491, %v1299, %v1619
        %v1748 = vsel %vm1492, %v1302, %v1620
        %v1749 = vsel %vm1493, %v1307, %v1621
        %v1750 = vsel %vm1494, %v1310, %v1622
        %v1751 = vsel %vm1495, %v1315, %v1623
        %v1752 = vsel %vm1496, %v1318, %v1624
        %v1753 = vsel %vm1497, %v1323, %v1625
        %v1754 = vsel %vm1498, %v1326, %v1626
        %v1755 = vsel %vm1499, %v1331, %v1627
        %v1756 = vsel %vm1500, %v1334, %v1628
        %v1757 = vsel %vm1501, %v1339, %v1629
        %v1758 = vsel %vm1502, %v1342, %v1630
        %v1759 = vsel %vm1503, %v1347, %v1631
        %v1760 = vsel %vm1504, %v1350, %v1632
        %v1761 = vsel %vm1505, %v1355, %v1633
        %v1762 = vsel %vm1506, %v1358, %v1634
        %v1763 = vsel %vm1507, %v1363, %v1635
        %v1764 = vsel %vm1508, %v1366, %v1636
        %v1765 = vsel %vm1509, %v1371, %v1637
        %v1766 = vsel %vm1510, %v1374, %v1638
        %v1767 = vsel %vm1511, %v1379, %v1639
        %v1768 = vsel %vm1512, %v1382, %v1640
        %v1769 = vpack.c.bf16 %v1642, %v1641
        %v1770 = vpack.c.bf16 %v1644, %v1643
        %v1771 = vpack.c.bf16 %v1646, %v1645
        %v1772 = vpack.c.bf16 %v1648, %v1647
        %v1773 = vpack.c.bf16 %v1650, %v1649
        %v1774 = vpack.c.bf16 %v1652, %v1651
        %v1775 = vpack.c.bf16 %v1654, %v1653
        %v1776 = vpack.c.bf16 %v1656, %v1655
        %v1777 = vpack.c.bf16 %v1658, %v1657
        %v1778 = vpack.c.bf16 %v1660, %v1659
        %v1779 = vpack.c.bf16 %v1662, %v1661
        %v1780 = vpack.c.bf16 %v1664, %v1663
        %v1781 = vpack.c.bf16 %v1666, %v1665
        %v1782 = vpack.c.bf16 %v1668, %v1667
        %v1783 = vpack.c.bf16 %v1670, %v1669
        %v1784 = vpack.c.bf16 %v1672, %v1671
        %v1785 = vpack.c.bf16 %v1674, %v1673
        %v1786 = vpack.c.bf16 %v1676, %v1675
        %v1787 = vpack.c.bf16 %v1678, %v1677
        %v1788 = vpack.c.bf16 %v1680, %v1679
        %v1789 = vpack.c.bf16 %v1682, %v1681
        %v1790 = vpack.c.bf16 %v1684, %v1683
        %v1791 = vpack.c.bf16 %v1686, %v1685
        %v1792 = vpack.c.bf16 %v1688, %v1687
        %v1793 = vpack.c.bf16 %v1690, %v1689
        %v1794 = vpack.c.bf16 %v1692, %v1691
        %v1795 = vpack.c.bf16 %v1694, %v1693
        %v1796 = vpack.c.bf16 %v1696, %v1695
        %v1797 = vpack.c.bf16 %v1698, %v1697
        %v1798 = vpack.c.bf16 %v1700, %v1699
        %v1799 = vpack.c.bf16 %v1702, %v1701
        %v1800 = vpack.c.bf16 %v1704, %v1703
        %v1801 = vpack.c.bf16 %v1706, %v1705
        %v1802 = vpack.c.bf16 %v1708, %v1707
        %v1803 = vpack.c.bf16 %v1710, %v1709
        %v1804 = vpack.c.bf16 %v1712, %v1711
        %v1805 = vpack.c.bf16 %v1714, %v1713
        %v1806 = vpack.c.bf16 %v1716, %v1715
        %v1807 = vpack.c.bf16 %v1718, %v1717
        %v1808 = vpack.c.bf16 %v1720, %v1719
        %v1809 = vpack.c.bf16 %v1722, %v1721
        %v1810 = vpack.c.bf16 %v1724, %v1723
        %v1811 = vpack.c.bf16 %v1726, %v1725
        %v1812 = vpack.c.bf16 %v1728, %v1727
        %v1813 = vpack.c.bf16 %v1730, %v1729
        %v1814 = vpack.c.bf16 %v1732, %v1731
        %v1815 = vpack.c.bf16 %v1734, %v1733
        %v1816 = vpack.c.bf16 %v1736, %v1735
        %v1817 = vpack.c.bf16 %v1738, %v1737
        %v1818 = vpack.c.bf16 %v1740, %v1739
        %v1819 = vpack.c.bf16 %v1742, %v1741
        %v1820 = vpack.c.bf16 %v1744, %v1743
        %v1821 = vpack.c.bf16 %v1746, %v1745
        %v1822 = vpack.c.bf16 %v1748, %v1747
        %v1823 = vpack.c.bf16 %v1750, %v1749
        %v1824 = vpack.c.bf16 %v1752, %v1751
        %v1825 = vpack.c.bf16 %v1754, %v1753
        %v1826 = vpack.c.bf16 %v1756, %v1755
        %v1827 = vpack.c.bf16 %v1758, %v1757
        %v1828 = vpack.c.bf16 %v1760, %v1759
        %v1829 = vpack.c.bf16 %v1762, %v1761
        %v1830 = vpack.c.bf16 %v1764, %v1763
        %v1831 = vpack.c.bf16 %v1766, %v1765
        %v1832 = vpack.c.bf16 %v1768, %v1767
        %v1897 = vunpack.c.l.b16 %v1769
        %v1898 = vunpack.c.h.b16 %v1769
        %v1899 = vunpack.c.l.b16 %v1770
        %v1900 = vunpack.c.h.b16 %v1770
        %v1901 = vunpack.c.l.b16 %v1771
        %v1902 = vunpack.c.h.b16 %v1771
        %v1903 = vunpack.c.l.b16 %v1772
        %v1904 = vunpack.c.h.b16 %v1772
        %v1905 = vunpack.c.l.b16 %v1773
        %v1906 = vunpack.c.h.b16 %v1773
        %v1907 = vunpack.c.l.b16 %v1774
        %v1908 = vunpack.c.h.b16 %v1774
        %v1909 = vunpack.c.l.b16 %v1775
        %v1910 = vunpack.c.h.b16 %v1775
        %v1911 = vunpack.c.l.b16 %v1776
        %v1912 = vunpack.c.h.b16 %v1776
        %v1913 = vunpack.c.l.b16 %v1777
        %v1914 = vunpack.c.h.b16 %v1777
        %v1915 = vunpack.c.l.b16 %v1778
        %v1916 = vunpack.c.h.b16 %v1778
        %v1917 = vunpack.c.l.b16 %v1779
        %v1918 = vunpack.c.h.b16 %v1779
        %v1919 = vunpack.c.l.b16 %v1780
        %v1920 = vunpack.c.h.b16 %v1780
        %v1921 = vunpack.c.l.b16 %v1781
        %v1922 = vunpack.c.h.b16 %v1781
        %v1923 = vunpack.c.l.b16 %v1782
        %v1924 = vunpack.c.h.b16 %v1782
        %v1925 = vunpack.c.l.b16 %v1783
        %v1926 = vunpack.c.h.b16 %v1783
        %v1927 = vunpack.c.l.b16 %v1784
        %v1928 = vunpack.c.h.b16 %v1784
        %v1929 = vunpack.c.l.b16 %v1785
        %v1930 = vunpack.c.h.b16 %v1785
        %v1931 = vunpack.c.l.b16 %v1786
        %v1932 = vunpack.c.h.b16 %v1786
        %v1933 = vunpack.c.l.b16 %v1787
        %v1934 = vunpack.c.h.b16 %v1787
        %v1935 = vunpack.c.l.b16 %v1788
        %v1936 = vunpack.c.h.b16 %v1788
        %v1937 = vunpack.c.l.b16 %v1789
        %v1938 = vunpack.c.h.b16 %v1789
        %v1939 = vunpack.c.l.b16 %v1790
        %v1940 = vunpack.c.h.b16 %v1790
        %v1941 = vunpack.c.l.b16 %v1791
        %v1942 = vunpack.c.h.b16 %v1791
        %v1943 = vunpack.c.l.b16 %v1792
        %v1944 = vunpack.c.h.b16 %v1792
        %v1945 = vunpack.c.l.b16 %v1793
        %v1946 = vunpack.c.h.b16 %v1793
        %v1947 = vunpack.c.l.b16 %v1794
        %v1948 = vunpack.c.h.b16 %v1794
        %v1949 = vunpack.c.l.b16 %v1795
        %v1950 = vunpack.c.h.b16 %v1795
        %v1951 = vunpack.c.l.b16 %v1796
        %v1952 = vunpack.c.h.b16 %v1796
        %v1953 = vunpack.c.l.b16 %v1797
        %v1954 = vunpack.c.h.b16 %v1797
        %v1955 = vunpack.c.l.b16 %v1798
        %v1956 = vunpack.c.h.b16 %v1798
        %v1957 = vunpack.c.l.b16 %v1799
        %v1958 = vunpack.c.h.b16 %v1799
        %v1959 = vunpack.c.l.b16 %v1800
        %v1960 = vunpack.c.h.b16 %v1800
        %v1961 = vunpack.c.l.b16 %v1801
        %v1962 = vunpack.c.h.b16 %v1801
        %v1963 = vunpack.c.l.b16 %v1802
        %v1964 = vunpack.c.h.b16 %v1802
        %v1965 = vunpack.c.l.b16 %v1803
        %v1966 = vunpack.c.h.b16 %v1803
        %v1967 = vunpack.c.l.b16 %v1804
        %v1968 = vunpack.c.h.b16 %v1804
        %v1969 = vunpack.c.l.b16 %v1805
        %v1970 = vunpack.c.h.b16 %v1805
        %v1971 = vunpack.c.l.b16 %v1806
        %v1972 = vunpack.c.h.b16 %v1806
        %v1973 = vunpack.c.l.b16 %v1807
        %v1974 = vunpack.c.h.b16 %v1807
        %v1975 = vunpack.c.l.b16 %v1808
        %v1976 = vunpack.c.h.b16 %v1808
        %v1977 = vunpack.c.l.b16 %v1809
        %v1978 = vunpack.c.h.b16 %v1809
        %v1979 = vunpack.c.l.b16 %v1810
        %v1980 = vunpack.c.h.b16 %v1810
        %v1981 = vunpack.c.l.b16 %v1811
        %v1982 = vunpack.c.h.b16 %v1811
        %v1983 = vunpack.c.l.b16 %v1812
        %v1984 = vunpack.c.h.b16 %v1812
        %v1985 = vunpack.c.l.b16 %v1813
        %v1986 = vunpack.c.h.b16 %v1813
        %v1987 = vunpack.c.l.b16 %v1814
        %v1988 = vunpack.c.h.b16 %v1814
        %v1989 = vunpack.c.l.b16 %v1815
        %v1990 = vunpack.c.h.b16 %v1815
        %v1991 = vunpack.c.l.b16 %v1816
        %v1992 = vunpack.c.h.b16 %v1816
        %v1993 = vunpack.c.l.b16 %v1817
        %v1994 = vunpack.c.h.b16 %v1817
        %v1995 = vunpack.c.l.b16 %v1818
        %v1996 = vunpack.c.h.b16 %v1818
        %v1997 = vunpack.c.l.b16 %v1819
        %v1998 = vunpack.c.h.b16 %v1819
        %v1999 = vunpack.c.l.b16 %v1820
        %v2000 = vunpack.c.h.b16 %v1820
        %v2001 = vunpack.c.l.b16 %v1821
        %v2002 = vunpack.c.h.b16 %v1821
        %v2003 = vunpack.c.l.b16 %v1822
        %v2004 = vunpack.c.h.b16 %v1822
        %v2005 = vunpack.c.l.b16 %v1823
        %v2006 = vunpack.c.h.b16 %v1823
        %v2007 = vunpack.c.l.b16 %v1824
        %v2008 = vunpack.c.h.b16 %v1824
        %v2009 = vunpack.c.l.b16 %v1825
        %v2010 = vunpack.c.h.b16 %v1825
        %v2011 = vunpack.c.l.b16 %v1826
        %v2012 = vunpack.c.h.b16 %v1826
        %v2013 = vunpack.c.l.b16 %v1827
        %v2014 = vunpack.c.h.b16 %v1827
        %v2015 = vunpack.c.l.b16 %v1828
        %v2016 = vunpack.c.h.b16 %v1828
        %v2017 = vunpack.c.l.b16 %v1829
        %v2018 = vunpack.c.h.b16 %v1829
        %v2019 = vunpack.c.l.b16 %v1830
        %v2020 = vunpack.c.h.b16 %v1830
        %v2021 = vunpack.c.l.b16 %v1831
        %v2022 = vunpack.c.h.b16 %v1831
        %v2023 = vunpack.c.l.b16 %v1832
        %v2024 = vunpack.c.h.b16 %v1832
        %v2025 = vpack.c.b16 %v1897, %v1897
        %v2026 = vpack.c.b16 %v1898, %v1898
        %v2027 = vpack.c.b16 %v1899, %v1899
        %v2028 = vpack.c.b16 %v1900, %v1900
        %v2029 = vpack.c.b16 %v1901, %v1901
        %v2030 = vpack.c.b16 %v1902, %v1902
        %v2031 = vpack.c.b16 %v1903, %v1903
        %v2032 = vpack.c.b16 %v1904, %v1904
        %v2033 = vpack.c.b16 %v1905, %v1905
        %v2034 = vpack.c.b16 %v1906, %v1906
        %v2035 = vpack.c.b16 %v1907, %v1907
        %v2036 = vpack.c.b16 %v1908, %v1908
        %v2037 = vpack.c.b16 %v1909, %v1909
        %v2038 = vpack.c.b16 %v1910, %v1910
        %v2039 = vpack.c.b16 %v1911, %v1911
        %v2040 = vpack.c.b16 %v1912, %v1912
        %v2041 = vpack.c.b16 %v1913, %v1913
        %v2042 = vpack.c.b16 %v1914, %v1914
        %v2043 = vpack.c.b16 %v1915, %v1915
        %v2044 = vpack.c.b16 %v1916, %v1916
        %v2045 = vpack.c.b16 %v1917, %v1917
        %v2046 = vpack.c.b16 %v1918, %v1918
        %v2047 = vpack.c.b16 %v1919, %v1919
        %v2048 = vpack.c.b16 %v1920, %v1920
        %v2049 = vpack.c.b16 %v1921, %v1921
        %v2050 = vpack.c.b16 %v1922, %v1922
        %v2051 = vpack.c.b16 %v1923, %v1923
        %v2052 = vpack.c.b16 %v1924, %v1924
        %v2053 = vpack.c.b16 %v1925, %v1925
        %v2054 = vpack.c.b16 %v1926, %v1926
        %v2055 = vpack.c.b16 %v1927, %v1927
        %v2056 = vpack.c.b16 %v1928, %v1928
        %v2057 = vpack.c.b16 %v1929, %v1929
        %v2058 = vpack.c.b16 %v1930, %v1930
        %v2059 = vpack.c.b16 %v1931, %v1931
        %v2060 = vpack.c.b16 %v1932, %v1932
        %v2061 = vpack.c.b16 %v1933, %v1933
        %v2062 = vpack.c.b16 %v1934, %v1934
        %v2063 = vpack.c.b16 %v1935, %v1935
        %v2064 = vpack.c.b16 %v1936, %v1936
        %v2065 = vpack.c.b16 %v1937, %v1937
        %v2066 = vpack.c.b16 %v1938, %v1938
        %v2067 = vpack.c.b16 %v1939, %v1939
        %v2068 = vpack.c.b16 %v1940, %v1940
        %v2069 = vpack.c.b16 %v1941, %v1941
        %v2070 = vpack.c.b16 %v1942, %v1942
        %v2071 = vpack.c.b16 %v1943, %v1943
        %v2072 = vpack.c.b16 %v1944, %v1944
        %v2073 = vpack.c.b16 %v1945, %v1945
        %v2074 = vpack.c.b16 %v1946, %v1946
        %v2075 = vpack.c.b16 %v1947, %v1947
        %v2076 = vpack.c.b16 %v1948, %v1948
        %v2077 = vpack.c.b16 %v1949, %v1949
        %v2078 = vpack.c.b16 %v1950, %v1950
        %v2079 = vpack.c.b16 %v1951, %v1951
        %v2080 = vpack.c.b16 %v1952, %v1952
        %v2081 = vpack.c.b16 %v1953, %v1953
        %v2082 = vpack.c.b16 %v1954, %v1954
        %v2083 = vpack.c.b16 %v1955, %v1955
        %v2084 = vpack.c.b16 %v1956, %v1956
        %v2085 = vpack.c.b16 %v1957, %v1957
        %v2086 = vpack.c.b16 %v1958, %v1958
        %v2087 = vpack.c.b16 %v1959, %v1959
        %v2088 = vpack.c.b16 %v1960, %v1960
        %v2089 = vpack.c.b16 %v1961, %v1961
        %v2090 = vpack.c.b16 %v1962, %v1962
        %v2091 = vpack.c.b16 %v1963, %v1963
        %v2092 = vpack.c.b16 %v1964, %v1964
        %v2093 = vpack.c.b16 %v1965, %v1965
        %v2094 = vpack.c.b16 %v1966, %v1966
        %v2095 = vpack.c.b16 %v1967, %v1967
        %v2096 = vpack.c.b16 %v1968, %v1968
        %v2097 = vpack.c.b16 %v1969, %v1969
        %v2098 = vpack.c.b16 %v1970, %v1970
        %v2099 = vpack.c.b16 %v1971, %v1971
        %v2100 = vpack.c.b16 %v1972, %v1972
        %v2101 = vpack.c.b16 %v1973, %v1973
        %v2102 = vpack.c.b16 %v1974, %v1974
        %v2103 = vpack.c.b16 %v1975, %v1975
        %v2104 = vpack.c.b16 %v1976, %v1976
        %v2105 = vpack.c.b16 %v1977, %v1977
        %v2106 = vpack.c.b16 %v1978, %v1978
        %v2107 = vpack.c.b16 %v1979, %v1979
        %v2108 = vpack.c.b16 %v1980, %v1980
        %v2109 = vpack.c.b16 %v1981, %v1981
        %v2110 = vpack.c.b16 %v1982, %v1982
        %v2111 = vpack.c.b16 %v1983, %v1983
        %v2112 = vpack.c.b16 %v1984, %v1984
        %v2113 = vpack.c.b16 %v1985, %v1985
        %v2114 = vpack.c.b16 %v1986, %v1986
        %v2115 = vpack.c.b16 %v1987, %v1987
        %v2116 = vpack.c.b16 %v1988, %v1988
        %v2117 = vpack.c.b16 %v1989, %v1989
        %v2118 = vpack.c.b16 %v1990, %v1990
        %v2119 = vpack.c.b16 %v1991, %v1991
        %v2120 = vpack.c.b16 %v1992, %v1992
        %v2121 = vpack.c.b16 %v1993, %v1993
        %v2122 = vpack.c.b16 %v1994, %v1994
        %v2123 = vpack.c.b16 %v1995, %v1995
        %v2124 = vpack.c.b16 %v1996, %v1996
        %v2125 = vpack.c.b16 %v1997, %v1997
        %v2126 = vpack.c.b16 %v1998, %v1998
        %v2127 = vpack.c.b16 %v1999, %v1999
        %v2128 = vpack.c.b16 %v2000, %v2000
        %v2129 = vpack.c.b16 %v2001, %v2001
        %v2130 = vpack.c.b16 %v2002, %v2002
        %v2131 = vpack.c.b16 %v2003, %v2003
        %v2132 = vpack.c.b16 %v2004, %v2004
        %v2133 = vpack.c.b16 %v2005, %v2005
        %v2134 = vpack.c.b16 %v2006, %v2006
        %v2135 = vpack.c.b16 %v2007, %v2007
        %v2136 = vpack.c.b16 %v2008, %v2008
        %v2137 = vpack.c.b16 %v2009, %v2009
        %v2138 = vpack.c.b16 %v2010, %v2010
        %v2139 = vpack.c.b16 %v2011, %v2011
        %v2140 = vpack.c.b16 %v2012, %v2012
        %v2141 = vpack.c.b16 %v2013, %v2013
        %v2142 = vpack.c.b16 %v2014, %v2014
        %v2143 = vpack.c.b16 %v2015, %v2015
        %v2144 = vpack.c.b16 %v2016, %v2016
        %v2145 = vpack.c.b16 %v2017, %v2017
        %v2146 = vpack.c.b16 %v2018, %v2018
        %v2147 = vpack.c.b16 %v2019, %v2019
        %v2148 = vpack.c.b16 %v2020, %v2020
        %v2149 = vpack.c.b16 %v2021, %v2021
        %v2150 = vpack.c.b16 %v2022, %v2022
        %v2151 = vpack.c.b16 %v2023, %v2023
        %v2152 = vpack.c.b16 %v2024, %v2024
        %vm2281 = vcmask 27648
        %2282 = vst.msk [vmem:[%s164] sm:$0xf] %vm2281, %v2025
        %2283 = vst.msk [vmem:[%s164 + $0x4] sm:$0xf] %vm2281, %v2026
        %2284 = vst.msk [vmem:[%s164 + $0x8] sm:$0xf] %vm2281, %v2027
        %2285 = vst.msk [vmem:[%s164 + $0xc] sm:$0xf] %vm2281, %v2028
        %2286 = vst.msk [vmem:[%s164 + $0x10] sm:$0xf] %vm2281, %v2029
        %2287 = vst.msk [vmem:[%s164 + $0x14] sm:$0xf] %vm2281, %v2030
        %2288 = vst.msk [vmem:[%s164 + $0x18] sm:$0xf] %vm2281, %v2031
        %2289 = vst.msk [vmem:[%s164 + $0x1c] sm:$0xf] %vm2281, %v2032
        %2290 = vst.msk [vmem:[%s164 + $0x20] sm:$0xf] %vm2281, %v2033
        %2291 = vst.msk [vmem:[%s164 + $0x24] sm:$0xf] %vm2281, %v2034
        %2292 = vst.msk [vmem:[%s164 + $0x28] sm:$0xf] %vm2281, %v2035
        %2293 = vst.msk [vmem:[%s164 + $0x2c] sm:$0xf] %vm2281, %v2036
        %2294 = vst.msk [vmem:[%s164 + $0x30] sm:$0xf] %vm2281, %v2037
        %2295 = vst.msk [vmem:[%s164 + $0x34] sm:$0xf] %vm2281, %v2038
        %2296 = vst.msk [vmem:[%s164 + $0x38] sm:$0xf] %vm2281, %v2039
        %2297 = vst.msk [vmem:[%s164 + $0x3c] sm:$0xf] %vm2281, %v2040
        %2298 = vst.msk [vmem:[%s164 + $0x40] sm:$0xf] %vm2281, %v2041
        %2299 = vst.msk [vmem:[%s164 + $0x44] sm:$0xf] %vm2281, %v2042
        %2300 = vst.msk [vmem:[%s164 + $0x48] sm:$0xf] %vm2281, %v2043
        %2301 = vst.msk [vmem:[%s164 + $0x4c] sm:$0xf] %vm2281, %v2044
        %2302 = vst.msk [vmem:[%s164 + $0x50] sm:$0xf] %vm2281, %v2045
        %2303 = vst.msk [vmem:[%s164 + $0x54] sm:$0xf] %vm2281, %v2046
        %2304 = vst.msk [vmem:[%s164 + $0x58] sm:$0xf] %vm2281, %v2047
        %2305 = vst.msk [vmem:[%s164 + $0x5c] sm:$0xf] %vm2281, %v2048
        %2306 = vst.msk [vmem:[%s164 + $0x60] sm:$0xf] %vm2281, %v2049
        %2307 = vst.msk [vmem:[%s164 + $0x64] sm:$0xf] %vm2281, %v2050
        %2308 = vst.msk [vmem:[%s164 + $0x68] sm:$0xf] %vm2281, %v2051
        %2309 = vst.msk [vmem:[%s164 + $0x6c] sm:$0xf] %vm2281, %v2052
        %2310 = vst.msk [vmem:[%s164 + $0x70] sm:$0xf] %vm2281, %v2053
        %2311 = vst.msk [vmem:[%s164 + $0x74] sm:$0xf] %vm2281, %v2054
        %2312 = vst.msk [vmem:[%s164 + $0x78] sm:$0xf] %vm2281, %v2055
        %2313 = vst.msk [vmem:[%s164 + $0x7c] sm:$0xf] %vm2281, %v2056
        %2314 = vst.msk [vmem:[%s164 + $0x80] sm:$0xf] %vm2281, %v2057
        %2315 = vst.msk [vmem:[%s164 + $0x84] sm:$0xf] %vm2281, %v2058
        %2316 = vst.msk [vmem:[%s164 + $0x88] sm:$0xf] %vm2281, %v2059
        %2317 = vst.msk [vmem:[%s164 + $0x8c] sm:$0xf] %vm2281, %v2060
        %2318 = vst.msk [vmem:[%s164 + $0x90] sm:$0xf] %vm2281, %v2061
        %2319 = vst.msk [vmem:[%s164 + $0x94] sm:$0xf] %vm2281, %v2062
        %2320 = vst.msk [vmem:[%s164 + $0x98] sm:$0xf] %vm2281, %v2063
        %2321 = vst.msk [vmem:[%s164 + $0x9c] sm:$0xf] %vm2281, %v2064
        %2322 = vst.msk [vmem:[%s164 + $0xa0] sm:$0xf] %vm2281, %v2065
        %2323 = vst.msk [vmem:[%s164 + $0xa4] sm:$0xf] %vm2281, %v2066
        %2324 = vst.msk [vmem:[%s164 + $0xa8] sm:$0xf] %vm2281, %v2067
        %2325 = vst.msk [vmem:[%s164 + $0xac] sm:$0xf] %vm2281, %v2068
        %2326 = vst.msk [vmem:[%s164 + $0xb0] sm:$0xf] %vm2281, %v2069
        %2327 = vst.msk [vmem:[%s164 + $0xb4] sm:$0xf] %vm2281, %v2070
        %2328 = vst.msk [vmem:[%s164 + $0xb8] sm:$0xf] %vm2281, %v2071
        %2329 = vst.msk [vmem:[%s164 + $0xbc] sm:$0xf] %vm2281, %v2072
        %2330 = vst.msk [vmem:[%s164 + $0xc0] sm:$0xf] %vm2281, %v2073
        %2331 = vst.msk [vmem:[%s164 + $0xc4] sm:$0xf] %vm2281, %v2074
        %2332 = vst.msk [vmem:[%s164 + $0xc8] sm:$0xf] %vm2281, %v2075
        %2333 = vst.msk [vmem:[%s164 + $0xcc] sm:$0xf] %vm2281, %v2076
        %2334 = vst.msk [vmem:[%s164 + $0xd0] sm:$0xf] %vm2281, %v2077
        %2335 = vst.msk [vmem:[%s164 + $0xd4] sm:$0xf] %vm2281, %v2078
        %2336 = vst.msk [vmem:[%s164 + $0xd8] sm:$0xf] %vm2281, %v2079
        %2337 = vst.msk [vmem:[%s164 + $0xdc] sm:$0xf] %vm2281, %v2080
        %2338 = vst.msk [vmem:[%s164 + $0xe0] sm:$0xf] %vm2281, %v2081
        %2339 = vst.msk [vmem:[%s164 + $0xe4] sm:$0xf] %vm2281, %v2082
        %2340 = vst.msk [vmem:[%s164 + $0xe8] sm:$0xf] %vm2281, %v2083
        %2341 = vst.msk [vmem:[%s164 + $0xec] sm:$0xf] %vm2281, %v2084
        %2342 = vst.msk [vmem:[%s164 + $0xf0] sm:$0xf] %vm2281, %v2085
        %2343 = vst.msk [vmem:[%s164 + $0xf4] sm:$0xf] %vm2281, %v2086
        %2344 = vst.msk [vmem:[%s164 + $0xf8] sm:$0xf] %vm2281, %v2087
        %2345 = vst.msk [vmem:[%s164 + $0xfc] sm:$0xf] %vm2281, %v2088
        %2346 = vst.msk [vmem:[%s164 + $0x100] sm:$0xf] %vm2281, %v2089
        %2347 = vst.msk [vmem:[%s164 + $0x104] sm:$0xf] %vm2281, %v2090
        %2348 = vst.msk [vmem:[%s164 + $0x108] sm:$0xf] %vm2281, %v2091
        %2349 = vst.msk [vmem:[%s164 + $0x10c] sm:$0xf] %vm2281, %v2092
        %2350 = vst.msk [vmem:[%s164 + $0x110] sm:$0xf] %vm2281, %v2093
        %2351 = vst.msk [vmem:[%s164 + $0x114] sm:$0xf] %vm2281, %v2094
        %2352 = vst.msk [vmem:[%s164 + $0x118] sm:$0xf] %vm2281, %v2095
        %2353 = vst.msk [vmem:[%s164 + $0x11c] sm:$0xf] %vm2281, %v2096
        %2354 = vst.msk [vmem:[%s164 + $0x120] sm:$0xf] %vm2281, %v2097
        %2355 = vst.msk [vmem:[%s164 + $0x124] sm:$0xf] %vm2281, %v2098
        %2356 = vst.msk [vmem:[%s164 + $0x128] sm:$0xf] %vm2281, %v2099
        %2357 = vst.msk [vmem:[%s164 + $0x12c] sm:$0xf] %vm2281, %v2100
        %2358 = vst.msk [vmem:[%s164 + $0x130] sm:$0xf] %vm2281, %v2101
        %2359 = vst.msk [vmem:[%s164 + $0x134] sm:$0xf] %vm2281, %v2102
        %2360 = vst.msk [vmem:[%s164 + $0x138] sm:$0xf] %vm2281, %v2103
        %2361 = vst.msk [vmem:[%s164 + $0x13c] sm:$0xf] %vm2281, %v2104
        %2362 = vst.msk [vmem:[%s164 + $0x140] sm:$0xf] %vm2281, %v2105
        %2363 = vst.msk [vmem:[%s164 + $0x144] sm:$0xf] %vm2281, %v2106
        %2364 = vst.msk [vmem:[%s164 + $0x148] sm:$0xf] %vm2281, %v2107
        %2365 = vst.msk [vmem:[%s164 + $0x14c] sm:$0xf] %vm2281, %v2108
        %2366 = vst.msk [vmem:[%s164 + $0x150] sm:$0xf] %vm2281, %v2109
        %2367 = vst.msk [vmem:[%s164 + $0x154] sm:$0xf] %vm2281, %v2110
        %2368 = vst.msk [vmem:[%s164 + $0x158] sm:$0xf] %vm2281, %v2111
        %2369 = vst.msk [vmem:[%s164 + $0x15c] sm:$0xf] %vm2281, %v2112
        %2370 = vst.msk [vmem:[%s164 + $0x160] sm:$0xf] %vm2281, %v2113
        %2371 = vst.msk [vmem:[%s164 + $0x164] sm:$0xf] %vm2281, %v2114
        %2372 = vst.msk [vmem:[%s164 + $0x168] sm:$0xf] %vm2281, %v2115
        %2373 = vst.msk [vmem:[%s164 + $0x16c] sm:$0xf] %vm2281, %v2116
        %2374 = vst.msk [vmem:[%s164 + $0x170] sm:$0xf] %vm2281, %v2117
        %2375 = vst.msk [vmem:[%s164 + $0x174] sm:$0xf] %vm2281, %v2118
        %2376 = vst.msk [vmem:[%s164 + $0x178] sm:$0xf] %vm2281, %v2119
        %2377 = vst.msk [vmem:[%s164 + $0x17c] sm:$0xf] %vm2281, %v2120
        %2378 = vst.msk [vmem:[%s164 + $0x180] sm:$0xf] %vm2281, %v2121
        %2379 = vst.msk [vmem:[%s164 + $0x184] sm:$0xf] %vm2281, %v2122
        %2380 = vst.msk [vmem:[%s164 + $0x188] sm:$0xf] %vm2281, %v2123
        %2381 = vst.msk [vmem:[%s164 + $0x18c] sm:$0xf] %vm2281, %v2124
        %2382 = vst.msk [vmem:[%s164 + $0x190] sm:$0xf] %vm2281, %v2125
        %2383 = vst.msk [vmem:[%s164 + $0x194] sm:$0xf] %vm2281, %v2126
        %2384 = vst.msk [vmem:[%s164 + $0x198] sm:$0xf] %vm2281, %v2127
        %2385 = vst.msk [vmem:[%s164 + $0x19c] sm:$0xf] %vm2281, %v2128
        %2386 = vst.msk [vmem:[%s164 + $0x1a0] sm:$0xf] %vm2281, %v2129
        %2387 = vst.msk [vmem:[%s164 + $0x1a4] sm:$0xf] %vm2281, %v2130
        %2388 = vst.msk [vmem:[%s164 + $0x1a8] sm:$0xf] %vm2281, %v2131
        %2389 = vst.msk [vmem:[%s164 + $0x1ac] sm:$0xf] %vm2281, %v2132
        %2390 = vst.msk [vmem:[%s164 + $0x1b0] sm:$0xf] %vm2281, %v2133
        %2391 = vst.msk [vmem:[%s164 + $0x1b4] sm:$0xf] %vm2281, %v2134
        %2392 = vst.msk [vmem:[%s164 + $0x1b8] sm:$0xf] %vm2281, %v2135
        %2393 = vst.msk [vmem:[%s164 + $0x1bc] sm:$0xf] %vm2281, %v2136
        %2394 = vst.msk [vmem:[%s164 + $0x1c0] sm:$0xf] %vm2281, %v2137
        %2395 = vst.msk [vmem:[%s164 + $0x1c4] sm:$0xf] %vm2281, %v2138
        %2396 = vst.msk [vmem:[%s164 + $0x1c8] sm:$0xf] %vm2281, %v2139
        %2397 = vst.msk [vmem:[%s164 + $0x1cc] sm:$0xf] %vm2281, %v2140
        %2398 = vst.msk [vmem:[%s164 + $0x1d0] sm:$0xf] %vm2281, %v2141
        %2399 = vst.msk [vmem:[%s164 + $0x1d4] sm:$0xf] %vm2281, %v2142
        %2400 = vst.msk [vmem:[%s164 + $0x1d8] sm:$0xf] %vm2281, %v2143
        %2401 = vst.msk [vmem:[%s164 + $0x1dc] sm:$0xf] %vm2281, %v2144
        %2402 = vst.msk [vmem:[%s164 + $0x1e0] sm:$0xf] %vm2281, %v2145
        %2403 = vst.msk [vmem:[%s164 + $0x1e4] sm:$0xf] %vm2281, %v2146
        %2404 = vst.msk [vmem:[%s164 + $0x1e8] sm:$0xf] %vm2281, %v2147
        %2405 = vst.msk [vmem:[%s164 + $0x1ec] sm:$0xf] %vm2281, %v2148
        %2406 = vst.msk [vmem:[%s164 + $0x1f0] sm:$0xf] %vm2281, %v2149
        %2407 = vst.msk [vmem:[%s164 + $0x1f4] sm:$0xf] %vm2281, %v2150
        %2408 = vst.msk [vmem:[%s164 + $0x1f8] sm:$0xf] %vm2281, %v2151
        %2409 = vst.msk [vmem:[%s164 + $0x1fc] sm:$0xf] %vm2281, %v2152
        %s2410 = smul.u32 128, %s16
        %p2411 = scmp.lt.s32.totalorder %s2410, 1023
        %s2412 = scalar_select %p2411, %s2410, 1023
        %s2413 = smul.addr %s2412, 4
        %s2414 = scalar_lea.vmem %s2, %s2413
        // Predicated region
        $region33: #{_lambda_.4} parent=27 // pred_check
          %p2415 = pneg %p81
        $region34: #{_lambda_.4} parent=27 // pred_check_branch
          %2417 = sbr.rel (%p2415) target = $region36
        $region35: #{_lambda_.4} parent=27 // pred_region
          %s2418 = smul.u32 128, %s16
        $region36: #{_lambda_.4} parent=27 // pred_fallthru
          _
      $region28: #{_lambda_.4} parent=5 // pred_fallthru
        _
      %p2419 = scmp.le.s32.totalorder 2, %s11
      // Predicated region
      $region37: #{_lambda_.4} parent=5 // pred_check
        %p2420 = pneg %p2419
      $region38: #{_lambda_.4} parent=5 // pred_check_branch
        %2422 = sbr.rel (%p2420) target = $region40
      $region39: #{_lambda_.4} parent=5 // pred_region
        %s2423 = ssub.s32 %s11, 2
        // Predicated region
        $region41: #{_lambda_.4} parent=39 // pred_check
          %p2424 = pneg %p87
        $region42: #{_lambda_.4} parent=39 // pred_check_branch
          %2426 = sbr.rel (%p2424) target = $region44
        $region43: #{_lambda_.4} parent=39 // pred_region
          %s2427 = smul.u32 128, %s17
          %p2428 = scmp.lt.s32.totalorder %s2427, 1023
          %s2429 = scalar_select %p2428, %s2427, 1023
          %s2430 = smul.addr %s2429, 4
          %s2431 = scalar_lea.vmem %s2, %s2430
        $region44: #{_lambda_.4} parent=39 // pred_fallthru
          _
      $region40: #{_lambda_.4} parent=5 // pred_fallthru
        _
    $region6: #{_lambda_.4} parent=1 // loop_footer
      %s15 = sadd.s32 1, %s11
    $region7: #{_lambda_.4} parent=1 // loop_footer_branch
      %10 = sbr.rel target = $region3
    $region8: #{_lambda_.4} parent=1 // loop_exit
      _
    %2432 = vsyncpa [#allocation3], 1
    %s2433 = scalar_lea.sflag [#allocation3], 1
    %2434 = vsyncpa %s2433, 1

// kernel: _lambda_.5
$region0: #{_lambda_.5}
  #allocation0 [shape = 'u32[]', space=smem, size = 0x4, offset = 0x4, fixed_abs, tag = 'smem constant byte address 0x4 - core index']
  #allocation1 [shape = 'u32[144,128]{1,0:T(1,128)}', space=vmem, size = 0x12000, scoped, tag = 'internal scratch']
  %s0 = inlined_call_operand.vmem [shape: bf16[1024,256], index: 0, kind: input, shape index: {}]
  %s1 = inlined_call_operand.vmem [shape: bf16[256,4], index: 1, kind: input, shape index: {}]
  %s2 = inlined_call_operand.vmem [shape: bf16[1024,4], index: 2, kind: output, shape index: {}]
  %s3 = sld [smem:[#allocation0]]
  $region41: #{_lambda_.5} parent=0
    _
  %s5 = ssub.s32 1, %s3
  %s6 = scalar_select 0, %s5, %s3
  loop: start=0, step=1, limit=4
  $region2: #{_lambda_.5} parent=0 // loop_pre_header
    _
  $region3: #{_lambda_.5} parent=0 // loop_header
    %s8 = sphi 0, %s12
    %p9 = scmp.ge.s32.totalorder %s8, 4
    %s18 = sphi 0, %s20
    %s21 = sphi 0, %s18
    %s22 = sphi 0, %s21
    %s38 = sphi 0, %s22
    %s42 = sphi 0, %s42
    %s44 = sphi 0, %s42
    %s45 = sphi 0, %s44
    %s59 = sphi 0, %s45
    %s65 = sphi 0, %s67
    %s68 = sphi 0, %s65
    %s69 = sphi 0, %s68
    %s85 = sphi 0, %s69
  $region4: #{_lambda_.5} parent=0 // loop_header_branch
    %11 = sbr.rel (%p9) target = $region8
  $region5: #{_lambda_.5} parent=0 // loop_body
    %s13 = ssub.s32 %s8, 1
    %s14 = ssub.s32 %s8, 2
    %s15 = sadd.s32 %s8, 1
    %s16 = ssub.s32 %s8, %s15
    %p17 = scmp.eq.s32.totalorder %s16, 0
    %s19 = sadd.s32 %s18, 1
    %s20 = scalar_select %p17, %s18, %s19
    %p23 = pneg %p17
    %p24 = scmp.eq.s32.totalorder %s8, 1
    %p25 = por %p23, %p24
    %p26 = scmp.ne.s32.totalorder %s18, %s21
    %p27 = scmp.eq.s32.totalorder %s8, 0
    %p28 = por %p26, %p27
    %p29 = scmp.ne.s32.totalorder %s18, %s21
    %p30 = scmp.eq.s32.totalorder %s13, 1
    %p31 = por %p29, %p30
    %p32 = scmp.ne.s32.totalorder %s21, %s22
    %p33 = scmp.eq.s32.totalorder %s13, 0
    %p34 = por %p32, %p33
    %p35 = scmp.ne.s32.totalorder %s21, %s22
    %p36 = scmp.eq.s32.totalorder %s14, 1
    %p37 = por %p35, %p36
    %p39 = scmp.ne.s32.totalorder %s22, %s38
    %p40 = scmp.eq.s32.totalorder %s14, 0
    %p41 = por %p39, %p40
    %s43 = sadd.s32 %s42, 1
    %p46 = scmp.eq.s32.totalorder %s8, 1
    %p47 = scmp.ne.s32.totalorder %s42, %s44
    %p48 = scmp.eq.s32.totalorder %s8, 0
    %p49 = por %p47, %p48
    %p50 = scmp.ne.s32.totalorder %s42, %s44
    %p51 = scmp.eq.s32.totalorder %s13, 1
    %p52 = por %p50, %p51
    %p53 = scmp.ne.s32.totalorder %s44, %s45
    %p54 = scmp.eq.s32.totalorder %s13, 0
    %p55 = por %p53, %p54
    %p56 = scmp.ne.s32.totalorder %s44, %s45
    %p57 = scmp.eq.s32.totalorder %s14, 1
    %p58 = por %p56, %p57
    %p60 = scmp.ne.s32.totalorder %s45, %s59
    %p61 = scmp.eq.s32.totalorder %s14, 0
    %p62 = por %p60, %p61
    %s63 = ssub.s32 %s8, %s15
    %p64 = scmp.eq.s32.totalorder %s63, 0
    %s66 = sadd.s32 %s65, 1
    %s67 = scalar_select %p64, %s65, %s66
    %p70 = pneg %p64
    %p71 = scmp.eq.s32.totalorder %s8, 1
    %p72 = por %p70, %p71
    %p73 = scmp.ne.s32.totalorder %s65, %s68
    %p74 = scmp.eq.s32.totalorder %s8, 0
    %p75 = por %p73, %p74
    %p76 = scmp.ne.s32.totalorder %s65, %s68
    %p77 = scmp.eq.s32.totalorder %s13, 1
    %p78 = por %p76, %p77
    %p79 = scmp.ne.s32.totalorder %s68, %s69
    %p80 = scmp.eq.s32.totalorder %s13, 0
    %p81 = por %p79, %p80
    %p82 = scmp.ne.s32.totalorder %s68, %s69
    %p83 = scmp.eq.s32.totalorder %s14, 1
    %p84 = por %p82, %p83
    %p86 = scmp.ne.s32.totalorder %s69, %s85
    %p87 = scmp.eq.s32.totalorder %s14, 0
    %p88 = por %p86, %p87
    %p89 = scmp.le.s32.totalorder 1, %s8
    %p90 = scmp.lt.s32.totalorder %s8, 3
    %p91 = pnand %p89, %p90
    %p92 = pneg %p91
    // Predicated region
    $region9: #{_lambda_.5} parent=5 // pred_check
      _
    $region10: #{_lambda_.5} parent=5 // pred_check_branch
      %94 = sbr.rel (%p91) target = $region12
    $region11: #{_lambda_.5} parent=5 // pred_region
      %s95 = ssub.s32 %s8, 1
      // Predicated region
      $region13: #{_lambda_.5} parent=11 // pred_check
        %p96 = pneg %p55
      $region14: #{_lambda_.5} parent=11 // pred_check_branch
        %98 = sbr.rel (%p96) target = $region16
      $region15: #{_lambda_.5} parent=11 // pred_region
        _
      $region16: #{_lambda_.5} parent=11 // pred_fallthru
        _
    $region12: #{_lambda_.5} parent=5 // pred_fallthru
      _
    %p99 = scmp.lt.s32.totalorder %s8, 2
    // Predicated region
    $region17: #{_lambda_.5} parent=5 // pred_check
      %p100 = pneg %p99
    $region18: #{_lambda_.5} parent=5 // pred_check_branch
      %102 = sbr.rel (%p100) target = $region20
    $region19: #{_lambda_.5} parent=5 // pred_region
      // Predicated region
      $region21: #{_lambda_.5} parent=19 // pred_check
        %p103 = pneg %p28
      $region22: #{_lambda_.5} parent=19 // pred_check_branch
        %105 = sbr.rel (%p103) target = $region24
      $region23: #{_lambda_.5} parent=19 // pred_region
        %s106 = smul.u32 64, %s8
        %p107 = scmp.lt.s32.totalorder %s106, 127
        %s108 = scalar_select %p107, %s106, 127
        %s109 = smul.addr %s108, 2
        %s110 = smul.addr %s109, 4
        %s111 = scalar_lea.vmem %s0, %s110
        %s112 = smul.u32 64, %s8
      $region24: #{_lambda_.5} parent=19 // pred_fallthru
        _
    $region20: #{_lambda_.5} parent=5 // pred_fallthru
      _
    %p113 = scmp.le.s32.totalorder 1, %s8
    %p114 = scmp.lt.s32.totalorder %s8, 3
    %p115 = pnand %p113, %p114
    %p116 = pneg %p115
    // Predicated region
    $region25: #{_lambda_.5} parent=5 // pred_check
      _
    $region26: #{_lambda_.5} parent=5 // pred_check_branch
      %118 = sbr.rel (%p115) target = $region28
    $region27: #{_lambda_.5} parent=5 // pred_region
      %s119 = ssub.s32 %s8, 1
      %s120 = smul.u32 64, %s13
      %p121 = scmp.lt.s32.totalorder %s120, 127
      %s122 = scalar_select %p121, %s120, 127
      %s123 = smul.addr %s122, 2
      %s124 = smul.addr %s123, 4
      %s125 = scalar_lea.vmem %s0, %s124
      %p126 = pneg %p34
      %p127 = pneg %p31
      %p128 = pneg %p55
      %p129 = pneg %p52
      %p130 = pneg %p81
      %p131 = pneg %p78
      %s132 = smul.u32 64, %s13
      %p133 = scmp.lt.s32.totalorder %s132, 127
      %s134 = scalar_select %p133, %s132, 127
      %s135 = smul.addr %s134, 4
      %s136 = scalar_lea.vmem %s2, %s135
      %s137 = smul.u32 64, %s13
      %p138 = scmp.lt.s32.totalorder %s137, 127
      %s139 = scalar_select %p138, %s137, 127
      %s140 = smul.addr %s139, 2
      %s141 = smul.addr %s140, 4
      %s142 = scalar_lea.vmem %s0, %s141
      %s143 = smul.u32 64, %s13
      %s144 = smul.u32 64, %s13
      %p145 = scmp.lt.s32.totalorder %s144, 127
      %s146 = scalar_select %p145, %s144, 127
      %s147 = smul.addr %s146, 4
      %s148 = scalar_lea.vmem %s2, %s147
      %s149 = smul.u32 64, %s13
      %v151 = vld [vmem:[%s142] sm:$0xff]
      %v152 = vld [vmem:[%s142 + $0x8] sm:$0xff]
      %v153 = vld [vmem:[%s142 + $0x10] sm:$0xff]
      %v154 = vld [vmem:[%s142 + $0x18] sm:$0xff]
      %v155 = vld [vmem:[%s142 + $0x20] sm:$0xff]
      %v156 = vld [vmem:[%s142 + $0x28] sm:$0xff]
      %v157 = vld [vmem:[%s142 + $0x30] sm:$0xff]
      %v158 = vld [vmem:[%s142 + $0x38] sm:$0xff]
      %v159 = vld [vmem:[%s142 + $0x40] sm:$0xff]
      %v160 = vld [vmem:[%s142 + $0x48] sm:$0xff]
      %v161 = vld [vmem:[%s142 + $0x50] sm:$0xff]
      %v162 = vld [vmem:[%s142 + $0x58] sm:$0xff]
      %v163 = vld [vmem:[%s142 + $0x60] sm:$0xff]
      %v164 = vld [vmem:[%s142 + $0x68] sm:$0xff]
      %v165 = vld [vmem:[%s142 + $0x70] sm:$0xff]
      %v166 = vld [vmem:[%s142 + $0x78] sm:$0xff]
      %v167 = vld [vmem:[%s142 + $0x80] sm:$0xff]
      %v168 = vld [vmem:[%s142 + $0x88] sm:$0xff]
      %v169 = vld [vmem:[%s142 + $0x90] sm:$0xff]
      %v170 = vld [vmem:[%s142 + $0x98] sm:$0xff]
      %v171 = vld [vmem:[%s142 + $0xa0] sm:$0xff]
      %v172 = vld [vmem:[%s142 + $0xa8] sm:$0xff]
      %v173 = vld [vmem:[%s142 + $0xb0] sm:$0xff]
      %v174 = vld [vmem:[%s142 + $0xb8] sm:$0xff]
      %v175 = vld [vmem:[%s142 + $0xc0] sm:$0xff]
      %v176 = vld [vmem:[%s142 + $0xc8] sm:$0xff]
      %v177 = vld [vmem:[%s142 + $0xd0] sm:$0xff]
      %v178 = vld [vmem:[%s142 + $0xd8] sm:$0xff]
      %v179 = vld [vmem:[%s142 + $0xe0] sm:$0xff]
      %v180 = vld [vmem:[%s142 + $0xe8] sm:$0xff]
      %v181 = vld [vmem:[%s142 + $0xf0] sm:$0xff]
      %v182 = vld [vmem:[%s142 + $0xf8] sm:$0xff]
      %v183 = vld [vmem:[%s142 + $0x100] sm:$0xff]
      %v184 = vld [vmem:[%s142 + $0x108] sm:$0xff]
      %v185 = vld [vmem:[%s142 + $0x110] sm:$0xff]
      %v186 = vld [vmem:[%s142 + $0x118] sm:$0xff]
      %v187 = vld [vmem:[%s142 + $0x120] sm:$0xff]
      %v188 = vld [vmem:[%s142 + $0x128] sm:$0xff]
      %v189 = vld [vmem:[%s142 + $0x130] sm:$0xff]
      %v190 = vld [vmem:[%s142 + $0x138] sm:$0xff]
      %v191 = vld [vmem:[%s142 + $0x140] sm:$0xff]
      %v192 = vld [vmem:[%s142 + $0x148] sm:$0xff]
      %v193 = vld [vmem:[%s142 + $0x150] sm:$0xff]
      %v194 = vld [vmem:[%s142 + $0x158] sm:$0xff]
      %v195 = vld [vmem:[%s142 + $0x160] sm:$0xff]
      %v196 = vld [vmem:[%s142 + $0x168] sm:$0xff]
      %v197 = vld [vmem:[%s142 + $0x170] sm:$0xff]
      %v198 = vld [vmem:[%s142 + $0x178] sm:$0xff]
      %v199 = vld [vmem:[%s142 + $0x180] sm:$0xff]
      %v200 = vld [vmem:[%s142 + $0x188] sm:$0xff]
      %v201 = vld [vmem:[%s142 + $0x190] sm:$0xff]
      %v202 = vld [vmem:[%s142 + $0x198] sm:$0xff]
      %v203 = vld [vmem:[%s142 + $0x1a0] sm:$0xff]
      %v204 = vld [vmem:[%s142 + $0x1a8] sm:$0xff]
      %v205 = vld [vmem:[%s142 + $0x1b0] sm:$0xff]
      %v206 = vld [vmem:[%s142 + $0x1b8] sm:$0xff]
      %v207 = vld [vmem:[%s142 + $0x1c0] sm:$0xff]
      %v208 = vld [vmem:[%s142 + $0x1c8] sm:$0xff]
      %v209 = vld [vmem:[%s142 + $0x1d0] sm:$0xff]
      %v210 = vld [vmem:[%s142 + $0x1d8] sm:$0xff]
      %v211 = vld [vmem:[%s142 + $0x1e0] sm:$0xff]
      %v212 = vld [vmem:[%s142 + $0x1e8] sm:$0xff]
      %v213 = vld [vmem:[%s142 + $0x1f0] sm:$0xff]
      %v214 = vld [vmem:[%s142 + $0x1f8] sm:$0xff]
      %v215 = vld [vmem:[%s1] sm:$0xf]
      %v216 = vld [vmem:[%s1 + $0x4] sm:$0xf]
      %v217 = vld [vmem:[%s1 + $0x8] sm:$0xf]
      %v218 = vld [vmem:[%s1 + $0xc] sm:$0xf]
      %v219 = vld [vmem:[%s1 + $0x10] sm:$0xf]
      %v220 = vld [vmem:[%s1 + $0x14] sm:$0xf]
      %v221 = vld [vmem:[%s1 + $0x18] sm:$0xf]
      %v222 = vld [vmem:[%s1 + $0x1c] sm:$0xf]
      %v223 = vld [vmem:[%s1 + $0x20] sm:$0xf]
      %v224 = vld [vmem:[%s1 + $0x24] sm:$0xf]
      %v225 = vld [vmem:[%s1 + $0x28] sm:$0xf]
      %v226 = vld [vmem:[%s1 + $0x2c] sm:$0xf]
      %v227 = vld [vmem:[%s1 + $0x30] sm:$0xf]
      %v228 = vld [vmem:[%s1 + $0x34] sm:$0xf]
      %v229 = vld [vmem:[%s1 + $0x38] sm:$0xf]
      %v230 = vld [vmem:[%s1 + $0x3c] sm:$0xf]
      %v231 = vld [vmem:[%s1 + $0x40] sm:$0xf]
      %v232 = vld [vmem:[%s1 + $0x44] sm:$0xf]
      %v233 = vld [vmem:[%s1 + $0x48] sm:$0xf]
      %v234 = vld [vmem:[%s1 + $0x4c] sm:$0xf]
      %v235 = vld [vmem:[%s1 + $0x50] sm:$0xf]
      %v236 = vld [vmem:[%s1 + $0x54] sm:$0xf]
      %v237 = vld [vmem:[%s1 + $0x58] sm:$0xf]
      %v238 = vld [vmem:[%s1 + $0x5c] sm:$0xf]
      %v239 = vld [vmem:[%s1 + $0x60] sm:$0xf]
      %v240 = vld [vmem:[%s1 + $0x64] sm:$0xf]
      %v241 = vld [vmem:[%s1 + $0x68] sm:$0xf]
      %v242 = vld [vmem:[%s1 + $0x6c] sm:$0xf]
      %v243 = vld [vmem:[%s1 + $0x70] sm:$0xf]
      %v244 = vld [vmem:[%s1 + $0x74] sm:$0xf]
      %v245 = vld [vmem:[%s1 + $0x78] sm:$0xf]
      %v246 = vld [vmem:[%s1 + $0x7c] sm:$0xf]
      %v311 = vunpack.c.l.b16 %v151
      %v312 = vunpack.c.h.b16 %v151
      %v313 = vunpack.c.l.b16 %v152
      %v314 = vunpack.c.h.b16 %v152
      %v315 = vunpack.c.l.b16 %v153
      %v316 = vunpack.c.h.b16 %v153
      %v317 = vunpack.c.l.b16 %v154
      %v318 = vunpack.c.h.b16 %v154
      %v319 = vunpack.c.l.b16 %v155
      %v320 = vunpack.c.h.b16 %v155
      %v321 = vunpack.c.l.b16 %v156
      %v322 = vunpack.c.h.b16 %v156
      %v323 = vunpack.c.l.b16 %v157
      %v324 = vunpack.c.h.b16 %v157
      %v325 = vunpack.c.l.b16 %v158
      %v326 = vunpack.c.h.b16 %v158
      %v327 = vunpack.c.l.b16 %v159
      %v328 = vunpack.c.h.b16 %v159
      %v329 = vunpack.c.l.b16 %v160
      %v330 = vunpack.c.h.b16 %v160
      %v331 = vunpack.c.l.b16 %v161
      %v332 = vunpack.c.h.b16 %v161
      %v333 = vunpack.c.l.b16 %v162
      %v334 = vunpack.c.h.b16 %v162
      %v335 = vunpack.c.l.b16 %v163
      %v336 = vunpack.c.h.b16 %v163
      %v337 = vunpack.c.l.b16 %v164
      %v338 = vunpack.c.h.b16 %v164
      %v339 = vunpack.c.l.b16 %v165
      %v340 = vunpack.c.h.b16 %v165
      %v341 = vunpack.c.l.b16 %v166
      %v342 = vunpack.c.h.b16 %v166
      %v343 = vunpack.c.l.b16 %v167
      %v344 = vunpack.c.h.b16 %v167
      %v345 = vunpack.c.l.b16 %v168
      %v346 = vunpack.c.h.b16 %v168
      %v347 = vunpack.c.l.b16 %v169
      %v348 = vunpack.c.h.b16 %v169
      %v349 = vunpack.c.l.b16 %v170
      %v350 = vunpack.c.h.b16 %v170
      %v351 = vunpack.c.l.b16 %v171
      %v352 = vunpack.c.h.b16 %v171
      %v353 = vunpack.c.l.b16 %v172
      %v354 = vunpack.c.h.b16 %v172
      %v355 = vunpack.c.l.b16 %v173
      %v356 = vunpack.c.h.b16 %v173
      %v357 = vunpack.c.l.b16 %v174
      %v358 = vunpack.c.h.b16 %v174
      %v359 = vunpack.c.l.b16 %v175
      %v360 = vunpack.c.h.b16 %v175
      %v361 = vunpack.c.l.b16 %v176
      %v362 = vunpack.c.h.b16 %v176
      %v363 = vunpack.c.l.b16 %v177
      %v364 = vunpack.c.h.b16 %v177
      %v365 = vunpack.c.l.b16 %v178
      %v366 = vunpack.c.h.b16 %v178
      %v367 = vunpack.c.l.b16 %v179
      %v368 = vunpack.c.h.b16 %v179
      %v369 = vunpack.c.l.b16 %v180
      %v370 = vunpack.c.h.b16 %v180
      %v371 = vunpack.c.l.b16 %v181
      %v372 = vunpack.c.h.b16 %v181
      %v373 = vunpack.c.l.b16 %v182
      %v374 = vunpack.c.h.b16 %v182
      %v375 = vunpack.c.l.b16 %v183
      %v376 = vunpack.c.h.b16 %v183
      %v377 = vunpack.c.l.b16 %v184
      %v378 = vunpack.c.h.b16 %v184
      %v379 = vunpack.c.l.b16 %v185
      %v380 = vunpack.c.h.b16 %v185
      %v381 = vunpack.c.l.b16 %v186
      %v382 = vunpack.c.h.b16 %v186
      %v383 = vunpack.c.l.b16 %v187
      %v384 = vunpack.c.h.b16 %v187
      %v385 = vunpack.c.l.b16 %v188
      %v386 = vunpack.c.h.b16 %v188
      %v387 = vunpack.c.l.b16 %v189
      %v388 = vunpack.c.h.b16 %v189
      %v389 = vunpack.c.l.b16 %v190
      %v390 = vunpack.c.h.b16 %v190
      %v391 = vunpack.c.l.b16 %v191
      %v392 = vunpack.c.h.b16 %v191
      %v393 = vunpack.c.l.b16 %v192
      %v394 = vunpack.c.h.b16 %v192
      %v395 = vunpack.c.l.b16 %v193
      %v396 = vunpack.c.h.b16 %v193
      %v397 = vunpack.c.l.b16 %v194
      %v398 = vunpack.c.h.b16 %v194
      %v399 = vunpack.c.l.b16 %v195
      %v400 = vunpack.c.h.b16 %v195
      %v401 = vunpack.c.l.b16 %v196
      %v402 = vunpack.c.h.b16 %v196
      %v403 = vunpack.c.l.b16 %v197
      %v404 = vunpack.c.h.b16 %v197
      %v405 = vunpack.c.l.b16 %v198
      %v406 = vunpack.c.h.b16 %v198
      %v407 = vunpack.c.l.b16 %v199
      %v408 = vunpack.c.h.b16 %v199
      %v409 = vunpack.c.l.b16 %v200
      %v410 = vunpack.c.h.b16 %v200
      %v411 = vunpack.c.l.b16 %v201
      %v412 = vunpack.c.h.b16 %v201
      %v413 = vunpack.c.l.b16 %v202
      %v414 = vunpack.c.h.b16 %v202
      %v415 = vunpack.c.l.b16 %v203
      %v416 = vunpack.c.h.b16 %v203
      %v417 = vunpack.c.l.b16 %v204
      %v418 = vunpack.c.h.b16 %v204
      %v419 = vunpack.c.l.b16 %v205
      %v420 = vunpack.c.h.b16 %v205
      %v421 = vunpack.c.l.b16 %v206
      %v422 = vunpack.c.h.b16 %v206
      %v423 = vunpack.c.l.b16 %v207
      %v424 = vunpack.c.h.b16 %v207
      %v425 = vunpack.c.l.b16 %v208
      %v426 = vunpack.c.h.b16 %v208
      %v427 = vunpack.c.l.b16 %v209
      %v428 = vunpack.c.h.b16 %v209
      %v429 = vunpack.c.l.b16 %v210
      %v430 = vunpack.c.h.b16 %v210
      %v431 = vunpack.c.l.b16 %v211
      %v432 = vunpack.c.h.b16 %v211
      %v433 = vunpack.c.l.b16 %v212
      %v434 = vunpack.c.h.b16 %v212
      %v435 = vunpack.c.l.b16 %v213
      %v436 = vunpack.c.h.b16 %v213
      %v437 = vunpack.c.l.b16 %v214
      %v438 = vunpack.c.h.b16 %v214
      %v439 = vpack.c.b16 %v313, %v311
      %v440 = vpack.c.b16 %v314, %v312
      %v441 = vpack.c.b16 %v317, %v315
      %v442 = vpack.c.b16 %v318, %v316
      %v443 = vpack.c.b16 %v321, %v319
      %v444 = vpack.c.b16 %v322, %v320
      %v445 = vpack.c.b16 %v325, %v323
      %v446 = vpack.c.b16 %v326, %v324
      %v447 = vpack.c.b16 %v329, %v327
      %v448 = vpack.c.b16 %v330, %v328
      %v449 = vpack.c.b16 %v333, %v331
      %v450 = vpack.c.b16 %v334, %v332
      %v451 = vpack.c.b16 %v337, %v335
      %v452 = vpack.c.b16 %v338, %v336
      %v453 = vpack.c.b16 %v341, %v339
      %v454 = vpack.c.b16 %v342, %v340
      %v455 = vpack.c.b16 %v345, %v343
      %v456 = vpack.c.b16 %v346, %v344
      %v457 = vpack.c.b16 %v349, %v347
      %v458 = vpack.c.b16 %v350, %v348
      %v459 = vpack.c.b16 %v353, %v351
      %v460 = vpack.c.b16 %v354, %v352
      %v461 = vpack.c.b16 %v357, %v355
      %v462 = vpack.c.b16 %v358, %v356
      %v463 = vpack.c.b16 %v361, %v359
      %v464 = vpack.c.b16 %v362, %v360
      %v465 = vpack.c.b16 %v365, %v363
      %v466 = vpack.c.b16 %v366, %v364
      %v467 = vpack.c.b16 %v369, %v367
      %v468 = vpack.c.b16 %v370, %v368
      %v469 = vpack.c.b16 %v373, %v371
      %v470 = vpack.c.b16 %v374, %v372
      %v471 = vpack.c.b16 %v377, %v375
      %v472 = vpack.c.b16 %v378, %v376
      %v473 = vpack.c.b16 %v381, %v379
      %v474 = vpack.c.b16 %v382, %v380
      %v475 = vpack.c.b16 %v385, %v383
      %v476 = vpack.c.b16 %v386, %v384
      %v477 = vpack.c.b16 %v389, %v387
      %v478 = vpack.c.b16 %v390, %v388
      %v479 = vpack.c.b16 %v393, %v391
      %v480 = vpack.c.b16 %v394, %v392
      %v481 = vpack.c.b16 %v397, %v395
      %v482 = vpack.c.b16 %v398, %v396
      %v483 = vpack.c.b16 %v401, %v399
      %v484 = vpack.c.b16 %v402, %v400
      %v485 = vpack.c.b16 %v405, %v403
      %v486 = vpack.c.b16 %v406, %v404
      %v487 = vpack.c.b16 %v409, %v407
      %v488 = vpack.c.b16 %v410, %v408
      %v489 = vpack.c.b16 %v413, %v411
      %v490 = vpack.c.b16 %v414, %v412
      %v491 = vpack.c.b16 %v417, %v415
      %v492 = vpack.c.b16 %v418, %v416
      %v493 = vpack.c.b16 %v421, %v419
      %v494 = vpack.c.b16 %v422, %v420
      %v495 = vpack.c.b16 %v425, %v423
      %v496 = vpack.c.b16 %v426, %v424
      %v497 = vpack.c.b16 %v429, %v427
      %v498 = vpack.c.b16 %v430, %v428
      %v499 = vpack.c.b16 %v433, %v431
      %v500 = vpack.c.b16 %v434, %v432
      %v501 = vpack.c.b16 %v437, %v435
      %v502 = vpack.c.b16 %v438, %v436
      %v599 = vunpack.c.l.b16 %v215
      %v600 = vunpack.c.l.b16 %v216
      %v601 = vunpack.c.l.b16 %v217
      %v602 = vunpack.c.l.b16 %v218
      %v603 = vunpack.c.l.b16 %v219
      %v604 = vunpack.c.l.b16 %v220
      %v605 = vunpack.c.l.b16 %v221
      %v606 = vunpack.c.l.b16 %v222
      %v607 = vunpack.c.l.b16 %v223
      %v608 = vunpack.c.l.b16 %v224
      %v609 = vunpack.c.l.b16 %v225
      %v610 = vunpack.c.l.b16 %v226
      %v611 = vunpack.c.l.b16 %v227
      %v612 = vunpack.c.l.b16 %v228
      %v613 = vunpack.c.l.b16 %v229
      %v614 = vunpack.c.l.b16 %v230
      %v615 = vunpack.c.l.b16 %v231
      %v616 = vunpack.c.l.b16 %v232
      %v617 = vunpack.c.l.b16 %v233
      %v618 = vunpack.c.l.b16 %v234
      %v619 = vunpack.c.l.b16 %v235
      %v620 = vunpack.c.l.b16 %v236
      %v621 = vunpack.c.l.b16 %v237
      %v622 = vunpack.c.l.b16 %v238
      %v623 = vunpack.c.l.b16 %v239
      %v624 = vunpack.c.l.b16 %v240
      %v625 = vunpack.c.l.b16 %v241
      %v626 = vunpack.c.l.b16 %v242
      %v627 = vunpack.c.l.b16 %v243
      %v628 = vunpack.c.l.b16 %v244
      %v629 = vunpack.c.l.b16 %v245
      %v630 = vunpack.c.l.b16 %v246
      %v631 = vpack.c.b16 %v600, %v599
      %v632 = vpack.c.b16 %v602, %v601
      %v633 = vpack.c.b16 %v604, %v603
      %v634 = vpack.c.b16 %v606, %v605
      %v635 = vpack.c.b16 %v608, %v607
      %v636 = vpack.c.b16 %v610, %v609
      %v637 = vpack.c.b16 %v612, %v611
      %v638 = vpack.c.b16 %v614, %v613
      %v639 = vpack.c.b16 %v616, %v615
      %v640 = vpack.c.b16 %v618, %v617
      %v641 = vpack.c.b16 %v620, %v619
      %v642 = vpack.c.b16 %v622, %v621
      %v643 = vpack.c.b16 %v624, %v623
      %v644 = vpack.c.b16 %v626, %v625
      %v645 = vpack.c.b16 %v628, %v627
      %v646 = vpack.c.b16 %v630, %v629
      %663 = vmatprep.subr.bf16.mxu0 0
      %664 = vmatpush1.bf16.msra.mxu0 %v631
      %665 = vmatprep.subr.bf16.mxu0 0
      %666 = vmatpush1.bf16.msra.mxu0 %v632
      %667 = vmatprep.subr.bf16.mxu0 0
      %668 = vmatpush1.bf16.msra.mxu0 %v633
      %669 = vmatprep.subr.bf16.mxu0 0
      %670 = vmatpush1.bf16.msra.mxu0 %v634
      %671 = vmatprep.subr.bf16.mxu0 0
      %672 = vmatpush1.bf16.msra.mxu0 %v635
      %673 = vmatprep.subr.bf16.mxu0 0
      %674 = vmatpush1.bf16.msra.mxu0 %v636
      %675 = vmatprep.subr.bf16.mxu0 0
      %676 = vmatpush1.bf16.msra.mxu0 %v637
      %677 = vmatprep.subr.bf16.mxu0 0
      %678 = vmatpush1.bf16.msra.mxu0 %v638
      %679 = vmatprep.subr.bf16.mxu0 0
      %680 = vmatpush1.bf16.msra.mxu0 %v639
      %681 = vmatprep.subr.bf16.mxu0 0
      %682 = vmatpush1.bf16.msra.mxu0 %v640
      %683 = vmatprep.subr.bf16.mxu0 0
      %684 = vmatpush1.bf16.msra.mxu0 %v641
      %685 = vmatprep.subr.bf16.mxu0 0
      %686 = vmatpush1.bf16.msra.mxu0 %v642
      %687 = vmatprep.subr.bf16.mxu0 0
      %688 = vmatpush1.bf16.msra.mxu0 %v643
      %689 = vmatprep.subr.bf16.mxu0 0
      %690 = vmatpush1.bf16.msra.mxu0 %v644
      %691 = vmatprep.subr.bf16.mxu0 0
      %692 = vmatpush1.bf16.msra.mxu0 %v645
      %693 = vmatprep.subr.bf16.mxu0 0
      %694 = vmatpush1.bf16.msra.mxu0 %v646
      %695 = vmatprep.mubr.bf16.mxu0 %v440
      %696 = vmatmul.mubr.bf16.gmra.mrb[0].mxu0 %v439
      %v697 = vpop.f32.mrb[0].mxu0
      %v698 = vadd.f32 0.0, %v697
      %v699 = vpop.f32.mrb[0].mxu0
      %v700 = vpop.f32.mrb[0].mxu0
      %v701 = vadd.f32 0.0, %v700
      %v702 = vpop.f32.mrb[0].mxu0
      %703 = vmatprep.mubr.bf16.mxu0 %v442
      %704 = vmatmul.mubr.bf16.gmra.mrb[0].mxu0 %v441
      %v705 = vpop.f32.mrb[0].mxu0
      %v706 = vadd.f32 0.0, %v705
      %v707 = vpop.f32.mrb[0].mxu0
      %v708 = vpop.f32.mrb[0].mxu0
      %v709 = vadd.f32 0.0, %v708
      %v710 = vpop.f32.mrb[0].mxu0
      %711 = vmatprep.mubr.bf16.mxu0 %v444
      %712 = vmatmul.mubr.bf16.gmra.mrb[0].mxu0 %v443
      %v713 = vpop.f32.mrb[0].mxu0
      %v714 = vadd.f32 0.0, %v713
      %v715 = vpop.f32.mrb[0].mxu0
      %v716 = vpop.f32.mrb[0].mxu0
      %v717 = vadd.f32 0.0, %v716
      %v718 = vpop.f32.mrb[0].mxu0
      %719 = vmatprep.mubr.bf16.mxu0 %v446
      %720 = vmatmul.mubr.bf16.gmra.mrb[0].mxu0 %v445
      %v721 = vpop.f32.mrb[0].mxu0
      %v722 = vadd.f32 0.0, %v721
      %v723 = vpop.f32.mrb[0].mxu0
      %v724 = vpop.f32.mrb[0].mxu0
      %v725 = vadd.f32 0.0, %v724
      %v726 = vpop.f32.mrb[0].mxu0
      %727 = vmatprep.mubr.bf16.mxu0 %v448
      %728 = vmatmul.mubr.bf16.gmra.mrb[0].mxu0 %v447
      %v729 = vpop.f32.mrb[0].mxu0
      %v730 = vadd.f32 0.0, %v729
      %v731 = vpop.f32.mrb[0].mxu0
      %v732 = vpop.f32.mrb[0].mxu0
      %v733 = vadd.f32 0.0, %v732
      %v734 = vpop.f32.mrb[0].mxu0
      %735 = vmatprep.mubr.bf16.mxu0 %v450
      %736 = vmatmul.mubr.bf16.gmra.mrb[0].mxu0 %v449
      %v737 = vpop.f32.mrb[0].mxu0
      %v738 = vadd.f32 0.0, %v737
      %v739 = vpop.f32.mrb[0].mxu0
      %v740 = vpop.f32.mrb[0].mxu0
      %v741 = vadd.f32 0.0, %v740
      %v742 = vpop.f32.mrb[0].mxu0
      %743 = vmatprep.mubr.bf16.mxu0 %v452
      %744 = vmatmul.mubr.bf16.gmra.mrb[0].mxu0 %v451
      %v745 = vpop.f32.mrb[0].mxu0
      %v746 = vadd.f32 0.0, %v745
      %v747 = vpop.f32.mrb[0].mxu0
      %v748 = vpop.f32.mrb[0].mxu0
      %v749 = vadd.f32 0.0, %v748
      %v750 = vpop.f32.mrb[0].mxu0
      %751 = vmatprep.mubr.bf16.mxu0 %v454
      %752 = vmatmul.mubr.bf16.gmra.mrb[0].mxu0 %v453
      %v753 = vpop.f32.mrb[0].mxu0
      %v754 = vadd.f32 0.0, %v753
      %v755 = vpop.f32.mrb[0].mxu0
      %v756 = vpop.f32.mrb[0].mxu0
      %v757 = vadd.f32 0.0, %v756
      %v758 = vpop.f32.mrb[0].mxu0
      %759 = vmatprep.mubr.bf16.mxu0 %v456
      %760 = vmatmul.mubr.bf16.gmra.mrb[0].mxu0 %v455
      %v761 = vpop.f32.mrb[0].mxu0
      %v762 = vadd.f32 0.0, %v761
      %v763 = vpop.f32.mrb[0].mxu0
      %v764 = vpop.f32.mrb[0].mxu0
      %v765 = vadd.f32 0.0, %v764
      %v766 = vpop.f32.mrb[0].mxu0
      %767 = vmatprep.mubr.bf16.mxu0 %v458
      %768 = vmatmul.mubr.bf16.gmra.mrb[0].mxu0 %v457
      %v769 = vpop.f32.mrb[0].mxu0
      %v770 = vadd.f32 0.0, %v769
      %v771 = vpop.f32.mrb[0].mxu0
      %v772 = vpop.f32.mrb[0].mxu0
      %v773 = vadd.f32 0.0, %v772
      %v774 = vpop.f32.mrb[0].mxu0
      %775 = vmatprep.mubr.bf16.mxu0 %v460
      %776 = vmatmul.mubr.bf16.gmra.mrb[0].mxu0 %v459
      %v777 = vpop.f32.mrb[0].mxu0
      %v778 = vadd.f32 0.0, %v777
      %v779 = vpop.f32.mrb[0].mxu0
      %v780 = vpop.f32.mrb[0].mxu0
      %v781 = vadd.f32 0.0, %v780
      %v782 = vpop.f32.mrb[0].mxu0
      %783 = vmatprep.mubr.bf16.mxu0 %v462
      %784 = vmatmul.mubr.bf16.gmra.mrb[0].mxu0 %v461
      %v785 = vpop.f32.mrb[0].mxu0
      %v786 = vadd.f32 0.0, %v785
      %v787 = vpop.f32.mrb[0].mxu0
      %v788 = vpop.f32.mrb[0].mxu0
      %v789 = vadd.f32 0.0, %v788
      %v790 = vpop.f32.mrb[0].mxu0
      %791 = vmatprep.mubr.bf16.mxu0 %v464
      %792 = vmatmul.mubr.bf16.gmra.mrb[0].mxu0 %v463
      %v793 = vpop.f32.mrb[0].mxu0
      %v794 = vadd.f32 0.0, %v793
      %v795 = vpop.f32.mrb[0].mxu0
      %v796 = vpop.f32.mrb[0].mxu0
      %v797 = vadd.f32 0.0, %v796
      %v798 = vpop.f32.mrb[0].mxu0
      %799 = vmatprep.mubr.bf16.mxu0 %v466
      %800 = vmatmul.mubr.bf16.gmra.mrb[0].mxu0 %v465
      %v801 = vpop.f32.mrb[0].mxu0
      %v802 = vadd.f32 0.0, %v801
      %v803 = vpop.f32.mrb[0].mxu0
      %v804 = vpop.f32.mrb[0].mxu0
      %v805 = vadd.f32 0.0, %v804
      %v806 = vpop.f32.mrb[0].mxu0
      %807 = vmatprep.mubr.bf16.mxu0 %v468
      %808 = vmatmul.mubr.bf16.gmra.mrb[0].mxu0 %v467
      %v809 = vpop.f32.mrb[0].mxu0
      %v810 = vadd.f32 0.0, %v809
      %v811 = vpop.f32.mrb[0].mxu0
      %v812 = vpop.f32.mrb[0].mxu0
      %v813 = vadd.f32 0.0, %v812
      %v814 = vpop.f32.mrb[0].mxu0
      %815 = vmatprep.mubr.bf16.mxu0 %v470
      %816 = vmatmul.mubr.bf16.gmra.mrb[0].mxu0 %v469
      %v817 = vpop.f32.mrb[0].mxu0
      %v818 = vadd.f32 0.0, %v817
      %v819 = vpop.f32.mrb[0].mxu0
      %v820 = vpop.f32.mrb[0].mxu0
      %v821 = vadd.f32 0.0, %v820
      %v822 = vpop.f32.mrb[0].mxu0
      %823 = vmatprep.mubr.bf16.mxu0 %v472
      %824 = vmatmul.mubr.bf16.gmra.mrb[0].mxu0 %v471
      %v825 = vpop.f32.mrb[0].mxu0
      %v826 = vadd.f32 0.0, %v825
      %v827 = vpop.f32.mrb[0].mxu0
      %v828 = vpop.f32.mrb[0].mxu0
      %v829 = vadd.f32 0.0, %v828
      %v830 = vpop.f32.mrb[0].mxu0
      %831 = vmatprep.mubr.bf16.mxu0 %v474
      %832 = vmatmul.mubr.bf16.gmra.mrb[0].mxu0 %v473
      %v833 = vpop.f32.mrb[0].mxu0
      %v834 = vadd.f32 0.0, %v833
      %v835 = vpop.f32.mrb[0].mxu0
      %v836 = vpop.f32.mrb[0].mxu0
      %v837 = vadd.f32 0.0, %v836
      %v838 = vpop.f32.mrb[0].mxu0
      %839 = vmatprep.mubr.bf16.mxu0 %v476
      %840 = vmatmul.mubr.bf16.gmra.mrb[0].mxu0 %v475
      %v841 = vpop.f32.mrb[0].mxu0
      %v842 = vadd.f32 0.0, %v841
      %v843 = vpop.f32.mrb[0].mxu0
      %v844 = vpop.f32.mrb[0].mxu0
      %v845 = vadd.f32 0.0, %v844
      %v846 = vpop.f32.mrb[0].mxu0
      %847 = vmatprep.mubr.bf16.mxu0 %v478
      %848 = vmatmul.mubr.bf16.gmra.mrb[0].mxu0 %v477
      %v849 = vpop.f32.mrb[0].mxu0
      %v850 = vadd.f32 0.0, %v849
      %v851 = vpop.f32.mrb[0].mxu0
      %v852 = vpop.f32.mrb[0].mxu0
      %v853 = vadd.f32 0.0, %v852
      %v854 = vpop.f32.mrb[0].mxu0
      %855 = vmatprep.mubr.bf16.mxu0 %v480
      %856 = vmatmul.mubr.bf16.gmra.mrb[0].mxu0 %v479
      %v857 = vpop.f32.mrb[0].mxu0
      %v858 = vadd.f32 0.0, %v857
      %v859 = vpop.f32.mrb[0].mxu0
      %v860 = vpop.f32.mrb[0].mxu0
      %v861 = vadd.f32 0.0, %v860
      %v862 = vpop.f32.mrb[0].mxu0
      %863 = vmatprep.mubr.bf16.mxu0 %v482
      %864 = vmatmul.mubr.bf16.gmra.mrb[0].mxu0 %v481
      %v865 = vpop.f32.mrb[0].mxu0
      %v866 = vadd.f32 0.0, %v865
      %v867 = vpop.f32.mrb[0].mxu0
      %v868 = vpop.f32.mrb[0].mxu0
      %v869 = vadd.f32 0.0, %v868
      %v870 = vpop.f32.mrb[0].mxu0
      %871 = vmatprep.mubr.bf16.mxu0 %v484
      %872 = vmatmul.mubr.bf16.gmra.mrb[0].mxu0 %v483
      %v873 = vpop.f32.mrb[0].mxu0
      %v874 = vadd.f32 0.0, %v873
      %v875 = vpop.f32.mrb[0].mxu0
      %v876 = vpop.f32.mrb[0].mxu0
      %v877 = vadd.f32 0.0, %v876
      %v878 = vpop.f32.mrb[0].mxu0
      %879 = vmatprep.mubr.bf16.mxu0 %v486
      %880 = vmatmul.mubr.bf16.gmra.mrb[0].mxu0 %v485
      %v881 = vpop.f32.mrb[0].mxu0
      %v882 = vadd.f32 0.0, %v881
      %v883 = vpop.f32.mrb[0].mxu0
      %v884 = vpop.f32.mrb[0].mxu0
      %v885 = vadd.f32 0.0, %v884
      %v886 = vpop.f32.mrb[0].mxu0
      %887 = vmatprep.mubr.bf16.mxu0 %v488
      %888 = vmatmul.mubr.bf16.gmra.mrb[0].mxu0 %v487
      %v889 = vpop.f32.mrb[0].mxu0
      %v890 = vadd.f32 0.0, %v889
      %v891 = vpop.f32.mrb[0].mxu0
      %v892 = vpop.f32.mrb[0].mxu0
      %v893 = vadd.f32 0.0, %v892
      %v894 = vpop.f32.mrb[0].mxu0
      %895 = vmatprep.mubr.bf16.mxu0 %v490
      %896 = vmatmul.mubr.bf16.gmra.mrb[0].mxu0 %v489
      %v897 = vpop.f32.mrb[0].mxu0
      %v898 = vadd.f32 0.0, %v897
      %v899 = vpop.f32.mrb[0].mxu0
      %v900 = vpop.f32.mrb[0].mxu0
      %v901 = vadd.f32 0.0, %v900
      %v902 = vpop.f32.mrb[0].mxu0
      %903 = vmatprep.mubr.bf16.mxu0 %v492
      %904 = vmatmul.mubr.bf16.gmra.mrb[0].mxu0 %v491
      %v905 = vpop.f32.mrb[0].mxu0
      %v906 = vadd.f32 0.0, %v905
      %v907 = vpop.f32.mrb[0].mxu0
      %v908 = vpop.f32.mrb[0].mxu0
      %v909 = vadd.f32 0.0, %v908
      %v910 = vpop.f32.mrb[0].mxu0
      %911 = vmatprep.mubr.bf16.mxu0 %v494
      %912 = vmatmul.mubr.bf16.gmra.mrb[0].mxu0 %v493
      %v913 = vpop.f32.mrb[0].mxu0
      %v914 = vadd.f32 0.0, %v913
      %v915 = vpop.f32.mrb[0].mxu0
      %v916 = vpop.f32.mrb[0].mxu0
      %v917 = vadd.f32 0.0, %v916
      %v918 = vpop.f32.mrb[0].mxu0
      %919 = vmatprep.mubr.bf16.mxu0 %v496
      %920 = vmatmul.mubr.bf16.gmra.mrb[0].mxu0 %v495
      %v921 = vpop.f32.mrb[0].mxu0
      %v922 = vadd.f32 0.0, %v921
      %v923 = vpop.f32.mrb[0].mxu0
      %v924 = vpop.f32.mrb[0].mxu0
      %v925 = vadd.f32 0.0, %v924
      %v926 = vpop.f32.mrb[0].mxu0
      %927 = vmatprep.mubr.bf16.mxu0 %v498
      %928 = vmatmul.mubr.bf16.gmra.mrb[0].mxu0 %v497
      %v929 = vpop.f32.mrb[0].mxu0
      %v930 = vadd.f32 0.0, %v929
      %v931 = vpop.f32.mrb[0].mxu0
      %v932 = vpop.f32.mrb[0].mxu0
      %v933 = vadd.f32 0.0, %v932
      %v934 = vpop.f32.mrb[0].mxu0
      %935 = vmatprep.mubr.bf16.mxu0 %v500
      %936 = vmatmul.mubr.bf16.gmra.mrb[0].mxu0 %v499
      %v937 = vpop.f32.mrb[0].mxu0
      %v938 = vadd.f32 0.0, %v937
      %v939 = vpop.f32.mrb[0].mxu0
      %v940 = vpop.f32.mrb[0].mxu0
      %v941 = vadd.f32 0.0, %v940
      %v942 = vpop.f32.mrb[0].mxu0
      %943 = vmatprep.mubr.bf16.mxu0 %v502
      %944 = vmatmul.mubr.bf16.gmra.mrb[0].mxu0 %v501
      %v945 = vpop.f32.mrb[0].mxu0
      %v946 = vadd.f32 0.0, %v945
      %v947 = vpop.f32.mrb[0].mxu0
      %v948 = vpop.f32.mrb[0].mxu0
      %v949 = vadd.f32 0.0, %v948
      %v950 = vpop.f32.mrb[0].mxu0
      %951 = vdwg.mxu0
      %vm952 = vcmp.ge.f32.partialorder %v698, 0.0
      %vm953 = vcmp.ge.f32.partialorder %v701, 0.0
      %vm954 = vcmp.ge.f32.partialorder %v706, 0.0
      %vm955 = vcmp.ge.f32.partialorder %v709, 0.0
      %vm956 = vcmp.ge.f32.partialorder %v714, 0.0
      %vm957 = vcmp.ge.f32.partialorder %v717, 0.0
      %vm958 = vcmp.ge.f32.partialorder %v722, 0.0
      %vm959 = vcmp.ge.f32.partialorder %v725, 0.0
      %vm960 = vcmp.ge.f32.partialorder %v730, 0.0
      %vm961 = vcmp.ge.f32.partialorder %v733, 0.0
      %vm962 = vcmp.ge.f32.partialorder %v738, 0.0
      %vm963 = vcmp.ge.f32.partialorder %v741, 0.0
      %vm964 = vcmp.ge.f32.partialorder %v746, 0.0
      %vm965 = vcmp.ge.f32.partialorder %v749, 0.0
      %vm966 = vcmp.ge.f32.partialorder %v754, 0.0
      %vm967 = vcmp.ge.f32.partialorder %v757, 0.0
      %vm968 = vcmp.ge.f32.partialorder %v762, 0.0
      %vm969 = vcmp.ge.f32.partialorder %v765, 0.0
      %vm970 = vcmp.ge.f32.partialorder %v770, 0.0
      %vm971 = vcmp.ge.f32.partialorder %v773, 0.0
      %vm972 = vcmp.ge.f32.partialorder %v778, 0.0
      %vm973 = vcmp.ge.f32.partialorder %v781, 0.0
      %vm974 = vcmp.ge.f32.partialorder %v786, 0.0
      %vm975 = vcmp.ge.f32.partialorder %v789, 0.0
      %vm976 = vcmp.ge.f32.partialorder %v794, 0.0
      %vm977 = vcmp.ge.f32.partialorder %v797, 0.0
      %vm978 = vcmp.ge.f32.partialorder %v802, 0.0
      %vm979 = vcmp.ge.f32.partialorder %v805, 0.0
      %vm980 = vcmp.ge.f32.partialorder %v810, 0.0
      %vm981 = vcmp.ge.f32.partialorder %v813, 0.0
      %vm982 = vcmp.ge.f32.partialorder %v818, 0.0
      %vm983 = vcmp.ge.f32.partialorder %v821, 0.0
      %vm984 = vcmp.ge.f32.partialorder %v826, 0.0
      %vm985 = vcmp.ge.f32.partialorder %v829, 0.0
      %vm986 = vcmp.ge.f32.partialorder %v834, 0.0
      %vm987 = vcmp.ge.f32.partialorder %v837, 0.0
      %vm988 = vcmp.ge.f32.partialorder %v842, 0.0
      %vm989 = vcmp.ge.f32.partialorder %v845, 0.0
      %vm990 = vcmp.ge.f32.partialorder %v850, 0.0
      %vm991 = vcmp.ge.f32.partialorder %v853, 0.0
      %vm992 = vcmp.ge.f32.partialorder %v858, 0.0
      %vm993 = vcmp.ge.f32.partialorder %v861, 0.0
      %vm994 = vcmp.ge.f32.partialorder %v866, 0.0
      %vm995 = vcmp.ge.f32.partialorder %v869, 0.0
      %vm996 = vcmp.ge.f32.partialorder %v874, 0.0
      %vm997 = vcmp.ge.f32.partialorder %v877, 0.0
      %vm998 = vcmp.ge.f32.partialorder %v882, 0.0
      %vm999 = vcmp.ge.f32.partialorder %v885, 0.0
      %vm1000 = vcmp.ge.f32.partialorder %v890, 0.0
      %vm1001 = vcmp.ge.f32.partialorder %v893, 0.0
      %vm1002 = vcmp.ge.f32.partialorder %v898, 0.0
      %vm1003 = vcmp.ge.f32.partialorder %v901, 0.0
      %vm1004 = vcmp.ge.f32.partialorder %v906, 0.0
      %vm1005 = vcmp.ge.f32.partialorder %v909, 0.0
      %vm1006 = vcmp.ge.f32.partialorder %v914, 0.0
      %vm1007 = vcmp.ge.f32.partialorder %v917, 0.0
      %vm1008 = vcmp.ge.f32.partialorder %v922, 0.0
      %vm1009 = vcmp.ge.f32.partialorder %v925, 0.0
      %vm1010 = vcmp.ge.f32.partialorder %v930, 0.0
      %vm1011 = vcmp.ge.f32.partialorder %v933, 0.0
      %vm1012 = vcmp.ge.f32.partialorder %v938, 0.0
      %vm1013 = vcmp.ge.f32.partialorder %v941, 0.0
      %vm1014 = vcmp.ge.f32.partialorder %v946, 0.0
      %vm1015 = vcmp.ge.f32.partialorder %v949, 0.0
      %v1016 = vmul.f32 %v698, 0.2
      %v1017 = vmul.f32 %v701, 0.2
      %v1018 = vmul.f32 %v706, 0.2
      %v1019 = vmul.f32 %v709, 0.2
      %v1020 = vmul.f32 %v714, 0.2
      %v1021 = vmul.f32 %v717, 0.2
      %v1022 = vmul.f32 %v722, 0.2
      %v1023 = vmul.f32 %v725, 0.2
      %v1024 = vmul.f32 %v730, 0.2
      %v1025 = vmul.f32 %v733, 0.2
      %v1026 = vmul.f32 %v738, 0.2
      %v1027 = vmul.f32 %v741, 0.2
      %v1028 = vmul.f32 %v746, 0.2
      %v1029 = vmul.f32 %v749, 0.2
      %v1030 = vmul.f32 %v754, 0.2
      %v1031 = vmul.f32 %v757, 0.2
      %v1032 = vmul.f32 %v762, 0.2
      %v1033 = vmul.f32 %v765, 0.2
      %v1034 = vmul.f32 %v770, 0.2
      %v1035 = vmul.f32 %v773, 0.2
      %v1036 = vmul.f32 %v778, 0.2
      %v1037 = vmul.f32 %v781, 0.2
      %v1038 = vmul.f32 %v786, 0.2
      %v1039 = vmul.f32 %v789, 0.2
      %v1040 = vmul.f32 %v794, 0.2
      %v1041 = vmul.f32 %v797, 0.2
      %v1042 = vmul.f32 %v802, 0.2
      %v1043 = vmul.f32 %v805, 0.2
      %v1044 = vmul.f32 %v810, 0.2
      %v1045 = vmul.f32 %v813, 0.2
      %v1046 = vmul.f32 %v818, 0.2
      %v1047 = vmul.f32 %v821, 0.2
      %v1048 = vmul.f32 %v826, 0.2
      %v1049 = vmul.f32 %v829, 0.2
      %v1050 = vmul.f32 %v834, 0.2
      %v1051 = vmul.f32 %v837, 0.2
      %v1052 = vmul.f32 %v842, 0.2
      %v1053 = vmul.f32 %v845, 0.2
      %v1054 = vmul.f32 %v850, 0.2
      %v1055 = vmul.f32 %v853, 0.2
      %v1056 = vmul.f32 %v858, 0.2
      %v1057 = vmul.f32 %v861, 0.2
      %v1058 = vmul.f32 %v866, 0.2
      %v1059 = vmul.f32 %v869, 0.2
      %v1060 = vmul.f32 %v874, 0.2
      %v1061 = vmul.f32 %v877, 0.2
      %v1062 = vmul.f32 %v882, 0.2
      %v1063 = vmul.f32 %v885, 0.2
      %v1064 = vmul.f32 %v890, 0.2
      %v1065 = vmul.f32 %v893, 0.2
      %v1066 = vmul.f32 %v898, 0.2
      %v1067 = vmul.f32 %v901, 0.2
      %v1068 = vmul.f32 %v906, 0.2
      %v1069 = vmul.f32 %v909, 0.2
      %v1070 = vmul.f32 %v914, 0.2
      %v1071 = vmul.f32 %v917, 0.2
      %v1072 = vmul.f32 %v922, 0.2
      %v1073 = vmul.f32 %v925, 0.2
      %v1074 = vmul.f32 %v930, 0.2
      %v1075 = vmul.f32 %v933, 0.2
      %v1076 = vmul.f32 %v938, 0.2
      %v1077 = vmul.f32 %v941, 0.2
      %v1078 = vmul.f32 %v946, 0.2
      %v1079 = vmul.f32 %v949, 0.2
      %v1080 = vsel %vm952, %v698, %v1016
      %v1081 = vsel %vm953, %v701, %v1017
      %v1082 = vsel %vm954, %v706, %v1018
      %v1083 = vsel %vm955, %v709, %v1019
      %v1084 = vsel %vm956, %v714, %v1020
      %v1085 = vsel %vm957, %v717, %v1021
      %v1086 = vsel %vm958, %v722, %v1022
      %v1087 = vsel %vm959, %v725, %v1023
      %v1088 = vsel %vm960, %v730, %v1024
      %v1089 = vsel %vm961, %v733, %v1025
      %v1090 = vsel %vm962, %v738, %v1026
      %v1091 = vsel %vm963, %v741, %v1027
      %v1092 = vsel %vm964, %v746, %v1028
      %v1093 = vsel %vm965, %v749, %v1029
      %v1094 = vsel %vm966, %v754, %v1030
      %v1095 = vsel %vm967, %v757, %v1031
      %v1096 = vsel %vm968, %v762, %v1032
      %v1097 = vsel %vm969, %v765, %v1033
      %v1098 = vsel %vm970, %v770, %v1034
      %v1099 = vsel %vm971, %v773, %v1035
      %v1100 = vsel %vm972, %v778, %v1036
      %v1101 = vsel %vm973, %v781, %v1037
      %v1102 = vsel %vm974, %v786, %v1038
      %v1103 = vsel %vm975, %v789, %v1039
      %v1104 = vsel %vm976, %v794, %v1040
      %v1105 = vsel %vm977, %v797, %v1041
      %v1106 = vsel %vm978, %v802, %v1042
      %v1107 = vsel %vm979, %v805, %v1043
      %v1108 = vsel %vm980, %v810, %v1044
      %v1109 = vsel %vm981, %v813, %v1045
      %v1110 = vsel %vm982, %v818, %v1046
      %v1111 = vsel %vm983, %v821, %v1047
      %v1112 = vsel %vm984, %v826, %v1048
      %v1113 = vsel %vm985, %v829, %v1049
      %v1114 = vsel %vm986, %v834, %v1050
      %v1115 = vsel %vm987, %v837, %v1051
      %v1116 = vsel %vm988, %v842, %v1052
      %v1117 = vsel %vm989, %v845, %v1053
      %v1118 = vsel %vm990, %v850, %v1054
      %v1119 = vsel %vm991, %v853, %v1055
      %v1120 = vsel %vm992, %v858, %v1056
      %v1121 = vsel %vm993, %v861, %v1057
      %v1122 = vsel %vm994, %v866, %v1058
      %v1123 = vsel %vm995, %v869, %v1059
      %v1124 = vsel %vm996, %v874, %v1060
      %v1125 = vsel %vm997, %v877, %v1061
      %v1126 = vsel %vm998, %v882, %v1062
      %v1127 = vsel %vm999, %v885, %v1063
      %v1128 = vsel %vm1000, %v890, %v1064
      %v1129 = vsel %vm1001, %v893, %v1065
      %v1130 = vsel %vm1002, %v898, %v1066
      %v1131 = vsel %vm1003, %v901, %v1067
      %v1132 = vsel %vm1004, %v906, %v1068
      %v1133 = vsel %vm1005, %v909, %v1069
      %v1134 = vsel %vm1006, %v914, %v1070
      %v1135 = vsel %vm1007, %v917, %v1071
      %v1136 = vsel %vm1008, %v922, %v1072
      %v1137 = vsel %vm1009, %v925, %v1073
      %v1138 = vsel %vm1010, %v930, %v1074
      %v1139 = vsel %vm1011, %v933, %v1075
      %v1140 = vsel %vm1012, %v938, %v1076
      %v1141 = vsel %vm1013, %v941, %v1077
      %v1142 = vsel %vm1014, %v946, %v1078
      %v1143 = vsel %vm1015, %v949, %v1079
      %v1144 = vpack.c.bf16 %v1081, %v1080
      %v1145 = vpack.c.bf16 %v1083, %v1082
      %v1146 = vpack.c.bf16 %v1085, %v1084
      %v1147 = vpack.c.bf16 %v1087, %v1086
      %v1148 = vpack.c.bf16 %v1089, %v1088
      %v1149 = vpack.c.bf16 %v1091, %v1090
      %v1150 = vpack.c.bf16 %v1093, %v1092
      %v1151 = vpack.c.bf16 %v1095, %v1094
      %v1152 = vpack.c.bf16 %v1097, %v1096
      %v1153 = vpack.c.bf16 %v1099, %v1098
      %v1154 = vpack.c.bf16 %v1101, %v1100
      %v1155 = vpack.c.bf16 %v1103, %v1102
      %v1156 = vpack.c.bf16 %v1105, %v1104
      %v1157 = vpack.c.bf16 %v1107, %v1106
      %v1158 = vpack.c.bf16 %v1109, %v1108
      %v1159 = vpack.c.bf16 %v1111, %v1110
      %v1160 = vpack.c.bf16 %v1113, %v1112
      %v1161 = vpack.c.bf16 %v1115, %v1114
      %v1162 = vpack.c.bf16 %v1117, %v1116
      %v1163 = vpack.c.bf16 %v1119, %v1118
      %v1164 = vpack.c.bf16 %v1121, %v1120
      %v1165 = vpack.c.bf16 %v1123, %v1122
      %v1166 = vpack.c.bf16 %v1125, %v1124
      %v1167 = vpack.c.bf16 %v1127, %v1126
      %v1168 = vpack.c.bf16 %v1129, %v1128
      %v1169 = vpack.c.bf16 %v1131, %v1130
      %v1170 = vpack.c.bf16 %v1133, %v1132
      %v1171 = vpack.c.bf16 %v1135, %v1134
      %v1172 = vpack.c.bf16 %v1137, %v1136
      %v1173 = vpack.c.bf16 %v1139, %v1138
      %v1174 = vpack.c.bf16 %v1141, %v1140
      %v1175 = vpack.c.bf16 %v1143, %v1142
      %v1208 = vunpack.c.l.b16 %v1144
      %v1209 = vunpack.c.h.b16 %v1144
      %v1210 = vunpack.c.l.b16 %v1145
      %v1211 = vunpack.c.h.b16 %v1145
      %v1212 = vunpack.c.l.b16 %v1146
      %v1213 = vunpack.c.h.b16 %v1146
      %v1214 = vunpack.c.l.b16 %v1147
      %v1215 = vunpack.c.h.b16 %v1147
      %v1216 = vunpack.c.l.b16 %v1148
      %v1217 = vunpack.c.h.b16 %v1148
      %v1218 = vunpack.c.l.b16 %v1149
      %v1219 = vunpack.c.h.b16 %v1149
      %v1220 = vunpack.c.l.b16 %v1150
      %v1221 = vunpack.c.h.b16 %v1150
      %v1222 = vunpack.c.l.b16 %v1151
      %v1223 = vunpack.c.h.b16 %v1151
      %v1224 = vunpack.c.l.b16 %v1152
      %v1225 = vunpack.c.h.b16 %v1152
      %v1226 = vunpack.c.l.b16 %v1153
      %v1227 = vunpack.c.h.b16 %v1153
      %v1228 = vunpack.c.l.b16 %v1154
      %v1229 = vunpack.c.h.b16 %v1154
      %v1230 = vunpack.c.l.b16 %v1155
      %v1231 = vunpack.c.h.b16 %v1155
      %v1232 = vunpack.c.l.b16 %v1156
      %v1233 = vunpack.c.h.b16 %v1156
      %v1234 = vunpack.c.l.b16 %v1157
      %v1235 = vunpack.c.h.b16 %v1157
      %v1236 = vunpack.c.l.b16 %v1158
      %v1237 = vunpack.c.h.b16 %v1158
      %v1238 = vunpack.c.l.b16 %v1159
      %v1239 = vunpack.c.h.b16 %v1159
      %v1240 = vunpack.c.l.b16 %v1160
      %v1241 = vunpack.c.h.b16 %v1160
      %v1242 = vunpack.c.l.b16 %v1161
      %v1243 = vunpack.c.h.b16 %v1161
      %v1244 = vunpack.c.l.b16 %v1162
      %v1245 = vunpack.c.h.b16 %v1162
      %v1246 = vunpack.c.l.b16 %v1163
      %v1247 = vunpack.c.h.b16 %v1163
      %v1248 = vunpack.c.l.b16 %v1164
      %v1249 = vunpack.c.h.b16 %v1164
      %v1250 = vunpack.c.l.b16 %v1165
      %v1251 = vunpack.c.h.b16 %v1165
      %v1252 = vunpack.c.l.b16 %v1166
      %v1253 = vunpack.c.h.b16 %v1166
      %v1254 = vunpack.c.l.b16 %v1167
      %v1255 = vunpack.c.h.b16 %v1167
      %v1256 = vunpack.c.l.b16 %v1168
      %v1257 = vunpack.c.h.b16 %v1168
      %v1258 = vunpack.c.l.b16 %v1169
      %v1259 = vunpack.c.h.b16 %v1169
      %v1260 = vunpack.c.l.b16 %v1170
      %v1261 = vunpack.c.h.b16 %v1170
      %v1262 = vunpack.c.l.b16 %v1171
      %v1263 = vunpack.c.h.b16 %v1171
      %v1264 = vunpack.c.l.b16 %v1172
      %v1265 = vunpack.c.h.b16 %v1172
      %v1266 = vunpack.c.l.b16 %v1173
      %v1267 = vunpack.c.h.b16 %v1173
      %v1268 = vunpack.c.l.b16 %v1174
      %v1269 = vunpack.c.h.b16 %v1174
      %v1270 = vunpack.c.l.b16 %v1175
      %v1271 = vunpack.c.h.b16 %v1175
      %v1272 = vpack.c.b16 %v1208, %v1208
      %v1273 = vpack.c.b16 %v1209, %v1209
      %v1274 = vpack.c.b16 %v1210, %v1210
      %v1275 = vpack.c.b16 %v1211, %v1211
      %v1276 = vpack.c.b16 %v1212, %v1212
      %v1277 = vpack.c.b16 %v1213, %v1213
      %v1278 = vpack.c.b16 %v1214, %v1214
      %v1279 = vpack.c.b16 %v1215, %v1215
      %v1280 = vpack.c.b16 %v1216, %v1216
      %v1281 = vpack.c.b16 %v1217, %v1217
      %v1282 = vpack.c.b16 %v1218, %v1218
      %v1283 = vpack.c.b16 %v1219, %v1219
      %v1284 = vpack.c.b16 %v1220, %v1220
      %v1285 = vpack.c.b16 %v1221, %v1221
      %v1286 = vpack.c.b16 %v1222, %v1222
      %v1287 = vpack.c.b16 %v1223, %v1223
      %v1288 = vpack.c.b16 %v1224, %v1224
      %v1289 = vpack.c.b16 %v1225, %v1225
      %v1290 = vpack.c.b16 %v1226, %v1226
      %v1291 = vpack.c.b16 %v1227, %v1227
      %v1292 = vpack.c.b16 %v1228, %v1228
      %v1293 = vpack.c.b16 %v1229, %v1229
      %v1294 = vpack.c.b16 %v1230, %v1230
      %v1295 = vpack.c.b16 %v1231, %v1231
      %v1296 = vpack.c.b16 %v1232, %v1232
      %v1297 = vpack.c.b16 %v1233, %v1233
      %v1298 = vpack.c.b16 %v1234, %v1234
      %v1299 = vpack.c.b16 %v1235, %v1235
      %v1300 = vpack.c.b16 %v1236, %v1236
      %v1301 = vpack.c.b16 %v1237, %v1237
      %v1302 = vpack.c.b16 %v1238, %v1238
      %v1303 = vpack.c.b16 %v1239, %v1239
      %v1304 = vpack.c.b16 %v1240, %v1240
      %v1305 = vpack.c.b16 %v1241, %v1241
      %v1306 = vpack.c.b16 %v1242, %v1242
      %v1307 = vpack.c.b16 %v1243, %v1243
      %v1308 = vpack.c.b16 %v1244, %v1244
      %v1309 = vpack.c.b16 %v1245, %v1245
      %v1310 = vpack.c.b16 %v1246, %v1246
      %v1311 = vpack.c.b16 %v1247, %v1247
      %v1312 = vpack.c.b16 %v1248, %v1248
      %v1313 = vpack.c.b16 %v1249, %v1249
      %v1314 = vpack.c.b16 %v1250, %v1250
      %v1315 = vpack.c.b16 %v1251, %v1251
      %v1316 = vpack.c.b16 %v1252, %v1252
      %v1317 = vpack.c.b16 %v1253, %v1253
      %v1318 = vpack.c.b16 %v1254, %v1254
      %v1319 = vpack.c.b16 %v1255, %v1255
      %v1320 = vpack.c.b16 %v1256, %v1256
      %v1321 = vpack.c.b16 %v1257, %v1257
      %v1322 = vpack.c.b16 %v1258, %v1258
      %v1323 = vpack.c.b16 %v1259, %v1259
      %v1324 = vpack.c.b16 %v1260, %v1260
      %v1325 = vpack.c.b16 %v1261, %v1261
      %v1326 = vpack.c.b16 %v1262, %v1262
      %v1327 = vpack.c.b16 %v1263, %v1263
      %v1328 = vpack.c.b16 %v1264, %v1264
      %v1329 = vpack.c.b16 %v1265, %v1265
      %v1330 = vpack.c.b16 %v1266, %v1266
      %v1331 = vpack.c.b16 %v1267, %v1267
      %v1332 = vpack.c.b16 %v1268, %v1268
      %v1333 = vpack.c.b16 %v1269, %v1269
      %v1334 = vpack.c.b16 %v1270, %v1270
      %v1335 = vpack.c.b16 %v1271, %v1271
      %vm1400 = vcmask 27648
      %1401 = vst.msk [vmem:[%s148] sm:$0xf] %vm1400, %v1272
      %1402 = vst.msk [vmem:[%s148 + $0x4] sm:$0xf] %vm1400, %v1273
      %1403 = vst.msk [vmem:[%s148 + $0x8] sm:$0xf] %vm1400, %v1274
      %1404 = vst.msk [vmem:[%s148 + $0xc] sm:$0xf] %vm1400, %v1275
      %1405 = vst.msk [vmem:[%s148 + $0x10] sm:$0xf] %vm1400, %v1276
      %1406 = vst.msk [vmem:[%s148 + $0x14] sm:$0xf] %vm1400, %v1277
      %1407 = vst.msk [vmem:[%s148 + $0x18] sm:$0xf] %vm1400, %v1278
      %1408 = vst.msk [vmem:[%s148 + $0x1c] sm:$0xf] %vm1400, %v1279
      %1409 = vst.msk [vmem:[%s148 + $0x20] sm:$0xf] %vm1400, %v1280
      %1410 = vst.msk [vmem:[%s148 + $0x24] sm:$0xf] %vm1400, %v1281
      %1411 = vst.msk [vmem:[%s148 + $0x28] sm:$0xf] %vm1400, %v1282
      %1412 = vst.msk [vmem:[%s148 + $0x2c] sm:$0xf] %vm1400, %v1283
      %1413 = vst.msk [vmem:[%s148 + $0x30] sm:$0xf] %vm1400, %v1284
      %1414 = vst.msk [vmem:[%s148 + $0x34] sm:$0xf] %vm1400, %v1285
      %1415 = vst.msk [vmem:[%s148 + $0x38] sm:$0xf] %vm1400, %v1286
      %1416 = vst.msk [vmem:[%s148 + $0x3c] sm:$0xf] %vm1400, %v1287
      %1417 = vst.msk [vmem:[%s148 + $0x40] sm:$0xf] %vm1400, %v1288
      %1418 = vst.msk [vmem:[%s148 + $0x44] sm:$0xf] %vm1400, %v1289
      %1419 = vst.msk [vmem:[%s148 + $0x48] sm:$0xf] %vm1400, %v1290
      %1420 = vst.msk [vmem:[%s148 + $0x4c] sm:$0xf] %vm1400, %v1291
      %1421 = vst.msk [vmem:[%s148 + $0x50] sm:$0xf] %vm1400, %v1292
      %1422 = vst.msk [vmem:[%s148 + $0x54] sm:$0xf] %vm1400, %v1293
      %1423 = vst.msk [vmem:[%s148 + $0x58] sm:$0xf] %vm1400, %v1294
      %1424 = vst.msk [vmem:[%s148 + $0x5c] sm:$0xf] %vm1400, %v1295
      %1425 = vst.msk [vmem:[%s148 + $0x60] sm:$0xf] %vm1400, %v1296
      %1426 = vst.msk [vmem:[%s148 + $0x64] sm:$0xf] %vm1400, %v1297
      %1427 = vst.msk [vmem:[%s148 + $0x68] sm:$0xf] %vm1400, %v1298
      %1428 = vst.msk [vmem:[%s148 + $0x6c] sm:$0xf] %vm1400, %v1299
      %1429 = vst.msk [vmem:[%s148 + $0x70] sm:$0xf] %vm1400, %v1300
      %1430 = vst.msk [vmem:[%s148 + $0x74] sm:$0xf] %vm1400, %v1301
      %1431 = vst.msk [vmem:[%s148 + $0x78] sm:$0xf] %vm1400, %v1302
      %1432 = vst.msk [vmem:[%s148 + $0x7c] sm:$0xf] %vm1400, %v1303
      %1433 = vst.msk [vmem:[%s148 + $0x80] sm:$0xf] %vm1400, %v1304
      %1434 = vst.msk [vmem:[%s148 + $0x84] sm:$0xf] %vm1400, %v1305
      %1435 = vst.msk [vmem:[%s148 + $0x88] sm:$0xf] %vm1400, %v1306
      %1436 = vst.msk [vmem:[%s148 + $0x8c] sm:$0xf] %vm1400, %v1307
      %1437 = vst.msk [vmem:[%s148 + $0x90] sm:$0xf] %vm1400, %v1308
      %1438 = vst.msk [vmem:[%s148 + $0x94] sm:$0xf] %vm1400, %v1309
      %1439 = vst.msk [vmem:[%s148 + $0x98] sm:$0xf] %vm1400, %v1310
      %1440 = vst.msk [vmem:[%s148 + $0x9c] sm:$0xf] %vm1400, %v1311
      %1441 = vst.msk [vmem:[%s148 + $0xa0] sm:$0xf] %vm1400, %v1312
      %1442 = vst.msk [vmem:[%s148 + $0xa4] sm:$0xf] %vm1400, %v1313
      %1443 = vst.msk [vmem:[%s148 + $0xa8] sm:$0xf] %vm1400, %v1314
      %1444 = vst.msk [vmem:[%s148 + $0xac] sm:$0xf] %vm1400, %v1315
      %1445 = vst.msk [vmem:[%s148 + $0xb0] sm:$0xf] %vm1400, %v1316
      %1446 = vst.msk [vmem:[%s148 + $0xb4] sm:$0xf] %vm1400, %v1317
      %1447 = vst.msk [vmem:[%s148 + $0xb8] sm:$0xf] %vm1400, %v1318
      %1448 = vst.msk [vmem:[%s148 + $0xbc] sm:$0xf] %vm1400, %v1319
      %1449 = vst.msk [vmem:[%s148 + $0xc0] sm:$0xf] %vm1400, %v1320
      %1450 = vst.msk [vmem:[%s148 + $0xc4] sm:$0xf] %vm1400, %v1321
      %1451 = vst.msk [vmem:[%s148 + $0xc8] sm:$0xf] %vm1400, %v1322
      %1452 = vst.msk [vmem:[%s148 + $0xcc] sm:$0xf] %vm1400, %v1323
      %1453 = vst.msk [vmem:[%s148 + $0xd0] sm:$0xf] %vm1400, %v1324
      %1454 = vst.msk [vmem:[%s148 + $0xd4] sm:$0xf] %vm1400, %v1325
      %1455 = vst.msk [vmem:[%s148 + $0xd8] sm:$0xf] %vm1400, %v1326
      %1456 = vst.msk [vmem:[%s148 + $0xdc] sm:$0xf] %vm1400, %v1327
      %1457 = vst.msk [vmem:[%s148 + $0xe0] sm:$0xf] %vm1400, %v1328
      %1458 = vst.msk [vmem:[%s148 + $0xe4] sm:$0xf] %vm1400, %v1329
      %1459 = vst.msk [vmem:[%s148 + $0xe8] sm:$0xf] %vm1400, %v1330
      %1460 = vst.msk [vmem:[%s148 + $0xec] sm:$0xf] %vm1400, %v1331
      %1461 = vst.msk [vmem:[%s148 + $0xf0] sm:$0xf] %vm1400, %v1332
      %1462 = vst.msk [vmem:[%s148 + $0xf4] sm:$0xf] %vm1400, %v1333
      %1463 = vst.msk [vmem:[%s148 + $0xf8] sm:$0xf] %vm1400, %v1334
      %1464 = vst.msk [vmem:[%s148 + $0xfc] sm:$0xf] %vm1400, %v1335
      %s1465 = smul.u32 64, %s13
      %p1466 = scmp.lt.s32.totalorder %s1465, 127
      %s1467 = scalar_select %p1466, %s1465, 127
      %s1468 = smul.addr %s1467, 4
      %s1469 = scalar_lea.vmem %s2, %s1468
      // Predicated region
      $region29: #{_lambda_.5} parent=27 // pred_check
        %p1470 = pneg %p78
      $region30: #{_lambda_.5} parent=27 // pred_check_branch
        %1472 = sbr.rel (%p1470) target = $region32
      $region31: #{_lambda_.5} parent=27 // pred_region
        %s1473 = smul.u32 64, %s13
      $region32: #{_lambda_.5} parent=27 // pred_fallthru
        _
    $region28: #{_lambda_.5} parent=5 // pred_fallthru
      _
    %p1474 = scmp.le.s32.totalorder 2, %s8
    // Predicated region
    $region33: #{_lambda_.5} parent=5 // pred_check
      %p1475 = pneg %p1474
    $region34: #{_lambda_.5} parent=5 // pred_check_branch
      %1477 = sbr.rel (%p1475) target = $region36
    $region35: #{_lambda_.5} parent=5 // pred_region
      %s1478 = ssub.s32 %s8, 2
      // Predicated region
      $region37: #{_lambda_.5} parent=35 // pred_check
        %p1479 = pneg %p84
      $region38: #{_lambda_.5} parent=35 // pred_check_branch
        %1481 = sbr.rel (%p1479) target = $region40
      $region39: #{_lambda_.5} parent=35 // pred_region
        %s1482 = smul.u32 64, %s14
        %p1483 = scmp.lt.s32.totalorder %s1482, 127
        %s1484 = scalar_select %p1483, %s1482, 127
        %s1485 = smul.addr %s1484, 4
        %s1486 = scalar_lea.vmem %s2, %s1485
      $region40: #{_lambda_.5} parent=35 // pred_fallthru
        _
    $region36: #{_lambda_.5} parent=5 // pred_fallthru
      _
  $region6: #{_lambda_.5} parent=0 // loop_footer
    %s12 = sadd.s32 1, %s8
  $region7: #{_lambda_.5} parent=0 // loop_footer_branch
    %7 = sbr.rel target = $region3
  $region8: #{_lambda_.5} parent=0 // loop_exit
    _

// kernel: _lambda_.6
$region0: #{_lambda_.6}
  #allocation0 [shape = 'u32[]', space=smem, size = 0x4, offset = 0x4, fixed_abs, tag = 'smem constant byte address 0x4 - core index']
  #allocation1 [shape = 'u32[144,128]{1,0:T(1,128)}', space=vmem, size = 0x12000, scoped, tag = 'internal scratch']
  %s0 = inlined_call_operand.vmem [shape: bf16[128,256], index: 0, kind: input, shape index: {}]
  %s1 = inlined_call_operand.vmem [shape: bf16[256,8], index: 1, kind: input, shape index: {}]
  %s2 = inlined_call_operand.vmem [shape: bf16[128,8], index: 2, kind: output, shape index: {}]
  %s3 = sld [smem:[#allocation0]]
  $region41: #{_lambda_.6} parent=0
    _
  %s5 = ssub.s32 1, %s3
  %s6 = scalar_select 0, %s5, %s3
  loop: start=0, step=1, limit=4
  $region2: #{_lambda_.6} parent=0 // loop_pre_header
    _
  $region3: #{_lambda_.6} parent=0 // loop_header
    %s8 = sphi 0, %s12
    %p9 = scmp.ge.s32.totalorder %s8, 4
    %s18 = sphi 0, %s20
    %s21 = sphi 0, %s18
    %s22 = sphi 0, %s21
    %s38 = sphi 0, %s22
    %s42 = sphi 0, %s42
    %s44 = sphi 0, %s42
    %s45 = sphi 0, %s44
    %s59 = sphi 0, %s45
    %s65 = sphi 0, %s67
    %s68 = sphi 0, %s65
    %s69 = sphi 0, %s68
    %s85 = sphi 0, %s69
  $region4: #{_lambda_.6} parent=0 // loop_header_branch
    %11 = sbr.rel (%p9) target = $region8
  $region5: #{_lambda_.6} parent=0 // loop_body
    %s13 = ssub.s32 %s8, 1
    %s14 = ssub.s32 %s8, 2
    %s15 = sadd.s32 %s8, 1
    %s16 = ssub.s32 %s8, %s15
    %p17 = scmp.eq.s32.totalorder %s16, 0
    %s19 = sadd.s32 %s18, 1
    %s20 = scalar_select %p17, %s18, %s19
    %p23 = pneg %p17
    %p24 = scmp.eq.s32.totalorder %s8, 1
    %p25 = por %p23, %p24
    %p26 = scmp.ne.s32.totalorder %s18, %s21
    %p27 = scmp.eq.s32.totalorder %s8, 0
    %p28 = por %p26, %p27
    %p29 = scmp.ne.s32.totalorder %s18, %s21
    %p30 = scmp.eq.s32.totalorder %s13, 1
    %p31 = por %p29, %p30
    %p32 = scmp.ne.s32.totalorder %s21, %s22
    %p33 = scmp.eq.s32.totalorder %s13, 0
    %p34 = por %p32, %p33
    %p35 = scmp.ne.s32.totalorder %s21, %s22
    %p36 = scmp.eq.s32.totalorder %s14, 1
    %p37 = por %p35, %p36
    %p39 = scmp.ne.s32.totalorder %s22, %s38
    %p40 = scmp.eq.s32.totalorder %s14, 0
    %p41 = por %p39, %p40
    %s43 = sadd.s32 %s42, 1
    %p46 = scmp.eq.s32.totalorder %s8, 1
    %p47 = scmp.ne.s32.totalorder %s42, %s44
    %p48 = scmp.eq.s32.totalorder %s8, 0
    %p49 = por %p47, %p48
    %p50 = scmp.ne.s32.totalorder %s42, %s44
    %p51 = scmp.eq.s32.totalorder %s13, 1
    %p52 = por %p50, %p51
    %p53 = scmp.ne.s32.totalorder %s44, %s45
    %p54 = scmp.eq.s32.totalorder %s13, 0
    %p55 = por %p53, %p54
    %p56 = scmp.ne.s32.totalorder %s44, %s45
    %p57 = scmp.eq.s32.totalorder %s14, 1
    %p58 = por %p56, %p57
    %p60 = scmp.ne.s32.totalorder %s45, %s59
    %p61 = scmp.eq.s32.totalorder %s14, 0
    %p62 = por %p60, %p61
    %s63 = ssub.s32 %s8, %s15
    %p64 = scmp.eq.s32.totalorder %s63, 0
    %s66 = sadd.s32 %s65, 1
    %s67 = scalar_select %p64, %s65, %s66
    %p70 = pneg %p64
    %p71 = scmp.eq.s32.totalorder %s8, 1
    %p72 = por %p70, %p71
    %p73 = scmp.ne.s32.totalorder %s65, %s68
    %p74 = scmp.eq.s32.totalorder %s8, 0
    %p75 = por %p73, %p74
    %p76 = scmp.ne.s32.totalorder %s65, %s68
    %p77 = scmp.eq.s32.totalorder %s13, 1
    %p78 = por %p76, %p77
    %p79 = scmp.ne.s32.totalorder %s68, %s69
    %p80 = scmp.eq.s32.totalorder %s13, 0
    %p81 = por %p79, %p80
    %p82 = scmp.ne.s32.totalorder %s68, %s69
    %p83 = scmp.eq.s32.totalorder %s14, 1
    %p84 = por %p82, %p83
    %p86 = scmp.ne.s32.totalorder %s69, %s85
    %p87 = scmp.eq.s32.totalorder %s14, 0
    %p88 = por %p86, %p87
    %p89 = scmp.le.s32.totalorder 1, %s8
    %p90 = scmp.lt.s32.totalorder %s8, 3
    %p91 = pnand %p89, %p90
    %p92 = pneg %p91
    // Predicated region
    $region9: #{_lambda_.6} parent=5 // pred_check
      _
    $region10: #{_lambda_.6} parent=5 // pred_check_branch
      %94 = sbr.rel (%p91) target = $region12
    $region11: #{_lambda_.6} parent=5 // pred_region
      %s95 = ssub.s32 %s8, 1
      // Predicated region
      $region13: #{_lambda_.6} parent=11 // pred_check
        %p96 = pneg %p55
      $region14: #{_lambda_.6} parent=11 // pred_check_branch
        %98 = sbr.rel (%p96) target = $region16
      $region15: #{_lambda_.6} parent=11 // pred_region
        _
      $region16: #{_lambda_.6} parent=11 // pred_fallthru
        _
    $region12: #{_lambda_.6} parent=5 // pred_fallthru
      _
    %p99 = scmp.lt.s32.totalorder %s8, 2
    // Predicated region
    $region17: #{_lambda_.6} parent=5 // pred_check
      %p100 = pneg %p99
    $region18: #{_lambda_.6} parent=5 // pred_check_branch
      %102 = sbr.rel (%p100) target = $region20
    $region19: #{_lambda_.6} parent=5 // pred_region
      // Predicated region
      $region21: #{_lambda_.6} parent=19 // pred_check
        %p103 = pneg %p28
      $region22: #{_lambda_.6} parent=19 // pred_check_branch
        %105 = sbr.rel (%p103) target = $region24
      $region23: #{_lambda_.6} parent=19 // pred_region
        %s106 = smul.u32 8, %s8
        %p107 = scmp.lt.s32.totalorder %s106, 15
        %s108 = scalar_select %p107, %s106, 15
        %s109 = smul.addr %s108, 2
        %s110 = smul.addr %s109, 4
        %s111 = scalar_lea.vmem %s0, %s110
        %s112 = smul.u32 8, %s8
      $region24: #{_lambda_.6} parent=19 // pred_fallthru
        _
    $region20: #{_lambda_.6} parent=5 // pred_fallthru
      _
    %p113 = scmp.le.s32.totalorder 1, %s8
    %p114 = scmp.lt.s32.totalorder %s8, 3
    %p115 = pnand %p113, %p114
    %p116 = pneg %p115
    // Predicated region
    $region25: #{_lambda_.6} parent=5 // pred_check
      _
    $region26: #{_lambda_.6} parent=5 // pred_check_branch
      %118 = sbr.rel (%p115) target = $region28
    $region27: #{_lambda_.6} parent=5 // pred_region
      %s119 = ssub.s32 %s8, 1
      %s120 = smul.u32 8, %s13
      %p121 = scmp.lt.s32.totalorder %s120, 15
      %s122 = scalar_select %p121, %s120, 15
      %s123 = smul.addr %s122, 2
      %s124 = smul.addr %s123, 4
      %s125 = scalar_lea.vmem %s0, %s124
      %p126 = pneg %p34
      %p127 = pneg %p31
      %p128 = pneg %p55
      %p129 = pneg %p52
      %p130 = pneg %p81
      %p131 = pneg %p78
      %s132 = smul.u32 8, %s13
      %p133 = scmp.lt.s32.totalorder %s132, 15
      %s134 = scalar_select %p133, %s132, 15
      %s135 = smul.addr %s134, 4
      %s136 = scalar_lea.vmem %s2, %s135
      %s137 = smul.u32 8, %s13
      %p138 = scmp.lt.s32.totalorder %s137, 15
      %s139 = scalar_select %p138, %s137, 15
      %s140 = smul.addr %s139, 2
      %s141 = smul.addr %s140, 4
      %s142 = scalar_lea.vmem %s0, %s141
      %s143 = smul.u32 8, %s13
      %s144 = smul.u32 8, %s13
      %p145 = scmp.lt.s32.totalorder %s144, 15
      %s146 = scalar_select %p145, %s144, 15
      %s147 = smul.addr %s146, 4
      %s148 = scalar_lea.vmem %s2, %s147
      %s149 = smul.u32 8, %s13
      %v151 = vld [vmem:[%s142] sm:$0xff]
      %v152 = vld [vmem:[%s142 + $0x8] sm:$0xff]
      %v153 = vld [vmem:[%s142 + $0x10] sm:$0xff]
      %v154 = vld [vmem:[%s142 + $0x18] sm:$0xff]
      %v155 = vld [vmem:[%s142 + $0x20] sm:$0xff]
      %v156 = vld [vmem:[%s142 + $0x28] sm:$0xff]
      %v157 = vld [vmem:[%s142 + $0x30] sm:$0xff]
      %v158 = vld [vmem:[%s142 + $0x38] sm:$0xff]
      %v159 = vld [vmem:[%s1] sm:$0xf]
      %v160 = vld [vmem:[%s1 + $0x4] sm:$0xf]
      %v161 = vld [vmem:[%s1 + $0x8] sm:$0xf]
      %v162 = vld [vmem:[%s1 + $0xc] sm:$0xf]
      %v163 = vld [vmem:[%s1 + $0x10] sm:$0xf]
      %v164 = vld [vmem:[%s1 + $0x14] sm:$0xf]
      %v165 = vld [vmem:[%s1 + $0x18] sm:$0xf]
      %v166 = vld [vmem:[%s1 + $0x1c] sm:$0xf]
      %v167 = vld [vmem:[%s1 + $0x20] sm:$0xf]
      %v168 = vld [vmem:[%s1 + $0x24] sm:$0xf]
      %v169 = vld [vmem:[%s1 + $0x28] sm:$0xf]
      %v170 = vld [vmem:[%s1 + $0x2c] sm:$0xf]
      %v171 = vld [vmem:[%s1 + $0x30] sm:$0xf]
      %v172 = vld [vmem:[%s1 + $0x34] sm:$0xf]
      %v173 = vld [vmem:[%s1 + $0x38] sm:$0xf]
      %v174 = vld [vmem:[%s1 + $0x3c] sm:$0xf]
      %v175 = vld [vmem:[%s1 + $0x40] sm:$0xf]
      %v176 = vld [vmem:[%s1 + $0x44] sm:$0xf]
      %v177 = vld [vmem:[%s1 + $0x48] sm:$0xf]
      %v178 = vld [vmem:[%s1 + $0x4c] sm:$0xf]
      %v179 = vld [vmem:[%s1 + $0x50] sm:$0xf]
      %v180 = vld [vmem:[%s1 + $0x54] sm:$0xf]
      %v181 = vld [vmem:[%s1 + $0x58] sm:$0xf]
      %v182 = vld [vmem:[%s1 + $0x5c] sm:$0xf]
      %v183 = vld [vmem:[%s1 + $0x60] sm:$0xf]
      %v184 = vld [vmem:[%s1 + $0x64] sm:$0xf]
      %v185 = vld [vmem:[%s1 + $0x68] sm:$0xf]
      %v186 = vld [vmem:[%s1 + $0x6c] sm:$0xf]
      %v187 = vld [vmem:[%s1 + $0x70] sm:$0xf]
      %v188 = vld [vmem:[%s1 + $0x74] sm:$0xf]
      %v189 = vld [vmem:[%s1 + $0x78] sm:$0xf]
      %v190 = vld [vmem:[%s1 + $0x7c] sm:$0xf]
      %v199 = vunpack.c.l.b16 %v151
      %v200 = vunpack.c.h.b16 %v151
      %v201 = vunpack.c.l.b16 %v152
      %v202 = vunpack.c.h.b16 %v152
      %v203 = vunpack.c.l.b16 %v153
      %v204 = vunpack.c.h.b16 %v153
      %v205 = vunpack.c.l.b16 %v154
      %v206 = vunpack.c.h.b16 %v154
      %v207 = vunpack.c.l.b16 %v155
      %v208 = vunpack.c.h.b16 %v155
      %v209 = vunpack.c.l.b16 %v156
      %v210 = vunpack.c.h.b16 %v156
      %v211 = vunpack.c.l.b16 %v157
      %v212 = vunpack.c.h.b16 %v157
      %v213 = vunpack.c.l.b16 %v158
      %v214 = vunpack.c.h.b16 %v158
      %v215 = vpack.c.b16 %v201, %v199
      %v216 = vpack.c.b16 %v202, %v200
      %v217 = vpack.c.b16 %v205, %v203
      %v218 = vpack.c.b16 %v206, %v204
      %v219 = vpack.c.b16 %v209, %v207
      %v220 = vpack.c.b16 %v210, %v208
      %v221 = vpack.c.b16 %v213, %v211
      %v222 = vpack.c.b16 %v214, %v212
      %v263 = vunpack.c.l.b16 %v159
      %v264 = vunpack.c.l.b16 %v160
      %v265 = vunpack.c.l.b16 %v161
      %v266 = vunpack.c.l.b16 %v162
      %v267 = vunpack.c.l.b16 %v163
      %v268 = vunpack.c.l.b16 %v164
      %v269 = vunpack.c.l.b16 %v165
      %v270 = vunpack.c.l.b16 %v166
      %v271 = vunpack.c.l.b16 %v167
      %v272 = vunpack.c.l.b16 %v168
      %v273 = vunpack.c.l.b16 %v169
      %v274 = vunpack.c.l.b16 %v170
      %v275 = vunpack.c.l.b16 %v171
      %v276 = vunpack.c.l.b16 %v172
      %v277 = vunpack.c.l.b16 %v173
      %v278 = vunpack.c.l.b16 %v174
      %v279 = vunpack.c.l.b16 %v175
      %v280 = vunpack.c.l.b16 %v176
      %v281 = vunpack.c.l.b16 %v177
      %v282 = vunpack.c.l.b16 %v178
      %v283 = vunpack.c.l.b16 %v179
      %v284 = vunpack.c.l.b16 %v180
      %v285 = vunpack.c.l.b16 %v181
      %v286 = vunpack.c.l.b16 %v182
      %v287 = vunpack.c.l.b16 %v183
      %v288 = vunpack.c.l.b16 %v184
      %v289 = vunpack.c.l.b16 %v185
      %v290 = vunpack.c.l.b16 %v186
      %v291 = vunpack.c.l.b16 %v187
      %v292 = vunpack.c.l.b16 %v188
      %v293 = vunpack.c.l.b16 %v189
      %v294 = vunpack.c.l.b16 %v190
      %v295 = vpack.c.b16 %v264, %v263
      %v296 = vpack.c.b16 %v266, %v265
      %v297 = vpack.c.b16 %v268, %v267
      %v298 = vpack.c.b16 %v270, %v269
      %v299 = vpack.c.b16 %v272, %v271
      %v300 = vpack.c.b16 %v274, %v273
      %v301 = vpack.c.b16 %v276, %v275
      %v302 = vpack.c.b16 %v278, %v277
      %v303 = vpack.c.b16 %v280, %v279
      %v304 = vpack.c.b16 %v282, %v281
      %v305 = vpack.c.b16 %v284, %v283
      %v306 = vpack.c.b16 %v286, %v285
      %v307 = vpack.c.b16 %v288, %v287
      %v308 = vpack.c.b16 %v290, %v289
      %v309 = vpack.c.b16 %v292, %v291
      %v310 = vpack.c.b16 %v294, %v293
      %327 = vmatprep.subr.bf16.mxu0 0
      %328 = vmatpush1.bf16.msra.mxu0 %v295
      %329 = vmatprep.subr.bf16.mxu0 0
      %330 = vmatpush1.bf16.msra.mxu0 %v296
      %331 = vmatprep.subr.bf16.mxu0 0
      %332 = vmatpush1.bf16.msra.mxu0 %v297
      %333 = vmatprep.subr.bf16.mxu0 0
      %334 = vmatpush1.bf16.msra.mxu0 %v298
      %335 = vmatprep.subr.bf16.mxu0 0
      %336 = vmatpush1.bf16.msra.mxu0 %v299
      %337 = vmatprep.subr.bf16.mxu0 0
      %338 = vmatpush1.bf16.msra.mxu0 %v300
      %339 = vmatprep.subr.bf16.mxu0 0
      %340 = vmatpush1.bf16.msra.mxu0 %v301
      %341 = vmatprep.subr.bf16.mxu0 0
      %342 = vmatpush1.bf16.msra.mxu0 %v302
      %343 = vmatprep.subr.bf16.mxu0 0
      %344 = vmatpush1.bf16.msra.mxu0 %v303
      %345 = vmatprep.subr.bf16.mxu0 0
      %346 = vmatpush1.bf16.msra.mxu0 %v304
      %347 = vmatprep.subr.bf16.mxu0 0
      %348 = vmatpush1.bf16.msra.mxu0 %v305
      %349 = vmatprep.subr.bf16.mxu0 0
      %350 = vmatpush1.bf16.msra.mxu0 %v306
      %351 = vmatprep.subr.bf16.mxu0 0
      %352 = vmatpush1.bf16.msra.mxu0 %v307
      %353 = vmatprep.subr.bf16.mxu0 0
      %354 = vmatpush1.bf16.msra.mxu0 %v308
      %355 = vmatprep.subr.bf16.mxu0 0
      %356 = vmatpush1.bf16.msra.mxu0 %v309
      %357 = vmatprep.subr.bf16.mxu0 0
      %358 = vmatpush1.bf16.msra.mxu0 %v310
      %359 = vmatprep.mubr.bf16.mxu0 %v216
      %360 = vmatmul.mubr.bf16.gmra.mrb[0].mxu0 %v215
      %v361 = vpop.f32.mrb[0].mxu0
      %v362 = vadd.f32 0.0, %v361
      %v363 = vpop.f32.mrb[0].mxu0
      %v364 = vpop.f32.mrb[0].mxu0
      %v365 = vadd.f32 0.0, %v364
      %v366 = vpop.f32.mrb[0].mxu0
      %367 = vmatprep.mubr.bf16.mxu0 %v218
      %368 = vmatmul.mubr.bf16.gmra.mrb[0].mxu0 %v217
      %v369 = vpop.f32.mrb[0].mxu0
      %v370 = vadd.f32 0.0, %v369
      %v371 = vpop.f32.mrb[0].mxu0
      %v372 = vpop.f32.mrb[0].mxu0
      %v373 = vadd.f32 0.0, %v372
      %v374 = vpop.f32.mrb[0].mxu0
      %375 = vmatprep.mubr.bf16.mxu0 %v220
      %376 = vmatmul.mubr.bf16.gmra.mrb[0].mxu0 %v219
      %v377 = vpop.f32.mrb[0].mxu0
      %v378 = vadd.f32 0.0, %v377
      %v379 = vpop.f32.mrb[0].mxu0
      %v380 = vpop.f32.mrb[0].mxu0
      %v381 = vadd.f32 0.0, %v380
      %v382 = vpop.f32.mrb[0].mxu0
      %383 = vmatprep.mubr.bf16.mxu0 %v222
      %384 = vmatmul.mubr.bf16.gmra.mrb[0].mxu0 %v221
      %v385 = vpop.f32.mrb[0].mxu0
      %v386 = vadd.f32 0.0, %v385
      %v387 = vpop.f32.mrb[0].mxu0
      %v388 = vpop.f32.mrb[0].mxu0
      %v389 = vadd.f32 0.0, %v388
      %v390 = vpop.f32.mrb[0].mxu0
      %391 = vdwg.mxu0
      %vm392 = vcmp.ge.f32.partialorder %v362, 0.0
      %vm393 = vcmp.ge.f32.partialorder %v365, 0.0
      %vm394 = vcmp.ge.f32.partialorder %v370, 0.0
      %vm395 = vcmp.ge.f32.partialorder %v373, 0.0
      %vm396 = vcmp.ge.f32.partialorder %v378, 0.0
      %vm397 = vcmp.ge.f32.partialorder %v381, 0.0
      %vm398 = vcmp.ge.f32.partialorder %v386, 0.0
      %vm399 = vcmp.ge.f32.partialorder %v389, 0.0
      %v400 = vmul.f32 %v362, 0.2
      %v401 = vmul.f32 %v365, 0.2
      %v402 = vmul.f32 %v370, 0.2
      %v403 = vmul.f32 %v373, 0.2
      %v404 = vmul.f32 %v378, 0.2
      %v405 = vmul.f32 %v381, 0.2
      %v406 = vmul.f32 %v386, 0.2
      %v407 = vmul.f32 %v389, 0.2
      %v408 = vsel %vm392, %v362, %v400
      %v409 = vsel %vm393, %v365, %v401
      %v410 = vsel %vm394, %v370, %v402
      %v411 = vsel %vm395, %v373, %v403
      %v412 = vsel %vm396, %v378, %v404
      %v413 = vsel %vm397, %v381, %v405
      %v414 = vsel %vm398, %v386, %v406
      %v415 = vsel %vm399, %v389, %v407
      %v416 = vpack.c.bf16 %v409, %v408
      %v417 = vpack.c.bf16 %v411, %v410
      %v418 = vpack.c.bf16 %v413, %v412
      %v419 = vpack.c.bf16 %v415, %v414
      %v424 = vunpack.c.l.b16 %v416
      %v425 = vunpack.c.h.b16 %v416
      %v426 = vunpack.c.l.b16 %v417
      %v427 = vunpack.c.h.b16 %v417
      %v428 = vunpack.c.l.b16 %v418
      %v429 = vunpack.c.h.b16 %v418
      %v430 = vunpack.c.l.b16 %v419
      %v431 = vunpack.c.h.b16 %v419
      %v432 = vpack.c.b16 %v424, %v424
      %v433 = vpack.c.b16 %v425, %v425
      %v434 = vpack.c.b16 %v426, %v426
      %v435 = vpack.c.b16 %v427, %v427
      %v436 = vpack.c.b16 %v428, %v428
      %v437 = vpack.c.b16 %v429, %v429
      %v438 = vpack.c.b16 %v430, %v430
      %v439 = vpack.c.b16 %v431, %v431
      %vm448 = vcmask 60416
      %449 = vst.msk [vmem:[%s148] sm:$0xf] %vm448, %v432
      %450 = vst.msk [vmem:[%s148 + $0x4] sm:$0xf] %vm448, %v433
      %451 = vst.msk [vmem:[%s148 + $0x8] sm:$0xf] %vm448, %v434
      %452 = vst.msk [vmem:[%s148 + $0xc] sm:$0xf] %vm448, %v435
      %453 = vst.msk [vmem:[%s148 + $0x10] sm:$0xf] %vm448, %v436
      %454 = vst.msk [vmem:[%s148 + $0x14] sm:$0xf] %vm448, %v437
      %455 = vst.msk [vmem:[%s148 + $0x18] sm:$0xf] %vm448, %v438
      %456 = vst.msk [vmem:[%s148 + $0x1c] sm:$0xf] %vm448, %v439
      %s457 = smul.u32 8, %s13
      %p458 = scmp.lt.s32.totalorder %s457, 15
      %s459 = scalar_select %p458, %s457, 15
      %s460 = smul.addr %s459, 4
      %s461 = scalar_lea.vmem %s2, %s460
      // Predicated region
      $region29: #{_lambda_.6} parent=27 // pred_check
        %p462 = pneg %p78
      $region30: #{_lambda_.6} parent=27 // pred_check_branch
        %464 = sbr.rel (%p462) target = $region32
      $region31: #{_lambda_.6} parent=27 // pred_region
        %s465 = smul.u32 8, %s13
      $region32: #{_lambda_.6} parent=27 // pred_fallthru
        _
    $region28: #{_lambda_.6} parent=5 // pred_fallthru
      _
    %p466 = scmp.le.s32.totalorder 2, %s8
    // Predicated region
    $region33: #{_lambda_.6} parent=5 // pred_check
      %p467 = pneg %p466
    $region34: #{_lambda_.6} parent=5 // pred_check_branch
      %469 = sbr.rel (%p467) target = $region36
    $region35: #{_lambda_.6} parent=5 // pred_region
      %s470 = ssub.s32 %s8, 2
      // Predicated region
      $region37: #{_lambda_.6} parent=35 // pred_check
        %p471 = pneg %p84
      $region38: #{_lambda_.6} parent=35 // pred_check_branch
        %473 = sbr.rel (%p471) target = $region40
      $region39: #{_lambda_.6} parent=35 // pred_region
        %s474 = smul.u32 8, %s14
        %p475 = scmp.lt.s32.totalorder %s474, 15
        %s476 = scalar_select %p475, %s474, 15
        %s477 = smul.addr %s476, 4
        %s478 = scalar_lea.vmem %s2, %s477
      $region40: #{_lambda_.6} parent=35 // pred_fallthru
        _
    $region36: #{_lambda_.6} parent=5 // pred_fallthru
      _
  $region6: #{_lambda_.6} parent=0 // loop_footer
    %s12 = sadd.s32 1, %s8
  $region7: #{_lambda_.6} parent=0 // loop_footer_branch
    %7 = sbr.rel target = $region3
  $region8: #{_lambda_.6} parent=0 // loop_exit
    _

// kernel: _lambda_.7
$region0: #{_lambda_.7}
  #allocation0 [shape = 'u32[]', space=smem, size = 0x4, offset = 0x4, fixed_abs, tag = 'smem constant byte address 0x4 - core index']
  #allocation1 [shape = 'u32[144,128]{1,0:T(1,128)}', space=vmem, size = 0x12000, scoped, tag = 'internal scratch']
  %s0 = inlined_call_operand.vmem [shape: bf16[32,512], index: 0, kind: input, shape index: {}]
  %s1 = inlined_call_operand.vmem [shape: bf16[512,1], index: 1, kind: input, shape index: {}]
  %s2 = inlined_call_operand.vmem [shape: f32[32,1], index: 2, kind: output, shape index: {}]
  %s3 = sld [smem:[#allocation0]]
  $region18: #{_lambda_.7} parent=0
    _
  %s5 = ssub.s32 1, %s3
  %s6 = scalar_select 0, %s5, %s3
  // Predicated region
  $region2: #{_lambda_.7} parent=0 // pred_check
    _
  $region3: #{_lambda_.7} parent=0 // pred_check_branch
    %8 = sbr.rel (0) target = $region5
  $region4: #{_lambda_.7} parent=0 // pred_region
    _
  $region5: #{_lambda_.7} parent=0 // pred_fallthru
    _
  // Predicated region
  $region6: #{_lambda_.7} parent=0 // pred_check
    _
  $region7: #{_lambda_.7} parent=0 // pred_check_branch
    %10 = sbr.rel (0) target = $region9
  $region8: #{_lambda_.7} parent=0 // pred_region
    _
  $region9: #{_lambda_.7} parent=0 // pred_fallthru
    _
  %v12 = vld [vmem:[%s0] sm:$0xff]
  %v13 = vld [vmem:[%s0 + $0x8] sm:$0xff]
  %v14 = vld [vmem:[%s0 + $0x10] sm:$0xff]
  %v15 = vld [vmem:[%s0 + $0x18] sm:$0xff]
  %v16 = vld [vmem:[%s0 + $0x20] sm:$0xff]
  %v17 = vld [vmem:[%s0 + $0x28] sm:$0xff]
  %v18 = vld [vmem:[%s0 + $0x30] sm:$0xff]
  %v19 = vld [vmem:[%s0 + $0x38] sm:$0xff]
  %v20 = vld [vmem:[%s1] sm:$0xf]
  %v21 = vld [vmem:[%s1 + $0x4] sm:$0xf]
  %v22 = vld [vmem:[%s1 + $0x8] sm:$0xf]
  %v23 = vld [vmem:[%s1 + $0xc] sm:$0xf]
  %v24 = vld [vmem:[%s1 + $0x10] sm:$0xf]
  %v25 = vld [vmem:[%s1 + $0x14] sm:$0xf]
  %v26 = vld [vmem:[%s1 + $0x18] sm:$0xf]
  %v27 = vld [vmem:[%s1 + $0x1c] sm:$0xf]
  %v28 = vld [vmem:[%s1 + $0x20] sm:$0xf]
  %v29 = vld [vmem:[%s1 + $0x24] sm:$0xf]
  %v30 = vld [vmem:[%s1 + $0x28] sm:$0xf]
  %v31 = vld [vmem:[%s1 + $0x2c] sm:$0xf]
  %v32 = vld [vmem:[%s1 + $0x30] sm:$0xf]
  %v33 = vld [vmem:[%s1 + $0x34] sm:$0xf]
  %v34 = vld [vmem:[%s1 + $0x38] sm:$0xf]
  %v35 = vld [vmem:[%s1 + $0x3c] sm:$0xf]
  %v36 = vld [vmem:[%s1 + $0x40] sm:$0xf]
  %v37 = vld [vmem:[%s1 + $0x44] sm:$0xf]
  %v38 = vld [vmem:[%s1 + $0x48] sm:$0xf]
  %v39 = vld [vmem:[%s1 + $0x4c] sm:$0xf]
  %v40 = vld [vmem:[%s1 + $0x50] sm:$0xf]
  %v41 = vld [vmem:[%s1 + $0x54] sm:$0xf]
  %v42 = vld [vmem:[%s1 + $0x58] sm:$0xf]
  %v43 = vld [vmem:[%s1 + $0x5c] sm:$0xf]
  %v44 = vld [vmem:[%s1 + $0x60] sm:$0xf]
  %v45 = vld [vmem:[%s1 + $0x64] sm:$0xf]
  %v46 = vld [vmem:[%s1 + $0x68] sm:$0xf]
  %v47 = vld [vmem:[%s1 + $0x6c] sm:$0xf]
  %v48 = vld [vmem:[%s1 + $0x70] sm:$0xf]
  %v49 = vld [vmem:[%s1 + $0x74] sm:$0xf]
  %v50 = vld [vmem:[%s1 + $0x78] sm:$0xf]
  %v51 = vld [vmem:[%s1 + $0x7c] sm:$0xf]
  %v52 = vld [vmem:[%s1 + $0x80] sm:$0xf]
  %v53 = vld [vmem:[%s1 + $0x84] sm:$0xf]
  %v54 = vld [vmem:[%s1 + $0x88] sm:$0xf]
  %v55 = vld [vmem:[%s1 + $0x8c] sm:$0xf]
  %v56 = vld [vmem:[%s1 + $0x90] sm:$0xf]
  %v57 = vld [vmem:[%s1 + $0x94] sm:$0xf]
  %v58 = vld [vmem:[%s1 + $0x98] sm:$0xf]
  %v59 = vld [vmem:[%s1 + $0x9c] sm:$0xf]
  %v60 = vld [vmem:[%s1 + $0xa0] sm:$0xf]
  %v61 = vld [vmem:[%s1 + $0xa4] sm:$0xf]
  %v62 = vld [vmem:[%s1 + $0xa8] sm:$0xf]
  %v63 = vld [vmem:[%s1 + $0xac] sm:$0xf]
  %v64 = vld [vmem:[%s1 + $0xb0] sm:$0xf]
  %v65 = vld [vmem:[%s1 + $0xb4] sm:$0xf]
  %v66 = vld [vmem:[%s1 + $0xb8] sm:$0xf]
  %v67 = vld [vmem:[%s1 + $0xbc] sm:$0xf]
  %v68 = vld [vmem:[%s1 + $0xc0] sm:$0xf]
  %v69 = vld [vmem:[%s1 + $0xc4] sm:$0xf]
  %v70 = vld [vmem:[%s1 + $0xc8] sm:$0xf]
  %v71 = vld [vmem:[%s1 + $0xcc] sm:$0xf]
  %v72 = vld [vmem:[%s1 + $0xd0] sm:$0xf]
  %v73 = vld [vmem:[%s1 + $0xd4] sm:$0xf]
  %v74 = vld [vmem:[%s1 + $0xd8] sm:$0xf]
  %v75 = vld [vmem:[%s1 + $0xdc] sm:$0xf]
  %v76 = vld [vmem:[%s1 + $0xe0] sm:$0xf]
  %v77 = vld [vmem:[%s1 + $0xe4] sm:$0xf]
  %v78 = vld [vmem:[%s1 + $0xe8] sm:$0xf]
  %v79 = vld [vmem:[%s1 + $0xec] sm:$0xf]
  %v80 = vld [vmem:[%s1 + $0xf0] sm:$0xf]
  %v81 = vld [vmem:[%s1 + $0xf4] sm:$0xf]
  %v82 = vld [vmem:[%s1 + $0xf8] sm:$0xf]
  %v83 = vld [vmem:[%s1 + $0xfc] sm:$0xf]
  %v92 = vunpack.c.l.b16 %v12
  %v93 = vunpack.c.h.b16 %v12
  %v94 = vunpack.c.l.b16 %v13
  %v95 = vunpack.c.h.b16 %v13
  %v96 = vunpack.c.l.b16 %v14
  %v97 = vunpack.c.h.b16 %v14
  %v98 = vunpack.c.l.b16 %v15
  %v99 = vunpack.c.h.b16 %v15
  %v100 = vunpack.c.l.b16 %v16
  %v101 = vunpack.c.h.b16 %v16
  %v102 = vunpack.c.l.b16 %v17
  %v103 = vunpack.c.h.b16 %v17
  %v104 = vunpack.c.l.b16 %v18
  %v105 = vunpack.c.h.b16 %v18
  %v106 = vunpack.c.l.b16 %v19
  %v107 = vunpack.c.h.b16 %v19
  %v108 = vpack.c.b16 %v96, %v92
  %v109 = vpack.c.b16 %v97, %v93
  %v110 = vpack.c.b16 %v98, %v94
  %v111 = vpack.c.b16 %v99, %v95
  %v112 = vpack.c.b16 %v104, %v100
  %v113 = vpack.c.b16 %v105, %v101
  %v114 = vpack.c.b16 %v106, %v102
  %v115 = vpack.c.b16 %v107, %v103
  %v188 = vunpack.c.l.b16 %v20
  %v189 = vunpack.c.l.b16 %v21
  %v190 = vunpack.c.l.b16 %v22
  %v191 = vunpack.c.l.b16 %v23
  %v192 = vunpack.c.l.b16 %v24
  %v193 = vunpack.c.l.b16 %v25
  %v194 = vunpack.c.l.b16 %v26
  %v195 = vunpack.c.l.b16 %v27
  %v196 = vunpack.c.l.b16 %v28
  %v197 = vunpack.c.l.b16 %v29
  %v198 = vunpack.c.l.b16 %v30
  %v199 = vunpack.c.l.b16 %v31
  %v200 = vunpack.c.l.b16 %v32
  %v201 = vunpack.c.l.b16 %v33
  %v202 = vunpack.c.l.b16 %v34
  %v203 = vunpack.c.l.b16 %v35
  %v204 = vunpack.c.l.b16 %v36
  %v205 = vunpack.c.l.b16 %v37
  %v206 = vunpack.c.l.b16 %v38
  %v207 = vunpack.c.l.b16 %v39
  %v208 = vunpack.c.l.b16 %v40
  %v209 = vunpack.c.l.b16 %v41
  %v210 = vunpack.c.l.b16 %v42
  %v211 = vunpack.c.l.b16 %v43
  %v212 = vunpack.c.l.b16 %v44
  %v213 = vunpack.c.l.b16 %v45
  %v214 = vunpack.c.l.b16 %v46
  %v215 = vunpack.c.l.b16 %v47
  %v216 = vunpack.c.l.b16 %v48
  %v217 = vunpack.c.l.b16 %v49
  %v218 = vunpack.c.l.b16 %v50
  %v219 = vunpack.c.l.b16 %v51
  %v220 = vunpack.c.l.b16 %v52
  %v221 = vunpack.c.l.b16 %v53
  %v222 = vunpack.c.l.b16 %v54
  %v223 = vunpack.c.l.b16 %v55
  %v224 = vunpack.c.l.b16 %v56
  %v225 = vunpack.c.l.b16 %v57
  %v226 = vunpack.c.l.b16 %v58
  %v227 = vunpack.c.l.b16 %v59
  %v228 = vunpack.c.l.b16 %v60
  %v229 = vunpack.c.l.b16 %v61
  %v230 = vunpack.c.l.b16 %v62
  %v231 = vunpack.c.l.b16 %v63
  %v232 = vunpack.c.l.b16 %v64
  %v233 = vunpack.c.l.b16 %v65
  %v234 = vunpack.c.l.b16 %v66
  %v235 = vunpack.c.l.b16 %v67
  %v236 = vunpack.c.l.b16 %v68
  %v237 = vunpack.c.l.b16 %v69
  %v238 = vunpack.c.l.b16 %v70
  %v239 = vunpack.c.l.b16 %v71
  %v240 = vunpack.c.l.b16 %v72
  %v241 = vunpack.c.l.b16 %v73
  %v242 = vunpack.c.l.b16 %v74
  %v243 = vunpack.c.l.b16 %v75
  %v244 = vunpack.c.l.b16 %v76
  %v245 = vunpack.c.l.b16 %v77
  %v246 = vunpack.c.l.b16 %v78
  %v247 = vunpack.c.l.b16 %v79
  %v248 = vunpack.c.l.b16 %v80
  %v249 = vunpack.c.l.b16 %v81
  %v250 = vunpack.c.l.b16 %v82
  %v251 = vunpack.c.l.b16 %v83
  %v252 = vpack.c.b16 %v189, %v188
  %v253 = vpack.c.b16 %v191, %v190
  %v254 = vpack.c.b16 %v193, %v192
  %v255 = vpack.c.b16 %v195, %v194
  %v256 = vpack.c.b16 %v197, %v196
  %v257 = vpack.c.b16 %v199, %v198
  %v258 = vpack.c.b16 %v201, %v200
  %v259 = vpack.c.b16 %v203, %v202
  %v260 = vpack.c.b16 %v205, %v204
  %v261 = vpack.c.b16 %v207, %v206
  %v262 = vpack.c.b16 %v209, %v208
  %v263 = vpack.c.b16 %v211, %v210
  %v264 = vpack.c.b16 %v213, %v212
  %v265 = vpack.c.b16 %v215, %v214
  %v266 = vpack.c.b16 %v217, %v216
  %v267 = vpack.c.b16 %v219, %v218
  %v268 = vpack.c.b16 %v221, %v220
  %v269 = vpack.c.b16 %v223, %v222
  %v270 = vpack.c.b16 %v225, %v224
  %v271 = vpack.c.b16 %v227, %v226
  %v272 = vpack.c.b16 %v229, %v228
  %v273 = vpack.c.b16 %v231, %v230
  %v274 = vpack.c.b16 %v233, %v232
  %v275 = vpack.c.b16 %v235, %v234
  %v276 = vpack.c.b16 %v237, %v236
  %v277 = vpack.c.b16 %v239, %v238
  %v278 = vpack.c.b16 %v241, %v240
  %v279 = vpack.c.b16 %v243, %v242
  %v280 = vpack.c.b16 %v245, %v244
  %v281 = vpack.c.b16 %v247, %v246
  %v282 = vpack.c.b16 %v249, %v248
  %v283 = vpack.c.b16 %v251, %v250
  %316 = vmatprep.subr.bf16.mxu0 0
  %317 = vmatpush1.bf16.msra.mxu0 %v252
  %318 = vmatprep.subr.bf16.mxu0 0
  %319 = vmatpush1.bf16.msra.mxu0 %v253
  %320 = vmatprep.subr.bf16.mxu0 0
  %321 = vmatpush1.bf16.msra.mxu0 %v254
  %322 = vmatprep.subr.bf16.mxu0 0
  %323 = vmatpush1.bf16.msra.mxu0 %v255
  %324 = vmatprep.subr.bf16.mxu0 0
  %325 = vmatpush1.bf16.msra.mxu0 %v256
  %326 = vmatprep.subr.bf16.mxu0 0
  %327 = vmatpush1.bf16.msra.mxu0 %v257
  %328 = vmatprep.subr.bf16.mxu0 0
  %329 = vmatpush1.bf16.msra.mxu0 %v258
  %330 = vmatprep.subr.bf16.mxu0 0
  %331 = vmatpush1.bf16.msra.mxu0 %v259
  %332 = vmatprep.subr.bf16.mxu0 0
  %333 = vmatpush1.bf16.msra.mxu0 %v260
  %334 = vmatprep.subr.bf16.mxu0 0
  %335 = vmatpush1.bf16.msra.mxu0 %v261
  %336 = vmatprep.subr.bf16.mxu0 0
  %337 = vmatpush1.bf16.msra.mxu0 %v262
  %338 = vmatprep.subr.bf16.mxu0 0
  %339 = vmatpush1.bf16.msra.mxu0 %v263
  %340 = vmatprep.subr.bf16.mxu0 0
  %341 = vmatpush1.bf16.msra.mxu0 %v264
  %342 = vmatprep.subr.bf16.mxu0 0
  %343 = vmatpush1.bf16.msra.mxu0 %v265
  %344 = vmatprep.subr.bf16.mxu0 0
  %345 = vmatpush1.bf16.msra.mxu0 %v266
  %346 = vmatprep.subr.bf16.mxu0 0
  %347 = vmatpush1.bf16.msra.mxu0 %v267
  %348 = vmatprep.mubr.bf16.mxu0 %v109
  %349 = vmatmul.mubr.bf16.gmra.mrb[0].mxu0 %v108
  %v350 = vpop.f32.mrb[0].mxu0
  %v351 = vadd.f32 0.0, %v350
  %v352 = vpop.f32.mrb[0].mxu0
  %v353 = vpop.f32.mrb[0].mxu0
  %v354 = vadd.f32 0.0, %v353
  %v355 = vpop.f32.mrb[0].mxu0
  %356 = vmatprep.mubr.bf16.mxu0 %v113
  %357 = vmatmul.mubr.bf16.gmra.mrb[0].mxu0 %v112
  %v358 = vpop.f32.mrb[0].mxu0
  %v359 = vadd.f32 0.0, %v358
  %v360 = vpop.f32.mrb[0].mxu0
  %v361 = vpop.f32.mrb[0].mxu0
  %v362 = vadd.f32 0.0, %v361
  %v363 = vpop.f32.mrb[0].mxu0
  %364 = vdwg.mxu0
  %365 = vmatprep.subr.bf16.mxu0 0
  %366 = vmatpush1.bf16.msra.mxu0 %v268
  %367 = vmatprep.subr.bf16.mxu0 0
  %368 = vmatpush1.bf16.msra.mxu0 %v269
  %369 = vmatprep.subr.bf16.mxu0 0
  %370 = vmatpush1.bf16.msra.mxu0 %v270
  %371 = vmatprep.subr.bf16.mxu0 0
  %372 = vmatpush1.bf16.msra.mxu0 %v271
  %373 = vmatprep.subr.bf16.mxu0 0
  %374 = vmatpush1.bf16.msra.mxu0 %v272
  %375 = vmatprep.subr.bf16.mxu0 0
  %376 = vmatpush1.bf16.msra.mxu0 %v273
  %377 = vmatprep.subr.bf16.mxu0 0
  %378 = vmatpush1.bf16.msra.mxu0 %v274
  %379 = vmatprep.subr.bf16.mxu0 0
  %380 = vmatpush1.bf16.msra.mxu0 %v275
  %381 = vmatprep.subr.bf16.mxu0 0
  %382 = vmatpush1.bf16.msra.mxu0 %v276
  %383 = vmatprep.subr.bf16.mxu0 0
  %384 = vmatpush1.bf16.msra.mxu0 %v277
  %385 = vmatprep.subr.bf16.mxu0 0
  %386 = vmatpush1.bf16.msra.mxu0 %v278
  %387 = vmatprep.subr.bf16.mxu0 0
  %388 = vmatpush1.bf16.msra.mxu0 %v279
  %389 = vmatprep.subr.bf16.mxu0 0
  %390 = vmatpush1.bf16.msra.mxu0 %v280
  %391 = vmatprep.subr.bf16.mxu0 0
  %392 = vmatpush1.bf16.msra.mxu0 %v281
  %393 = vmatprep.subr.bf16.mxu0 0
  %394 = vmatpush1.bf16.msra.mxu0 %v282
  %395 = vmatprep.subr.bf16.mxu0 0
  %396 = vmatpush1.bf16.msra.mxu0 %v283
  %397 = vmatprep.mubr.bf16.mxu0 %v111
  %398 = vmatmul.mubr.bf16.gmra.mrb[0].mxu0 %v110
  %v399 = vpop.f32.mrb[0].mxu0
  %v400 = vadd.f32 %v351, %v399
  %v401 = vpop.f32.mrb[0].mxu0
  %v402 = vpop.f32.mrb[0].mxu0
  %v403 = vadd.f32 %v354, %v402
  %v404 = vpop.f32.mrb[0].mxu0
  %405 = vmatprep.mubr.bf16.mxu0 %v115
  %406 = vmatmul.mubr.bf16.gmra.mrb[0].mxu0 %v114
  %v407 = vpop.f32.mrb[0].mxu0
  %v408 = vadd.f32 %v359, %v407
  %v409 = vpop.f32.mrb[0].mxu0
  %v410 = vpop.f32.mrb[0].mxu0
  %v411 = vadd.f32 %v362, %v410
  %v412 = vpop.f32.mrb[0].mxu0
  %413 = vdwg.mxu0
  %vm414 = vcmask 7168
  %415 = vst.msk [vmem:[%s2] sm:$0xff] %vm414, %v400
  %416 = vst.msk [vmem:[%s2 + $0x8] sm:$0xff] %vm414, %v403
  %417 = vst.msk [vmem:[%s2 + $0x10] sm:$0xff] %vm414, %v408
  %418 = vst.msk [vmem:[%s2 + $0x18] sm:$0xff] %vm414, %v411
  // Predicated region
  $region10: #{_lambda_.7} parent=0 // pred_check
    _
  $region11: #{_lambda_.7} parent=0 // pred_check_branch
    %420 = sbr.rel (0) target = $region13
  $region12: #{_lambda_.7} parent=0 // pred_region
    _
  $region13: #{_lambda_.7} parent=0 // pred_fallthru
    _
  // Predicated region
  $region14: #{_lambda_.7} parent=0 // pred_check
    _
  $region15: #{_lambda_.7} parent=0 // pred_check_branch
    %422 = sbr.rel (0) target = $region17
  $region16: #{_lambda_.7} parent=0 // pred_region
    _
  $region17: #{_lambda_.7} parent=0 // pred_fallthru
    _

</llo_original>
